<compile_context>
chip_gen: v7x
topology: tpu7x:2x2x1
jax: 0.10.0
libtpu: 0.0.40
codegen_flags: <defaults>
</compile_context>

<pallas_src>
import functools

import jax
import jax.numpy as jnp
from jax.experimental import pallas as pl
from jax.experimental.pallas import tpu as pltpu

GN_EPS = 1e-5        # nn.GroupNorm default eps
WS_EPS = 1e-10       # StdConv2d weight-standardization eps
NUM_GROUPS = 32

# MXU operand dtype.  float32 keeps the kernel numerically equivalent to the
# f32 PyTorch reference (validated below with tight tolerances).  Set to
# jnp.bfloat16 for production throughput (single cast per stage, f32 accum).
MXU_DTYPE = jnp.float32


# -----------------------------------------------------------------------------
# In-kernel helpers (pure functions on values; everything stays in VMEM/vregs)
# -----------------------------------------------------------------------------
def _group_bcast_sum(v, cpg):
    """v: (..., C) f32, contiguous groups of `cpg` channels (power of two).
    Replaces each channel by the sum over its group (group sum broadcast back
    to every member).  log2(cpg) lane-roll butterfly on a 1-2 vreg vector."""
    if cpg == 1:
        return v
    c = v.shape[-1]
    idx = jax.lax.broadcasted_iota(jnp.int32, v.shape, v.ndim - 1)
    d = 1
    while d < cpg:
        plus = jnp.concatenate([v[..., d:], v[..., :d]], axis=-1)            # v[(i+d) % C]
        minus = jnp.concatenate([v[..., c - d:], v[..., :c - d]], axis=-1)   # v[(i-d) % C]
        v = v + jnp.where((idx & d) == 0, plus, minus)
        d *= 2
    return v


def _gn_relu(x, gamma, beta, cpg):
    """GroupNorm(32) + ReLU on a (Bt, R, C) f32 block.  Per-sample statistics
    (reduce over axis=1 only); two-pass centered variance for robustness."""
    r = x.shape[1]
    n = float(r * cpg)
    s = jnp.sum(x, axis=1, keepdims=True)                 # (Bt, 1, C)
    mean = _group_bcast_sum(s, cpg) / n
    xc = x - mean
    ss = jnp.sum(xc * xc, axis=1, keepdims=True)
    var = _group_bcast_sum(ss, cpg) / n
    inv = jax.lax.rsqrt(var + GN_EPS)
    return jnp.maximum(xc * inv * gamma + beta, 0.0)


# -----------------------------------------------------------------------------
# Fused bottleneck kernel (one grid step = `bt` batch samples)
# -----------------------------------------------------------------------------
def _bottleneck_kernel(*refs, bt, h, w, stride, cpg_in, cpg_mid, has_down):
    it = iter(refs)
    x_ref = next(it)
    w1_ref, w2_ref, w3_ref = next(it), next(it), next(it)
    wd_ref = next(it) if has_down else None
    g1_ref, b1_ref = next(it), next(it)
    g2_ref, b2_ref = next(it), next(it)
    g3_ref, b3_ref = next(it), next(it)
    o_ref = next(it)
    a2p_ref = next(it)
    a1s_ref = next(it) if (has_down and stride > 1) else None

    ho = (h - 1) // stride + 1
    wo = (w - 1) // stride + 1
    hw, howo = h * w, ho * wo
    cin = x_ref.shape[-1]
    cmid = w3_ref.shape[0]
    cout = o_ref.shape[-1]

    def sds(start, size):        # static-stride ref slice helper
        return pl.ds(start, size) if stride == 1 else pl.ds(start, size, stride=stride)

    # --- gn1 + relu (x is not kept live; it is re-loaded for the identity
    #     residual at the end) -------------------------------------------------
    a1 = _gn_relu(x_ref[...].astype(jnp.float32), g1_ref[...], b1_ref[...], cpg_in)
    a1 = a1.astype(MXU_DTYPE)                                    # single cast

    # --- residual (projection shortcut): stride via strided ref reads, no
    #     selection matmul ------------------------------------------------------
    if has_down:
        if stride > 1:
            a1s_ref[...] = a1.reshape(bt, h, w, cin)
            res_in = a1s_ref[:, sds(0, ho), sds(0, wo), :].reshape(bt * howo, cin)
        else:
            res_in = a1.reshape(bt * hw, cin)
        residual = jnp.dot(res_in, wd_ref[...],
                           preferred_element_type=jnp.float32).reshape(bt, howo, cout)

    # --- conv1 (1x1) + gn2 + relu ----------------------------------------------
    a2 = jnp.dot(a1.reshape(bt * hw, cin), w1_ref[...],
                 preferred_element_type=jnp.float32)
    a2 = _gn_relu(a2.reshape(bt, hw, cmid), g2_ref[...], b2_ref[...], cpg_mid)
    a2 = a2.astype(MXU_DTYPE)                                    # single cast

    # --- conv2 (3x3, pad=1, stride): write a2 once into a halo-zeroed padded
    #     VMEM scratch; read 9 taps as strided ref slices at OUTPUT resolution;
    #     fuse all taps into ONE K = 9*Cmid MXU contraction ----------------------
    a2p_ref[:, 0:1, :, :] = jnp.zeros((bt, 1, w + 2, cmid), MXU_DTYPE)
    a2p_ref[:, h + 1:h + 2, :, :] = jnp.zeros((bt, 1, w + 2, cmid), MXU_DTYPE)
    a2p_ref[:, :, 0:1, :] = jnp.zeros((bt, h + 2, 1, cmid), MXU_DTYPE)
    a2p_ref[:, :, w + 1:w + 2, :] = jnp.zeros((bt, h + 2, 1, cmid), MXU_DTYPE)
    a2p_ref[:, 1:h + 1, 1:w + 1, :] = a2.reshape(bt, h, w, cmid)

    taps = []
    for kh in range(3):
        for kw in range(3):
            t = a2p_ref[:, sds(kh, ho), sds(kw, wo), :]          # (bt, ho, wo, cmid)
            taps.append(t.reshape(bt * howo, cmid))
    patches = jnp.concatenate(taps, axis=-1)                     # (bt*HoWo, 9*cmid)
    acc = jnp.dot(patches, w2_ref[...], preferred_element_type=jnp.float32)

    # --- gn3 + relu + conv3 (1x1) + residual add --------------------------------
    a3 = _gn_relu(acc.reshape(bt, howo, cmid), g3_ref[...], b3_ref[...], cpg_mid)
    y = jnp.dot(a3.astype(MXU_DTYPE).reshape(bt * howo, cmid), w3_ref[...],
                preferred_element_type=jnp.float32).reshape(bt, howo, cout)
    if has_down:
        y = y + residual
    else:
        y = y + x_ref[...].astype(jnp.float32)   # identity residual: reload x here
    o_ref[...] = y.astype(o_ref.dtype)


# -----------------------------------------------------------------------------
# Wrapper: layout, weight standardization (hoisted), pallas_call
# -----------------------------------------------------------------------------
def std_weight(w_oihw):
    """StdConv2d weight standardization (per output channel, biased variance)."""
    m = jnp.mean(w_oihw, axis=(1, 2, 3), keepdims=True)
    v = jnp.mean((w_oihw - m) ** 2, axis=(1, 2, 3), keepdims=True)
    return (w_oihw - m) / jnp.sqrt(v + WS_EPS)


def preact_bottleneck_forward(x_nchw, params, stride, batch_tile=1):
    x = jnp.transpose(x_nchw, (0, 2, 3, 1)).astype(jnp.float32)     # NCHW -> NHWC
    n, h, w, cin = x.shape
    cmid = params["conv1_w"].shape[0]
    cout = params["conv3_w"].shape[0]
    has_down = "down_w" in params
    if not has_down:
        assert stride == 1 and cin == cout, \
            "identity residual requires stride=1 and cin==cout"
    assert cin % NUM_GROUPS == 0 and cmid % NUM_GROUPS == 0
    cpg_in, cpg_mid = cin // NUM_GROUPS, cmid // NUM_GROUPS
    assert (cpg_in & (cpg_in - 1)) == 0 and (cpg_mid & (cpg_mid - 1)) == 0, \
        "channels-per-group must be a power of two for the butterfly reduction"
    assert n % batch_tile == 0
    bt = batch_tile

    ho = (h - 1) // stride + 1
    wo = (w - 1) // stride + 1
    hw, howo = h * w, ho * wo

    # Weight standardization + layout + MXU-dtype cast hoisted out of the kernel.
    w1 = std_weight(params["conv1_w"])[:, :, 0, 0].T.astype(MXU_DTYPE)       # (Cin, Cmid)
    w2 = jnp.transpose(std_weight(params["conv2_w"]), (2, 3, 1, 0)           # (3,3,I,O)
                       ).reshape(9 * cmid, cmid).astype(MXU_DTYPE)           # K-fused
    w3 = std_weight(params["conv3_w"])[:, :, 0, 0].T.astype(MXU_DTYPE)       # (Cmid, Cout)
    g1 = params["gn1_w"].reshape(1, cin).astype(jnp.float32)
    b1 = params["gn1_b"].reshape(1, cin).astype(jnp.float32)
    g2 = params["gn2_w"].reshape(1, cmid).astype(jnp.float32)
    b2 = params["gn2_b"].reshape(1, cmid).astype(jnp.float32)
    g3 = params["gn3_w"].reshape(1, cmid).astype(jnp.float32)
    b3 = params["gn3_b"].reshape(1, cmid).astype(jnp.float32)

    inputs = [x.reshape(n, hw, cin), w1, w2, w3]
    in_specs = [
        pl.BlockSpec((bt, hw, cin), lambda b: (b, 0, 0)),
        pl.BlockSpec((cin, cmid), lambda b: (0, 0)),
        pl.BlockSpec((9 * cmid, cmid), lambda b: (0, 0)),
        pl.BlockSpec((cmid, cout), lambda b: (0, 0)),
    ]
    if has_down:
        wd = std_weight(params["down_w"])[:, :, 0, 0].T.astype(MXU_DTYPE)    # (Cin, Cout)
        inputs.append(wd)
        in_specs.append(pl.BlockSpec((cin, cout), lambda b: (0, 0)))
    inputs += [g1, b1, g2, b2, g3, b3]
    in_specs += [
        pl.BlockSpec((1, cin), lambda b: (0, 0)),
        pl.BlockSpec((1, cin), lambda b: (0, 0)),
        pl.BlockSpec((1, cmid), lambda b: (0, 0)),
        pl.BlockSpec((1, cmid), lambda b: (0, 0)),
        pl.BlockSpec((1, cmid), lambda b: (0, 0)),
        pl.BlockSpec((1, cmid), lambda b: (0, 0)),
    ]

    scratch_shapes = [pltpu.VMEM((bt, h + 2, w + 2, cmid), MXU_DTYPE)]       # padded a2
    if has_down and stride > 1:
        scratch_shapes.append(pltpu.VMEM((bt, h, w, cin), MXU_DTYPE))        # a1 for strided residual

    kernel = functools.partial(
        _bottleneck_kernel, bt=bt, h=h, w=w, stride=stride,
        cpg_in=cpg_in, cpg_mid=cpg_mid, has_down=has_down)

    y = pl.pallas_call(
        kernel,
        out_shape=jax.ShapeDtypeStruct((n, howo, cout), jnp.float32),
        grid=(n // bt,),
        in_specs=in_specs,
        out_specs=pl.BlockSpec((bt, howo, cout), lambda b: (b, 0, 0)),
        scratch_shapes=scratch_shapes,
        compiler_params=pltpu.CompilerParams(
            dimension_semantics=("parallel",),
            # Per-step working set here is ~1-2 MiB; raise when tiles grow on
            # v5e/v6e (128 MiB physical), keep <= ~48 MiB on v7x (64 MiB).
            vmem_limit_bytes=32 * 1024 * 1024,
        ),
    )(*inputs)

    y = y.reshape(n, ho, wo, cout)
    return jnp.transpose(y, (0, 3, 1, 2))                        # NHWC -> NCHW


# -----------------------------------------------------------------------------
# Pure-JAX reference (for verification)
# -----------------------------------------------------------------------------
def ref_forward(x_nchw, params, stride):
    def gn_relu(x, g, b):
        n, c, h, w = x.shape
        xg = x.reshape(n, NUM_GROUPS, c // NUM_GROUPS, h, w)
        m = xg.mean(axis=(2, 3, 4), keepdims=True)
        v = ((xg - m) ** 2).mean(axis=(2, 3, 4), keepdims=True)
        y = ((xg - m) / jnp.sqrt(v + GN_EPS)).reshape(n, c, h, w)
        y = y * g[None, :, None, None] + b[None, :, None, None]
        return jnp.maximum(y, 0.0)

    def conv(x, w, s, pad):
        return jax.lax.conv_general_dilated(
            x, std_weight(w), (s, s), [(pad, pad), (pad, pad)],
            dimension_numbers=("NCHW", "OIHW", "NCHW"))

    out = gn_relu(x_nchw, params["gn1_w"], params["gn1_b"])
    residual = x_nchw
    if "down_w" in params:
        residual = conv(out, params["down_w"], stride, 0)
    out = conv(out, params["conv1_w"], 1, 0)
    out = conv(gn_relu(out, params["gn2_w"], params["gn2_b"]),
               params["conv2_w"], stride, 1)
    out = conv(gn_relu(out, params["gn3_w"], params["gn3_b"]),
               params["conv3_w"], 1, 0)
    return out + residual


# -----------------------------------------------------------------------------
# Main
# -----------------------------------------------------------------------------
if __name__ == "__main__":
    key = jax.random.PRNGKey(0)
    k1, k2, k3, k4, kx, k5, k6, k7, ky = jax.random.split(key, 9)

    fwd = jax.jit(preact_bottleneck_forward, static_argnums=(2, 3))
    ref = jax.jit(ref_forward, static_argnums=2)

    # ---- Case 1: projection shortcut, stride 2 (cin=64 -> cout=128, cmid=32) --
    N, CIN, H, W = 2, 64, 16, 16
    COUT, STRIDE = 128, 2
    CMID = COUT // 4
    params = {
        "gn1_w": jnp.ones((CIN,), jnp.float32), "gn1_b": jnp.zeros((CIN,), jnp.float32),
        "gn2_w": jnp.ones((CMID,), jnp.float32), "gn2_b": jnp.zeros((CMID,), jnp.float32),
        "gn3_w": jnp.ones((CMID,), jnp.float32), "gn3_b": jnp.zeros((CMID,), jnp.float32),
        "conv1_w": 0.1 * jax.random.normal(k1, (CMID, CIN, 1, 1), jnp.float32),
        "conv2_w": 0.1 * jax.random.normal(k2, (CMID, CMID, 3, 3), jnp.float32),
        "conv3_w": 0.1 * jax.random.normal(k3, (COUT, CMID, 1, 1), jnp.float32),
        "down_w": 0.1 * jax.random.normal(k4, (COUT, CIN, 1, 1), jnp.float32),
    }
    x = jax.random.normal(kx, (N, CIN, H, W), jnp.float32)

    out = jax.block_until_ready(fwd(x, params, STRIDE, 1))
    exp = jax.block_until_ready(ref(x, params, STRIDE))
    assert out.shape == exp.shape == (N, COUT, H // STRIDE, W // STRIDE)
    assert jnp.all(jnp.isfinite(out))
    rel = jnp.linalg.norm(out - exp) / jnp.linalg.norm(exp)
    assert rel < 1e-2, rel
    assert jnp.allclose(out, exp, rtol=2e-2, atol=2e-2)

    # ---- Case 2: identity shortcut, stride 1, batch_tile=2 (cin=cout=128) -----
    N2, C2, H2, W2 = 2, 128, 8, 8
    CM2 = C2 // 4
    params2 = {
        "gn1_w": 1.0 + 0.1 * jax.random.normal(k5, (C2,), jnp.float32),
        "gn1_b": 0.1 * jax.random.normal(k6, (C2,), jnp.float32),
        "gn2_w": jnp.ones((CM2,), jnp.float32), "gn2_b": jnp.zeros((CM2,), jnp.float32),
        "gn3_w": jnp.ones((CM2,), jnp.float32), "gn3_b": jnp.zeros((CM2,), jnp.float32),
        "conv1_w": 0.1 * jax.random.normal(k7, (CM2, C2, 1, 1), jnp.float32),
        "conv2_w": 0.1 * jax.random.normal(k1, (CM2, CM2, 3, 3), jnp.float32),
        "conv3_w": 0.1 * jax.random.normal(k2, (C2, CM2, 1, 1), jnp.float32),
    }
    x2 = jax.random.normal(ky, (N2, C2, H2, W2), jnp.float32)

    out2 = jax.block_until_ready(fwd(x2, params2, 1, 2))
    exp2 = jax.block_until_ready(ref(x2, params2, 1))
    assert out2.shape == exp2.shape == (N2, C2, H2, W2)
    assert jnp.all(jnp.isfinite(out2))
    rel2 = jnp.linalg.norm(out2 - exp2) / jnp.linalg.norm(exp2)
    assert rel2 < 1e-2, rel2
    assert jnp.allclose(out2, exp2, rtol=2e-2, atol=2e-2)

    print("KERNEL_OK")
</pallas_src>

<mosaic_0001>
module attributes {stable_mosaic.version = 11 : i64} {
  func.func @_bottleneck_kernel(%arg0: i32, %arg1: memref<1x256x64xf32, #tpu.memory_space<vmem>>, %arg2: memref<64x32xf32, #tpu.memory_space<vmem>>, %arg3: memref<288x32xf32, #tpu.memory_space<vmem>>, %arg4: memref<32x128xf32, #tpu.memory_space<vmem>>, %arg5: memref<64x128xf32, #tpu.memory_space<vmem>>, %arg6: memref<1x64xf32, #tpu.memory_space<vmem>>, %arg7: memref<1x64xf32, #tpu.memory_space<vmem>>, %arg8: memref<1x32xf32, #tpu.memory_space<vmem>>, %arg9: memref<1x32xf32, #tpu.memory_space<vmem>>, %arg10: memref<1x32xf32, #tpu.memory_space<vmem>>, %arg11: memref<1x32xf32, #tpu.memory_space<vmem>>, %arg12: memref<1x64x128xf32, #tpu.memory_space<vmem>>, %arg13: memref<1x18x18x32xf32, #tpu.memory_space<vmem>>, %arg14: memref<1x16x16x64xf32, #tpu.memory_space<vmem>>) attributes {dimension_semantics = [#tpu.dimension_semantics<parallel>], iteration_bounds = array<i64: 2>, scalar_prefetch = 0 : i64, scratch_operands = 2 : i64, tpu.core_type = #tpu.core_type<tc>, window_params = [{transform_indices = @transform_0, window_bounds = array<i64: 1, 256, 64>}, {pipeline_mode = #tpu.pipeline_mode<synchronous>, transform_indices = @transform_1, window_bounds = array<i64: 64, 32>}, {pipeline_mode = #tpu.pipeline_mode<synchronous>, transform_indices = @transform_2, window_bounds = array<i64: 288, 32>}, {pipeline_mode = #tpu.pipeline_mode<synchronous>, transform_indices = @transform_3, window_bounds = array<i64: 32, 128>}, {pipeline_mode = #tpu.pipeline_mode<synchronous>, transform_indices = @transform_4, window_bounds = array<i64: 64, 128>}, {pipeline_mode = #tpu.pipeline_mode<synchronous>, transform_indices = @transform_5, window_bounds = array<i64: 1, 64>}, {pipeline_mode = #tpu.pipeline_mode<synchronous>, transform_indices = @transform_6, window_bounds = array<i64: 1, 64>}, {pipeline_mode = #tpu.pipeline_mode<synchronous>, transform_indices = @transform_7, window_bounds = array<i64: 1, 32>}, {pipeline_mode = #tpu.pipeline_mode<synchronous>, transform_indices = @transform_8, window_bounds = array<i64: 1, 32>}, {pipeline_mode = #tpu.pipeline_mode<synchronous>, transform_indices = @transform_9, window_bounds = array<i64: 1, 32>}, {pipeline_mode = #tpu.pipeline_mode<synchronous>, transform_indices = @transform_10, window_bounds = array<i64: 1, 32>}, {transform_indices = @transform_11, window_bounds = array<i64: 1, 64, 128>}]} {
    %c0 = arith.constant 0 : index
    %c0_0 = arith.constant 0 : index
    %c0_1 = arith.constant 0 : index
    %0 = vector.load %arg1[%c0, %c0_0, %c0_1] : memref<1x256x64xf32, #tpu.memory_space<vmem>>, vector<1x256x64xf32>
    %c0_2 = arith.constant 0 : index
    %c0_3 = arith.constant 0 : index
    %1 = vector.load %arg6[%c0_2, %c0_3] : memref<1x64xf32, #tpu.memory_space<vmem>>, vector<1x64xf32>
    %c0_4 = arith.constant 0 : index
    %c0_5 = arith.constant 0 : index
    %2 = vector.load %arg7[%c0_4, %c0_5] : memref<1x64xf32, #tpu.memory_space<vmem>>, vector<1x64xf32>
    %cst = arith.constant dense<0.000000e+00> : vector<1x64xf32>
    %3 = vector.multi_reduction <add>, %0, %cst [1] : vector<1x256x64xf32> to vector<1x64xf32>
    %4 = vector.shape_cast %3 : vector<1x64xf32> to vector<1x1x64xf32>
    %5 = tpu.iota {dimensions = array<i32: 2>} : vector<1x1x64xi32>
    %6 = vector.extract_strided_slice %4 {offsets = [0, 0, 1], sizes = [1, 1, 63], strides = [1, 1, 1]} : vector<1x1x64xf32> to vector<1x1x63xf32>
    %7 = vector.extract_strided_slice %4 {offsets = [0, 0, 0], sizes = [1, 1, 1], strides = [1, 1, 1]} : vector<1x1x64xf32> to vector<1x1x1xf32>
    %8 = tpu.concatenate %6, %7 in 2 : vector<1x1x63xf32>, vector<1x1x1xf32> -> vector<1x1x64xf32>
    %9 = vector.extract_strided_slice %4 {offsets = [0, 0, 63], sizes = [1, 1, 1], strides = [1, 1, 1]} : vector<1x1x64xf32> to vector<1x1x1xf32>
    %10 = vector.extract_strided_slice %4 {offsets = [0, 0, 0], sizes = [1, 1, 63], strides = [1, 1, 1]} : vector<1x1x64xf32> to vector<1x1x63xf32>
    %11 = tpu.concatenate %9, %10 in 2 : vector<1x1x1xf32>, vector<1x1x63xf32> -> vector<1x1x64xf32>
    %c1_i32 = arith.constant 1 : i32
    %12 = vector.broadcast %c1_i32 : i32 to vector<1x1x64xi32>
    %13 = arith.andi %5, %12 : vector<1x1x64xi32>
    %c0_i32 = arith.constant 0 : i32
    %14 = vector.broadcast %c0_i32 : i32 to vector<1x1x64xi32>
    %15 = arith.cmpi eq, %13, %14 : vector<1x1x64xi32>
    %16 = arith.select %15, %8, %11 : vector<1x1x64xi1>, vector<1x1x64xf32>
    %17 = arith.addf %4, %16 : vector<1x1x64xf32>
    %cst_6 = arith.constant 5.120000e+02 : f32
    %18 = vector.broadcast %cst_6 : f32 to vector<1x1x64xf32>
    %19 = arith.divf %17, %18 : vector<1x1x64xf32>
    %20 = vector.broadcast %19 : vector<1x1x64xf32> to vector<1x256x64xf32>
    %21 = arith.subf %0, %20 : vector<1x256x64xf32>
    %22 = arith.mulf %21, %21 : vector<1x256x64xf32>
    %cst_7 = arith.constant dense<0.000000e+00> : vector<1x64xf32>
    %23 = vector.multi_reduction <add>, %22, %cst_7 [1] : vector<1x256x64xf32> to vector<1x64xf32>
    %24 = vector.shape_cast %23 : vector<1x64xf32> to vector<1x1x64xf32>
    %25 = tpu.iota {dimensions = array<i32: 2>} : vector<1x1x64xi32>
    %26 = vector.extract_strided_slice %24 {offsets = [0, 0, 1], sizes = [1, 1, 63], strides = [1, 1, 1]} : vector<1x1x64xf32> to vector<1x1x63xf32>
    %27 = vector.extract_strided_slice %24 {offsets = [0, 0, 0], sizes = [1, 1, 1], strides = [1, 1, 1]} : vector<1x1x64xf32> to vector<1x1x1xf32>
    %28 = tpu.concatenate %26, %27 in 2 : vector<1x1x63xf32>, vector<1x1x1xf32> -> vector<1x1x64xf32>
    %29 = vector.extract_strided_slice %24 {offsets = [0, 0, 63], sizes = [1, 1, 1], strides = [1, 1, 1]} : vector<1x1x64xf32> to vector<1x1x1xf32>
    %30 = vector.extract_strided_slice %24 {offsets = [0, 0, 0], sizes = [1, 1, 63], strides = [1, 1, 1]} : vector<1x1x64xf32> to vector<1x1x63xf32>
    %31 = tpu.concatenate %29, %30 in 2 : vector<1x1x1xf32>, vector<1x1x63xf32> -> vector<1x1x64xf32>
    %c1_i32_8 = arith.constant 1 : i32
    %32 = vector.broadcast %c1_i32_8 : i32 to vector<1x1x64xi32>
    %33 = arith.andi %25, %32 : vector<1x1x64xi32>
    %c0_i32_9 = arith.constant 0 : i32
    %34 = vector.broadcast %c0_i32_9 : i32 to vector<1x1x64xi32>
    %35 = arith.cmpi eq, %33, %34 : vector<1x1x64xi32>
    %36 = arith.select %35, %28, %31 : vector<1x1x64xi1>, vector<1x1x64xf32>
    %37 = arith.addf %24, %36 : vector<1x1x64xf32>
    %cst_10 = arith.constant 5.120000e+02 : f32
    %38 = vector.broadcast %cst_10 : f32 to vector<1x1x64xf32>
    %39 = arith.divf %37, %38 : vector<1x1x64xf32>
    %cst_11 = arith.constant 9.99999974E-6 : f32
    %40 = vector.broadcast %cst_11 : f32 to vector<1x1x64xf32>
    %41 = arith.addf %39, %40 : vector<1x1x64xf32>
    %42 = math.rsqrt %41 : vector<1x1x64xf32>
    %43 = vector.broadcast %42 : vector<1x1x64xf32> to vector<1x256x64xf32>
    %44 = arith.mulf %21, %43 : vector<1x256x64xf32>
    %45 = vector.shape_cast %1 : vector<1x64xf32> to vector<1x1x64xf32>
    %46 = vector.broadcast %45 : vector<1x1x64xf32> to vector<1x256x64xf32>
    %47 = arith.mulf %44, %46 : vector<1x256x64xf32>
    %48 = vector.shape_cast %2 : vector<1x64xf32> to vector<1x1x64xf32>
    %49 = vector.broadcast %48 : vector<1x1x64xf32> to vector<1x256x64xf32>
    %50 = arith.addf %47, %49 : vector<1x256x64xf32>
    %cst_12 = arith.constant 0.000000e+00 : f32
    %51 = vector.broadcast %cst_12 : f32 to vector<1x256x64xf32>
    %52 = arith.maximumf %50, %51 : vector<1x256x64xf32>
    %53 = vector.shape_cast %52 : vector<1x256x64xf32> to vector<1x16x16x64xf32>
    %c0_13 = arith.constant 0 : index
    %c0_14 = arith.constant 0 : index
    %c0_15 = arith.constant 0 : index
    %c0_16 = arith.constant 0 : index
    %54 = vector.load %arg14[%c0_13, %c0_14, %c0_15, %c0_16] : memref<1x16x16x64xf32, #tpu.memory_space<vmem>>, vector<1x16x16x64xf32>
    tpu.vector_store %arg14[%c0_13, %c0_14, %c0_15, %c0_16], %53 {strides = array<i32>} : memref<1x16x16x64xf32, #tpu.memory_space<vmem>>, vector<1x16x16x64xf32>,
    %c0_17 = arith.constant 0 : index
    %c0_18 = arith.constant 0 : index
    %c0_19 = arith.constant 0 : index
    %c0_20 = arith.constant 0 : index
    %55 = tpu.strided_load %arg14[%c0_17, %c0_18, %c0_19, %c0_20] {strides = array<i32: 1, 2, 2, 1>} : memref<1x16x16x64xf32, #tpu.memory_space<vmem>>, vector<1x8x8x64xf32>
    %56 = vector.shape_cast %55 : vector<1x8x8x64xf32> to vector<64x64xf32>
    %c0_21 = arith.constant 0 : index
    %c0_22 = arith.constant 0 : index
    %57 = vector.load %arg5[%c0_21, %c0_22] : memref<64x128xf32, #tpu.memory_space<vmem>>, vector<64x128xf32>
    %cst_23 = arith.constant dense<0.000000e+00> : vector<64x128xf32>
    %58 = tpu.matmul %56, %57, %cst_23 {dimension_numbers = #tpu.dot_dimension_numbers<[1], [0], [0], [1], [0, 0, 1, 1], [], []>} : vector<64x64xf32>, vector<64x128xf32>, vector<64x128xf32> -> vector<64x128xf32>
    %59 = vector.shape_cast %58 : vector<64x128xf32> to vector<1x64x128xf32>
    %60 = vector.shape_cast %52 : vector<1x256x64xf32> to vector<256x64xf32>
    %c0_24 = arith.constant 0 : index
    %c0_25 = arith.constant 0 : index
    %61 = vector.load %arg2[%c0_24, %c0_25] : memref<64x32xf32, #tpu.memory_space<vmem>>, vector<64x32xf32>
    %cst_26 = arith.constant dense<0.000000e+00> : vector<256x32xf32>
    %62 = tpu.matmul %60, %61, %cst_26 {dimension_numbers = #tpu.dot_dimension_numbers<[1], [0], [0], [1], [0, 0, 1, 1], [], []>} : vector<256x64xf32>, vector<64x32xf32>, vector<256x32xf32> -> vector<256x32xf32>
    %63 = vector.shape_cast %62 : vector<256x32xf32> to vector<1x256x32xf32>
    %c0_27 = arith.constant 0 : index
    %c0_28 = arith.constant 0 : index
    %64 = vector.load %arg8[%c0_27, %c0_28] : memref<1x32xf32, #tpu.memory_space<vmem>>, vector<1x32xf32>
    %c0_29 = arith.constant 0 : index
    %c0_30 = arith.constant 0 : index
    %65 = vector.load %arg9[%c0_29, %c0_30] : memref<1x32xf32, #tpu.memory_space<vmem>>, vector<1x32xf32>
    %cst_31 = arith.constant dense<0.000000e+00> : vector<1x32xf32>
    %66 = vector.multi_reduction <add>, %63, %cst_31 [1] : vector<1x256x32xf32> to vector<1x32xf32>
    %67 = vector.shape_cast %66 : vector<1x32xf32> to vector<1x1x32xf32>
    %cst_32 = arith.constant 2.560000e+02 : f32
    %68 = vector.broadcast %cst_32 : f32 to vector<1x1x32xf32>
    %69 = arith.divf %67, %68 : vector<1x1x32xf32>
    %70 = vector.broadcast %69 : vector<1x1x32xf32> to vector<1x256x32xf32>
    %71 = arith.subf %63, %70 : vector<1x256x32xf32>
    %72 = arith.mulf %71, %71 : vector<1x256x32xf32>
    %cst_33 = arith.constant dense<0.000000e+00> : vector<1x32xf32>
    %73 = vector.multi_reduction <add>, %72, %cst_33 [1] : vector<1x256x32xf32> to vector<1x32xf32>
    %74 = vector.shape_cast %73 : vector<1x32xf32> to vector<1x1x32xf32>
    %cst_34 = arith.constant 2.560000e+02 : f32
    %75 = vector.broadcast %cst_34 : f32 to vector<1x1x32xf32>
    %76 = arith.divf %74, %75 : vector<1x1x32xf32>
    %cst_35 = arith.constant 9.99999974E-6 : f32
    %77 = vector.broadcast %cst_35 : f32 to vector<1x1x32xf32>
    %78 = arith.addf %76, %77 : vector<1x1x32xf32>
    %79 = math.rsqrt %78 : vector<1x1x32xf32>
    %80 = vector.broadcast %79 : vector<1x1x32xf32> to vector<1x256x32xf32>
    %81 = arith.mulf %71, %80 : vector<1x256x32xf32>
    %82 = vector.shape_cast %64 : vector<1x32xf32> to vector<1x1x32xf32>
    %83 = vector.broadcast %82 : vector<1x1x32xf32> to vector<1x256x32xf32>
    %84 = arith.mulf %81, %83 : vector<1x256x32xf32>
    %85 = vector.shape_cast %65 : vector<1x32xf32> to vector<1x1x32xf32>
    %86 = vector.broadcast %85 : vector<1x1x32xf32> to vector<1x256x32xf32>
    %87 = arith.addf %84, %86 : vector<1x256x32xf32>
    %cst_36 = arith.constant 0.000000e+00 : f32
    %88 = vector.broadcast %cst_36 : f32 to vector<1x256x32xf32>
    %89 = arith.maximumf %87, %88 : vector<1x256x32xf32>
    %cst_37 = arith.constant 0.000000e+00 : f32
    %90 = vector.broadcast %cst_37 : f32 to vector<1x1x18x32xf32>
    %c0_38 = arith.constant 0 : index
    %c0_39 = arith.constant 0 : index
    %c0_40 = arith.constant 0 : index
    %c0_41 = arith.constant 0 : index
    %91 = vector.load %arg13[%c0_38, %c0_39, %c0_40, %c0_41] : memref<1x18x18x32xf32, #tpu.memory_space<vmem>>, vector<1x1x18x32xf32>
    tpu.vector_store %arg13[%c0_38, %c0_39, %c0_40, %c0_41], %90 {strides = array<i32>} : memref<1x18x18x32xf32, #tpu.memory_space<vmem>>, vector<1x1x18x32xf32>,
    %cst_42 = arith.constant 0.000000e+00 : f32
    %92 = vector.broadcast %cst_42 : f32 to vector<1x1x18x32xf32>
    %c0_43 = arith.constant 0 : index
    %c17 = arith.constant 17 : index
    %c0_44 = arith.constant 0 : index
    %c0_45 = arith.constant 0 : index
    %93 = vector.load %arg13[%c0_43, %c17, %c0_44, %c0_45] : memref<1x18x18x32xf32, #tpu.memory_space<vmem>>, vector<1x1x18x32xf32>
    tpu.vector_store %arg13[%c0_43, %c17, %c0_44, %c0_45], %92 {strides = array<i32>} : memref<1x18x18x32xf32, #tpu.memory_space<vmem>>, vector<1x1x18x32xf32>,
    %cst_46 = arith.constant 0.000000e+00 : f32
    %94 = vector.broadcast %cst_46 : f32 to vector<1x18x1x32xf32>
    %c0_47 = arith.constant 0 : index
    %c0_48 = arith.constant 0 : index
    %c0_49 = arith.constant 0 : index
    %c0_50 = arith.constant 0 : index
    %95 = vector.load %arg13[%c0_47, %c0_48, %c0_49, %c0_50] : memref<1x18x18x32xf32, #tpu.memory_space<vmem>>, vector<1x18x1x32xf32>
    tpu.vector_store %arg13[%c0_47, %c0_48, %c0_49, %c0_50], %94 {strides = array<i32>} : memref<1x18x18x32xf32, #tpu.memory_space<vmem>>, vector<1x18x1x32xf32>,
    %cst_51 = arith.constant 0.000000e+00 : f32
    %96 = vector.broadcast %cst_51 : f32 to vector<1x18x1x32xf32>
    %c0_52 = arith.constant 0 : index
    %c0_53 = arith.constant 0 : index
    %c17_54 = arith.constant 17 : index
    %c0_55 = arith.constant 0 : index
    %97 = vector.load %arg13[%c0_52, %c0_53, %c17_54, %c0_55] : memref<1x18x18x32xf32, #tpu.memory_space<vmem>>, vector<1x18x1x32xf32>
    tpu.vector_store %arg13[%c0_52, %c0_53, %c17_54, %c0_55], %96 {strides = array<i32>} : memref<1x18x18x32xf32, #tpu.memory_space<vmem>>, vector<1x18x1x32xf32>,
    %98 = vector.shape_cast %89 : vector<1x256x32xf32> to vector<1x16x16x32xf32>
    %c0_56 = arith.constant 0 : index
    %c1 = arith.constant 1 : index
    %c1_57 = arith.constant 1 : index
    %c0_58 = arith.constant 0 : index
    %99 = vector.load %arg13[%c0_56, %c1, %c1_57, %c0_58] : memref<1x18x18x32xf32, #tpu.memory_space<vmem>>, vector<1x16x16x32xf32>
    tpu.vector_store %arg13[%c0_56, %c1, %c1_57, %c0_58], %98 {strides = array<i32>} : memref<1x18x18x32xf32, #tpu.memory_space<vmem>>, vector<1x16x16x32xf32>,
    %c0_59 = arith.constant 0 : index
    %c0_60 = arith.constant 0 : index
    %c0_61 = arith.constant 0 : index
    %c0_62 = arith.constant 0 : index
    %100 = tpu.strided_load %arg13[%c0_59, %c0_60, %c0_61, %c0_62] {strides = array<i32: 1, 2, 2, 1>} : memref<1x18x18x32xf32, #tpu.memory_space<vmem>>, vector<1x8x8x32xf32>
    %101 = vector.shape_cast %100 : vector<1x8x8x32xf32> to vector<64x32xf32>
    %c0_63 = arith.constant 0 : index
    %c0_64 = arith.constant 0 : index
    %c1_65 = arith.constant 1 : index
    %c0_66 = arith.constant 0 : index
    %102 = tpu.strided_load %arg13[%c0_63, %c0_64, %c1_65, %c0_66] {strides = array<i32: 1, 2, 2, 1>} : memref<1x18x18x32xf32, #tpu.memory_space<vmem>>, vector<1x8x8x32xf32>
    %103 = vector.shape_cast %102 : vector<1x8x8x32xf32> to vector<64x32xf32>
    %c0_67 = arith.constant 0 : index
    %c0_68 = arith.constant 0 : index
    %c2 = arith.constant 2 : index
    %c0_69 = arith.constant 0 : index
    %104 = tpu.strided_load %arg13[%c0_67, %c0_68, %c2, %c0_69] {strides = array<i32: 1, 2, 2, 1>} : memref<1x18x18x32xf32, #tpu.memory_space<vmem>>, vector<1x8x8x32xf32>
    %105 = vector.shape_cast %104 : vector<1x8x8x32xf32> to vector<64x32xf32>
    %c0_70 = arith.constant 0 : index
    %c1_71 = arith.constant 1 : index
    %c0_72 = arith.constant 0 : index
    %c0_73 = arith.constant 0 : index
    %106 = tpu.strided_load %arg13[%c0_70, %c1_71, %c0_72, %c0_73] {strides = array<i32: 1, 2, 2, 1>} : memref<1x18x18x32xf32, #tpu.memory_space<vmem>>, vector<1x8x8x32xf32>
    %107 = vector.shape_cast %106 : vector<1x8x8x32xf32> to vector<64x32xf32>
    %c0_74 = arith.constant 0 : index
    %c1_75 = arith.constant 1 : index
    %c1_76 = arith.constant 1 : index
    %c0_77 = arith.constant 0 : index
    %108 = tpu.strided_load %arg13[%c0_74, %c1_75, %c1_76, %c0_77] {strides = array<i32: 1, 2, 2, 1>} : memref<1x18x18x32xf32, #tpu.memory_space<vmem>>, vector<1x8x8x32xf32>
    %109 = vector.shape_cast %108 : vector<1x8x8x32xf32> to vector<64x32xf32>
    %c0_78 = arith.constant 0 : index
    %c1_79 = arith.constant 1 : index
    %c2_80 = arith.constant 2 : index
    %c0_81 = arith.constant 0 : index
    %110 = tpu.strided_load %arg13[%c0_78, %c1_79, %c2_80, %c0_81] {strides = array<i32: 1, 2, 2, 1>} : memref<1x18x18x32xf32, #tpu.memory_space<vmem>>, vector<1x8x8x32xf32>
    %111 = vector.shape_cast %110 : vector<1x8x8x32xf32> to vector<64x32xf32>
    %c0_82 = arith.constant 0 : index
    %c2_83 = arith.constant 2 : index
    %c0_84 = arith.constant 0 : index
    %c0_85 = arith.constant 0 : index
    %112 = tpu.strided_load %arg13[%c0_82, %c2_83, %c0_84, %c0_85] {strides = array<i32: 1, 2, 2, 1>} : memref<1x18x18x32xf32, #tpu.memory_space<vmem>>, vector<1x8x8x32xf32>
    %113 = vector.shape_cast %112 : vector<1x8x8x32xf32> to vector<64x32xf32>
    %c0_86 = arith.constant 0 : index
    %c2_87 = arith.constant 2 : index
    %c1_88 = arith.constant 1 : index
    %c0_89 = arith.constant 0 : index
    %114 = tpu.strided_load %arg13[%c0_86, %c2_87, %c1_88, %c0_89] {strides = array<i32: 1, 2, 2, 1>} : memref<1x18x18x32xf32, #tpu.memory_space<vmem>>, vector<1x8x8x32xf32>
    %115 = vector.shape_cast %114 : vector<1x8x8x32xf32> to vector<64x32xf32>
    %c0_90 = arith.constant 0 : index
    %c2_91 = arith.constant 2 : index
    %c2_92 = arith.constant 2 : index
    %c0_93 = arith.constant 0 : index
    %116 = tpu.strided_load %arg13[%c0_90, %c2_91, %c2_92, %c0_93] {strides = array<i32: 1, 2, 2, 1>} : memref<1x18x18x32xf32, #tpu.memory_space<vmem>>, vector<1x8x8x32xf32>
    %117 = vector.shape_cast %116 : vector<1x8x8x32xf32> to vector<64x32xf32>
    %118 = tpu.concatenate %101, %103, %105, %107, %109, %111, %113, %115, %117 in 1 : vector<64x32xf32>, vector<64x32xf32>, vector<64x32xf32>, vector<64x32xf32>, vector<64x32xf32>, vector<64x32xf32>, vector<64x32xf32>, vector<64x32xf32>, vector<64x32xf32> -> vector<64x288xf32>
    %c0_94 = arith.constant 0 : index
    %c0_95 = arith.constant 0 : index
    %119 = vector.load %arg3[%c0_94, %c0_95] : memref<288x32xf32, #tpu.memory_space<vmem>>, vector<288x32xf32>
    %cst_96 = arith.constant dense<0.000000e+00> : vector<64x32xf32>
    %120 = tpu.matmul %118, %119, %cst_96 {dimension_numbers = #tpu.dot_dimension_numbers<[1], [0], [0], [1], [0, 0, 1, 1], [], []>} : vector<64x288xf32>, vector<288x32xf32>, vector<64x32xf32> -> vector<64x32xf32>
    %121 = vector.shape_cast %120 : vector<64x32xf32> to vector<1x64x32xf32>
    %c0_97 = arith.constant 0 : index
    %c0_98 = arith.constant 0 : index
    %122 = vector.load %arg10[%c0_97, %c0_98] : memref<1x32xf32, #tpu.memory_space<vmem>>, vector<1x32xf32>
    %c0_99 = arith.constant 0 : index
    %c0_100 = arith.constant 0 : index
    %123 = vector.load %arg11[%c0_99, %c0_100] : memref<1x32xf32, #tpu.memory_space<vmem>>, vector<1x32xf32>
    %cst_101 = arith.constant dense<0.000000e+00> : vector<1x32xf32>
    %124 = vector.multi_reduction <add>, %121, %cst_101 [1] : vector<1x64x32xf32> to vector<1x32xf32>
    %125 = vector.shape_cast %124 : vector<1x32xf32> to vector<1x1x32xf32>
    %cst_102 = arith.constant 6.400000e+01 : f32
    %126 = vector.broadcast %cst_102 : f32 to vector<1x1x32xf32>
    %127 = arith.divf %125, %126 : vector<1x1x32xf32>
    %128 = vector.broadcast %127 : vector<1x1x32xf32> to vector<1x64x32xf32>
    %129 = arith.subf %121, %128 : vector<1x64x32xf32>
    %130 = arith.mulf %129, %129 : vector<1x64x32xf32>
    %cst_103 = arith.constant dense<0.000000e+00> : vector<1x32xf32>
    %131 = vector.multi_reduction <add>, %130, %cst_103 [1] : vector<1x64x32xf32> to vector<1x32xf32>
    %132 = vector.shape_cast %131 : vector<1x32xf32> to vector<1x1x32xf32>
    %cst_104 = arith.constant 6.400000e+01 : f32
    %133 = vector.broadcast %cst_104 : f32 to vector<1x1x32xf32>
    %134 = arith.divf %132, %133 : vector<1x1x32xf32>
    %cst_105 = arith.constant 9.99999974E-6 : f32
    %135 = vector.broadcast %cst_105 : f32 to vector<1x1x32xf32>
    %136 = arith.addf %134, %135 : vector<1x1x32xf32>
    %137 = math.rsqrt %136 : vector<1x1x32xf32>
    %138 = vector.broadcast %137 : vector<1x1x32xf32> to vector<1x64x32xf32>
    %139 = arith.mulf %129, %138 : vector<1x64x32xf32>
    %140 = vector.shape_cast %122 : vector<1x32xf32> to vector<1x1x32xf32>
    %141 = vector.broadcast %140 : vector<1x1x32xf32> to vector<1x64x32xf32>
    %142 = arith.mulf %139, %141 : vector<1x64x32xf32>
    %143 = vector.shape_cast %123 : vector<1x32xf32> to vector<1x1x32xf32>
    %144 = vector.broadcast %143 : vector<1x1x32xf32> to vector<1x64x32xf32>
    %145 = arith.addf %142, %144 : vector<1x64x32xf32>
    %cst_106 = arith.constant 0.000000e+00 : f32
    %146 = vector.broadcast %cst_106 : f32 to vector<1x64x32xf32>
    %147 = arith.maximumf %145, %146 : vector<1x64x32xf32>
    %148 = vector.shape_cast %147 : vector<1x64x32xf32> to vector<64x32xf32>
    %c0_107 = arith.constant 0 : index
    %c0_108 = arith.constant 0 : index
    %149 = vector.load %arg4[%c0_107, %c0_108] : memref<32x128xf32, #tpu.memory_space<vmem>>, vector<32x128xf32>
    %cst_109 = arith.constant dense<0.000000e+00> : vector<64x128xf32>
    %150 = tpu.matmul %148, %149, %cst_109 {dimension_numbers = #tpu.dot_dimension_numbers<[1], [0], [0], [1], [0, 0, 1, 1], [], []>} : vector<64x32xf32>, vector<32x128xf32>, vector<64x128xf32> -> vector<64x128xf32>
    %151 = vector.shape_cast %150 : vector<64x128xf32> to vector<1x64x128xf32>
    %152 = arith.addf %151, %59 : vector<1x64x128xf32>
    %c0_110 = arith.constant 0 : index
    %c0_111 = arith.constant 0 : index
    %c0_112 = arith.constant 0 : index
    %153 = vector.load %arg12[%c0_110, %c0_111, %c0_112] : memref<1x64x128xf32, #tpu.memory_space<vmem>>, vector<1x64x128xf32>
    tpu.vector_store %arg12[%c0_110, %c0_111, %c0_112], %152 {strides = array<i32>} : memref<1x64x128xf32, #tpu.memory_space<vmem>>, vector<1x64x128xf32>,
    return
  }
  func.func @transform_0(%arg0: i32) -> (i32, i32, i32) {
    %c0_i32 = arith.constant 0 : i32
    %c0_i32_0 = arith.constant 0 : i32
    %c0_i32_1 = arith.constant 0 : i32
    return %arg0, %c0_i32, %c0_i32_0 : i32, i32, i32
  }
  func.func @transform_1(%arg0: i32) -> (i32, i32) {
    %c0_i32 = arith.constant 0 : i32
    %c0_i32_0 = arith.constant 0 : i32
    %c0_i32_1 = arith.constant 0 : i32
    return %c0_i32, %c0_i32_0 : i32, i32
  }
  func.func @transform_2(%arg0: i32) -> (i32, i32) {
    %c0_i32 = arith.constant 0 : i32
    %c0_i32_0 = arith.constant 0 : i32
    %c0_i32_1 = arith.constant 0 : i32
    return %c0_i32, %c0_i32_0 : i32, i32
  }
  func.func @transform_3(%arg0: i32) -> (i32, i32) {
    %c0_i32 = arith.constant 0 : i32
    %c0_i32_0 = arith.constant 0 : i32
    %c0_i32_1 = arith.constant 0 : i32
    return %c0_i32, %c0_i32_0 : i32, i32
  }
  func.func @transform_4(%arg0: i32) -> (i32, i32) {
    %c0_i32 = arith.constant 0 : i32
    %c0_i32_0 = arith.constant 0 : i32
    %c0_i32_1 = arith.constant 0 : i32
    return %c0_i32, %c0_i32_0 : i32, i32
  }
  func.func @transform_5(%arg0: i32) -> (i32, i32) {
    %c0_i32 = arith.constant 0 : i32
    %c0_i32_0 = arith.constant 0 : i32
    %c0_i32_1 = arith.constant 0 : i32
    return %c0_i32, %c0_i32_0 : i32, i32
  }
  func.func @transform_6(%arg0: i32) -> (i32, i32) {
    %c0_i32 = arith.constant 0 : i32
    %c0_i32_0 = arith.constant 0 : i32
    %c0_i32_1 = arith.constant 0 : i32
    return %c0_i32, %c0_i32_0 : i32, i32
  }
  func.func @transform_7(%arg0: i32) -> (i32, i32) {
    %c0_i32 = arith.constant 0 : i32
    %c0_i32_0 = arith.constant 0 : i32
    %c0_i32_1 = arith.constant 0 : i32
    return %c0_i32, %c0_i32_0 : i32, i32
  }
  func.func @transform_8(%arg0: i32) -> (i32, i32) {
    %c0_i32 = arith.constant 0 : i32
    %c0_i32_0 = arith.constant 0 : i32
    %c0_i32_1 = arith.constant 0 : i32
    return %c0_i32, %c0_i32_0 : i32, i32
  }
  func.func @transform_9(%arg0: i32) -> (i32, i32) {
    %c0_i32 = arith.constant 0 : i32
    %c0_i32_0 = arith.constant 0 : i32
    %c0_i32_1 = arith.constant 0 : i32
    return %c0_i32, %c0_i32_0 : i32, i32
  }
  func.func @transform_10(%arg0: i32) -> (i32, i32) {
    %c0_i32 = arith.constant 0 : i32
    %c0_i32_0 = arith.constant 0 : i32
    %c0_i32_1 = arith.constant 0 : i32
    return %c0_i32, %c0_i32_0 : i32, i32
  }
  func.func @transform_11(%arg0: i32) -> (i32, i32, i32) {
    %c0_i32 = arith.constant 0 : i32
    %c0_i32_0 = arith.constant 0 : i32
    %c0_i32_1 = arith.constant 0 : i32
    return %arg0, %c0_i32, %c0_i32_0 : i32, i32, i32
  }
}

</mosaic_0001>

<llo_original>
// kernel: preact_bottleneck_forward.1
$region0: #{preact_bottleneck_forward.1}
  #allocation0 [shape = 'u32[]', space=smem, size = 0x4, offset = 0x4, fixed_abs, tag = 'smem constant byte address 0x4 - core index']
  #allocation1 [shape = 'u32[144,128]{1,0:T(1,128)}', space=vmem, size = 0x12000, scoped, tag = 'internal scratch']
  #allocation2 [shape = 'f32[1,18,18,32]{3,2,1,0:T(8,128)}', space=vmem, size = 0x36000, scoped, tag = 'scratch operand']
  #allocation3 [shape = 'f32[1,16,16,64]{3,2,1,0:T(8,128)}', space=vmem, size = 0x20000, scoped, tag = 'scratch operand']
  %s0 = inlined_call_operand.vmem [shape: f32[2,256,64], index: 0, kind: input, shape index: {}]
  %s1 = inlined_call_operand.vmem [shape: f32[64,32], index: 1, kind: input, shape index: {}]
  %s2 = inlined_call_operand.vmem [shape: f32[288,32], index: 2, kind: input, shape index: {}]
  %s3 = inlined_call_operand.vmem [shape: f32[32,128], index: 3, kind: input, shape index: {}]
  %s4 = inlined_call_operand.vmem [shape: f32[64,128], index: 4, kind: input, shape index: {}]
  %s5 = inlined_call_operand.vmem [shape: f32[1,64], index: 5, kind: input, shape index: {}]
  %s6 = inlined_call_operand.vmem [shape: f32[1,64], index: 6, kind: input, shape index: {}]
  %s7 = inlined_call_operand.vmem [shape: f32[1,32], index: 7, kind: input, shape index: {}]
  %s8 = inlined_call_operand.vmem [shape: f32[1,32], index: 8, kind: input, shape index: {}]
  %s9 = inlined_call_operand.vmem [shape: f32[1,32], index: 9, kind: input, shape index: {}]
  %s10 = inlined_call_operand.vmem [shape: f32[1,32], index: 10, kind: input, shape index: {}]
  %s11 = inlined_call_operand.hbm [shape: f32[2,64,128], index: 11, kind: output, shape index: {}]
  %s12 = sld [smem:[#allocation0]]
  $region77: #{preact_bottleneck_forward.1} parent=0
    _
  %s14 = ssub.s32 1, %s12
  %s15 = scalar_select 0, %s14, %s12
  $region1: #{preact_bottleneck_forward.1} parent=0
    #allocation4 [shape = 'u8[65536]{0}', space=vmem, size = 0x10000, scoped, tag = 'output window, operand 0']
    #allocation5 [shape = 's32[2]{0}', space=sflag, size = 0x8, scoped, tag = 'scoped memory for preact_bottleneck_forward.1']
    %16 = vsyncpa [#allocation5], 0
    %s17 = scalar_lea.sflag [#allocation5], 1
    %18 = vsyncpa %s17, 0
    loop: start=0, step=1, limit=4
    $region2: #{preact_bottleneck_forward.1} parent=1 // loop_pre_header
      _
    $region3: #{preact_bottleneck_forward.1} parent=1 // loop_header
      %s20 = sphi 0, %s24
      %p21 = scmp.ge.s32.totalorder %s20, 4
      %s30 = sphi 0, %s32
      %s33 = sphi 0, %s30
      %s34 = sphi 0, %s33
      %s50 = sphi 0, %s34
      %s54 = sphi 0, %s54
      %s56 = sphi 0, %s54
      %s57 = sphi 0, %s56
      %s71 = sphi 0, %s57
      %s75 = sphi 0, %s75
      %s77 = sphi 0, %s75
      %s78 = sphi 0, %s77
      %s92 = sphi 0, %s78
      %s96 = sphi 0, %s96
      %s98 = sphi 0, %s96
      %s99 = sphi 0, %s98
      %s113 = sphi 0, %s99
      %s117 = sphi 0, %s117
      %s119 = sphi 0, %s117
      %s120 = sphi 0, %s119
      %s134 = sphi 0, %s120
      %s138 = sphi 0, %s138
      %s140 = sphi 0, %s138
      %s141 = sphi 0, %s140
      %s155 = sphi 0, %s141
      %s159 = sphi 0, %s159
      %s161 = sphi 0, %s159
      %s162 = sphi 0, %s161
      %s176 = sphi 0, %s162
      %s180 = sphi 0, %s180
      %s182 = sphi 0, %s180
      %s183 = sphi 0, %s182
      %s197 = sphi 0, %s183
      %s201 = sphi 0, %s201
      %s203 = sphi 0, %s201
      %s204 = sphi 0, %s203
      %s218 = sphi 0, %s204
      %s222 = sphi 0, %s222
      %s224 = sphi 0, %s222
      %s225 = sphi 0, %s224
      %s239 = sphi 0, %s225
      %s243 = sphi 0, %s243
      %s245 = sphi 0, %s243
      %s246 = sphi 0, %s245
      %s260 = sphi 0, %s246
      %s266 = sphi 0, %s268
      %s269 = sphi 0, %s266
      %s270 = sphi 0, %s269
      %s286 = sphi 0, %s270
    $region4: #{preact_bottleneck_forward.1} parent=1 // loop_header_branch
      %23 = sbr.rel (%p21) target = $region8
    $region5: #{preact_bottleneck_forward.1} parent=1 // loop_body
      %s25 = ssub.s32 %s20, 1
      %s26 = ssub.s32 %s20, 2
      %s27 = sadd.s32 %s20, 1
      %s28 = ssub.s32 %s20, %s27
      %p29 = scmp.eq.s32.totalorder %s28, 0
      %s31 = sadd.s32 %s30, 1
      %s32 = scalar_select %p29, %s30, %s31
      %p35 = pneg %p29
      %p36 = scmp.eq.s32.totalorder %s20, 1
      %p37 = por %p35, %p36
      %p38 = scmp.ne.s32.totalorder %s30, %s33
      %p39 = scmp.eq.s32.totalorder %s20, 0
      %p40 = por %p38, %p39
      %p41 = scmp.ne.s32.totalorder %s30, %s33
      %p42 = scmp.eq.s32.totalorder %s25, 1
      %p43 = por %p41, %p42
      %p44 = scmp.ne.s32.totalorder %s33, %s34
      %p45 = scmp.eq.s32.totalorder %s25, 0
      %p46 = por %p44, %p45
      %p47 = scmp.ne.s32.totalorder %s33, %s34
      %p48 = scmp.eq.s32.totalorder %s26, 1
      %p49 = por %p47, %p48
      %p51 = scmp.ne.s32.totalorder %s34, %s50
      %p52 = scmp.eq.s32.totalorder %s26, 0
      %p53 = por %p51, %p52
      %s55 = sadd.s32 %s54, 1
      %p58 = scmp.eq.s32.totalorder %s20, 1
      %p59 = scmp.ne.s32.totalorder %s54, %s56
      %p60 = scmp.eq.s32.totalorder %s20, 0
      %p61 = por %p59, %p60
      %p62 = scmp.ne.s32.totalorder %s54, %s56
      %p63 = scmp.eq.s32.totalorder %s25, 1
      %p64 = por %p62, %p63
      %p65 = scmp.ne.s32.totalorder %s56, %s57
      %p66 = scmp.eq.s32.totalorder %s25, 0
      %p67 = por %p65, %p66
      %p68 = scmp.ne.s32.totalorder %s56, %s57
      %p69 = scmp.eq.s32.totalorder %s26, 1
      %p70 = por %p68, %p69
      %p72 = scmp.ne.s32.totalorder %s57, %s71
      %p73 = scmp.eq.s32.totalorder %s26, 0
      %p74 = por %p72, %p73
      %s76 = sadd.s32 %s75, 1
      %p79 = scmp.eq.s32.totalorder %s20, 1
      %p80 = scmp.ne.s32.totalorder %s75, %s77
      %p81 = scmp.eq.s32.totalorder %s20, 0
      %p82 = por %p80, %p81
      %p83 = scmp.ne.s32.totalorder %s75, %s77
      %p84 = scmp.eq.s32.totalorder %s25, 1
      %p85 = por %p83, %p84
      %p86 = scmp.ne.s32.totalorder %s77, %s78
      %p87 = scmp.eq.s32.totalorder %s25, 0
      %p88 = por %p86, %p87
      %p89 = scmp.ne.s32.totalorder %s77, %s78
      %p90 = scmp.eq.s32.totalorder %s26, 1
      %p91 = por %p89, %p90
      %p93 = scmp.ne.s32.totalorder %s78, %s92
      %p94 = scmp.eq.s32.totalorder %s26, 0
      %p95 = por %p93, %p94
      %s97 = sadd.s32 %s96, 1
      %p100 = scmp.eq.s32.totalorder %s20, 1
      %p101 = scmp.ne.s32.totalorder %s96, %s98
      %p102 = scmp.eq.s32.totalorder %s20, 0
      %p103 = por %p101, %p102
      %p104 = scmp.ne.s32.totalorder %s96, %s98
      %p105 = scmp.eq.s32.totalorder %s25, 1
      %p106 = por %p104, %p105
      %p107 = scmp.ne.s32.totalorder %s98, %s99
      %p108 = scmp.eq.s32.totalorder %s25, 0
      %p109 = por %p107, %p108
      %p110 = scmp.ne.s32.totalorder %s98, %s99
      %p111 = scmp.eq.s32.totalorder %s26, 1
      %p112 = por %p110, %p111
      %p114 = scmp.ne.s32.totalorder %s99, %s113
      %p115 = scmp.eq.s32.totalorder %s26, 0
      %p116 = por %p114, %p115
      %s118 = sadd.s32 %s117, 1
      %p121 = scmp.eq.s32.totalorder %s20, 1
      %p122 = scmp.ne.s32.totalorder %s117, %s119
      %p123 = scmp.eq.s32.totalorder %s20, 0
      %p124 = por %p122, %p123
      %p125 = scmp.ne.s32.totalorder %s117, %s119
      %p126 = scmp.eq.s32.totalorder %s25, 1
      %p127 = por %p125, %p126
      %p128 = scmp.ne.s32.totalorder %s119, %s120
      %p129 = scmp.eq.s32.totalorder %s25, 0
      %p130 = por %p128, %p129
      %p131 = scmp.ne.s32.totalorder %s119, %s120
      %p132 = scmp.eq.s32.totalorder %s26, 1
      %p133 = por %p131, %p132
      %p135 = scmp.ne.s32.totalorder %s120, %s134
      %p136 = scmp.eq.s32.totalorder %s26, 0
      %p137 = por %p135, %p136
      %s139 = sadd.s32 %s138, 1
      %p142 = scmp.eq.s32.totalorder %s20, 1
      %p143 = scmp.ne.s32.totalorder %s138, %s140
      %p144 = scmp.eq.s32.totalorder %s20, 0
      %p145 = por %p143, %p144
      %p146 = scmp.ne.s32.totalorder %s138, %s140
      %p147 = scmp.eq.s32.totalorder %s25, 1
      %p148 = por %p146, %p147
      %p149 = scmp.ne.s32.totalorder %s140, %s141
      %p150 = scmp.eq.s32.totalorder %s25, 0
      %p151 = por %p149, %p150
      %p152 = scmp.ne.s32.totalorder %s140, %s141
      %p153 = scmp.eq.s32.totalorder %s26, 1
      %p154 = por %p152, %p153
      %p156 = scmp.ne.s32.totalorder %s141, %s155
      %p157 = scmp.eq.s32.totalorder %s26, 0
      %p158 = por %p156, %p157
      %s160 = sadd.s32 %s159, 1
      %p163 = scmp.eq.s32.totalorder %s20, 1
      %p164 = scmp.ne.s32.totalorder %s159, %s161
      %p165 = scmp.eq.s32.totalorder %s20, 0
      %p166 = por %p164, %p165
      %p167 = scmp.ne.s32.totalorder %s159, %s161
      %p168 = scmp.eq.s32.totalorder %s25, 1
      %p169 = por %p167, %p168
      %p170 = scmp.ne.s32.totalorder %s161, %s162
      %p171 = scmp.eq.s32.totalorder %s25, 0
      %p172 = por %p170, %p171
      %p173 = scmp.ne.s32.totalorder %s161, %s162
      %p174 = scmp.eq.s32.totalorder %s26, 1
      %p175 = por %p173, %p174
      %p177 = scmp.ne.s32.totalorder %s162, %s176
      %p178 = scmp.eq.s32.totalorder %s26, 0
      %p179 = por %p177, %p178
      %s181 = sadd.s32 %s180, 1
      %p184 = scmp.eq.s32.totalorder %s20, 1
      %p185 = scmp.ne.s32.totalorder %s180, %s182
      %p186 = scmp.eq.s32.totalorder %s20, 0
      %p187 = por %p185, %p186
      %p188 = scmp.ne.s32.totalorder %s180, %s182
      %p189 = scmp.eq.s32.totalorder %s25, 1
      %p190 = por %p188, %p189
      %p191 = scmp.ne.s32.totalorder %s182, %s183
      %p192 = scmp.eq.s32.totalorder %s25, 0
      %p193 = por %p191, %p192
      %p194 = scmp.ne.s32.totalorder %s182, %s183
      %p195 = scmp.eq.s32.totalorder %s26, 1
      %p196 = por %p194, %p195
      %p198 = scmp.ne.s32.totalorder %s183, %s197
      %p199 = scmp.eq.s32.totalorder %s26, 0
      %p200 = por %p198, %p199
      %s202 = sadd.s32 %s201, 1
      %p205 = scmp.eq.s32.totalorder %s20, 1
      %p206 = scmp.ne.s32.totalorder %s201, %s203
      %p207 = scmp.eq.s32.totalorder %s20, 0
      %p208 = por %p206, %p207
      %p209 = scmp.ne.s32.totalorder %s201, %s203
      %p210 = scmp.eq.s32.totalorder %s25, 1
      %p211 = por %p209, %p210
      %p212 = scmp.ne.s32.totalorder %s203, %s204
      %p213 = scmp.eq.s32.totalorder %s25, 0
      %p214 = por %p212, %p213
      %p215 = scmp.ne.s32.totalorder %s203, %s204
      %p216 = scmp.eq.s32.totalorder %s26, 1
      %p217 = por %p215, %p216
      %p219 = scmp.ne.s32.totalorder %s204, %s218
      %p220 = scmp.eq.s32.totalorder %s26, 0
      %p221 = por %p219, %p220
      %s223 = sadd.s32 %s222, 1
      %p226 = scmp.eq.s32.totalorder %s20, 1
      %p227 = scmp.ne.s32.totalorder %s222, %s224
      %p228 = scmp.eq.s32.totalorder %s20, 0
      %p229 = por %p227, %p228
      %p230 = scmp.ne.s32.totalorder %s222, %s224
      %p231 = scmp.eq.s32.totalorder %s25, 1
      %p232 = por %p230, %p231
      %p233 = scmp.ne.s32.totalorder %s224, %s225
      %p234 = scmp.eq.s32.totalorder %s25, 0
      %p235 = por %p233, %p234
      %p236 = scmp.ne.s32.totalorder %s224, %s225
      %p237 = scmp.eq.s32.totalorder %s26, 1
      %p238 = por %p236, %p237
      %p240 = scmp.ne.s32.totalorder %s225, %s239
      %p241 = scmp.eq.s32.totalorder %s26, 0
      %p242 = por %p240, %p241
      %s244 = sadd.s32 %s243, 1
      %p247 = scmp.eq.s32.totalorder %s20, 1
      %p248 = scmp.ne.s32.totalorder %s243, %s245
      %p249 = scmp.eq.s32.totalorder %s20, 0
      %p250 = por %p248, %p249
      %p251 = scmp.ne.s32.totalorder %s243, %s245
      %p252 = scmp.eq.s32.totalorder %s25, 1
      %p253 = por %p251, %p252
      %p254 = scmp.ne.s32.totalorder %s245, %s246
      %p255 = scmp.eq.s32.totalorder %s25, 0
      %p256 = por %p254, %p255
      %p257 = scmp.ne.s32.totalorder %s245, %s246
      %p258 = scmp.eq.s32.totalorder %s26, 1
      %p259 = por %p257, %p258
      %p261 = scmp.ne.s32.totalorder %s246, %s260
      %p262 = scmp.eq.s32.totalorder %s26, 0
      %p263 = por %p261, %p262
      %s264 = ssub.s32 %s20, %s27
      %p265 = scmp.eq.s32.totalorder %s264, 0
      %s267 = sadd.s32 %s266, 1
      %s268 = scalar_select %p265, %s266, %s267
      %p271 = pneg %p265
      %p272 = scmp.eq.s32.totalorder %s20, 1
      %p273 = por %p271, %p272
      %p274 = scmp.ne.s32.totalorder %s266, %s269
      %p275 = scmp.eq.s32.totalorder %s20, 0
      %p276 = por %p274, %p275
      %p277 = scmp.ne.s32.totalorder %s266, %s269
      %p278 = scmp.eq.s32.totalorder %s25, 1
      %p279 = por %p277, %p278
      %p280 = scmp.ne.s32.totalorder %s269, %s270
      %p281 = scmp.eq.s32.totalorder %s25, 0
      %p282 = por %p280, %p281
      %p283 = scmp.ne.s32.totalorder %s269, %s270
      %p284 = scmp.eq.s32.totalorder %s26, 1
      %p285 = por %p283, %p284
      %p287 = scmp.ne.s32.totalorder %s270, %s286
      %p288 = scmp.eq.s32.totalorder %s26, 0
      %p289 = por %p287, %p288
      %p290 = scmp.le.s32.totalorder 1, %s20
      %p291 = scmp.lt.s32.totalorder %s20, 3
      %p292 = pnand %p290, %p291
      %p293 = pneg %p292
      // Predicated region
      $region9: #{preact_bottleneck_forward.1} parent=5 // pred_check
        _
      $region10: #{preact_bottleneck_forward.1} parent=5 // pred_check_branch
        %295 = sbr.rel (%p292) target = $region12
      $region11: #{preact_bottleneck_forward.1} parent=5 // pred_region
        %s296 = ssub.s32 %s20, 1
        // Predicated region
        $region13: #{preact_bottleneck_forward.1} parent=11 // pred_check
          %p297 = pneg %p67
        $region14: #{preact_bottleneck_forward.1} parent=11 // pred_check_branch
          %299 = sbr.rel (%p297) target = $region16
        $region15: #{preact_bottleneck_forward.1} parent=11 // pred_region
          _
        $region16: #{preact_bottleneck_forward.1} parent=11 // pred_fallthru
          _
        // Predicated region
        $region17: #{preact_bottleneck_forward.1} parent=11 // pred_check
          %p300 = pneg %p88
        $region18: #{preact_bottleneck_forward.1} parent=11 // pred_check_branch
          %302 = sbr.rel (%p300) target = $region20
        $region19: #{preact_bottleneck_forward.1} parent=11 // pred_region
          _
        $region20: #{preact_bottleneck_forward.1} parent=11 // pred_fallthru
          _
        // Predicated region
        $region21: #{preact_bottleneck_forward.1} parent=11 // pred_check
          %p303 = pneg %p109
        $region22: #{preact_bottleneck_forward.1} parent=11 // pred_check_branch
          %305 = sbr.rel (%p303) target = $region24
        $region23: #{preact_bottleneck_forward.1} parent=11 // pred_region
          _
        $region24: #{preact_bottleneck_forward.1} parent=11 // pred_fallthru
          _
        // Predicated region
        $region25: #{preact_bottleneck_forward.1} parent=11 // pred_check
          %p306 = pneg %p130
        $region26: #{preact_bottleneck_forward.1} parent=11 // pred_check_branch
          %308 = sbr.rel (%p306) target = $region28
        $region27: #{preact_bottleneck_forward.1} parent=11 // pred_region
          _
        $region28: #{preact_bottleneck_forward.1} parent=11 // pred_fallthru
          _
        // Predicated region
        $region29: #{preact_bottleneck_forward.1} parent=11 // pred_check
          %p309 = pneg %p151
        $region30: #{preact_bottleneck_forward.1} parent=11 // pred_check_branch
          %311 = sbr.rel (%p309) target = $region32
        $region31: #{preact_bottleneck_forward.1} parent=11 // pred_region
          _
        $region32: #{preact_bottleneck_forward.1} parent=11 // pred_fallthru
          _
        // Predicated region
        $region33: #{preact_bottleneck_forward.1} parent=11 // pred_check
          %p312 = pneg %p172
        $region34: #{preact_bottleneck_forward.1} parent=11 // pred_check_branch
          %314 = sbr.rel (%p312) target = $region36
        $region35: #{preact_bottleneck_forward.1} parent=11 // pred_region
          _
        $region36: #{preact_bottleneck_forward.1} parent=11 // pred_fallthru
          _
        // Predicated region
        $region37: #{preact_bottleneck_forward.1} parent=11 // pred_check
          %p315 = pneg %p193
        $region38: #{preact_bottleneck_forward.1} parent=11 // pred_check_branch
          %317 = sbr.rel (%p315) target = $region40
        $region39: #{preact_bottleneck_forward.1} parent=11 // pred_region
          _
        $region40: #{preact_bottleneck_forward.1} parent=11 // pred_fallthru
          _
        // Predicated region
        $region41: #{preact_bottleneck_forward.1} parent=11 // pred_check
          %p318 = pneg %p214
        $region42: #{preact_bottleneck_forward.1} parent=11 // pred_check_branch
          %320 = sbr.rel (%p318) target = $region44
        $region43: #{preact_bottleneck_forward.1} parent=11 // pred_region
          _
        $region44: #{preact_bottleneck_forward.1} parent=11 // pred_fallthru
          _
        // Predicated region
        $region45: #{preact_bottleneck_forward.1} parent=11 // pred_check
          %p321 = pneg %p235
        $region46: #{preact_bottleneck_forward.1} parent=11 // pred_check_branch
          %323 = sbr.rel (%p321) target = $region48
        $region47: #{preact_bottleneck_forward.1} parent=11 // pred_region
          _
        $region48: #{preact_bottleneck_forward.1} parent=11 // pred_fallthru
          _
        // Predicated region
        $region49: #{preact_bottleneck_forward.1} parent=11 // pred_check
          %p324 = pneg %p256
        $region50: #{preact_bottleneck_forward.1} parent=11 // pred_check_branch
          %326 = sbr.rel (%p324) target = $region52
        $region51: #{preact_bottleneck_forward.1} parent=11 // pred_region
          _
        $region52: #{preact_bottleneck_forward.1} parent=11 // pred_fallthru
          _
      $region12: #{preact_bottleneck_forward.1} parent=5 // pred_fallthru
        _
      %p327 = scmp.lt.s32.totalorder %s20, 2
      // Predicated region
      $region53: #{preact_bottleneck_forward.1} parent=5 // pred_check
        %p328 = pneg %p327
      $region54: #{preact_bottleneck_forward.1} parent=5 // pred_check_branch
        %330 = sbr.rel (%p328) target = $region56
      $region55: #{preact_bottleneck_forward.1} parent=5 // pred_region
        // Predicated region
        $region57: #{preact_bottleneck_forward.1} parent=55 // pred_check
          %p331 = pneg %p40
        $region58: #{preact_bottleneck_forward.1} parent=55 // pred_check_branch
          %333 = sbr.rel (%p331) target = $region60
        $region59: #{preact_bottleneck_forward.1} parent=55 // pred_region
          %p334 = scmp.lt.s32.totalorder %s20, 1
          %s335 = scalar_select %p334, %s20, 1
          %s336 = smul.addr %s335, 32
          %s337 = smul.addr %s336, 8
          %s338 = scalar_lea.vmem %s0, %s337
        $region60: #{preact_bottleneck_forward.1} parent=55 // pred_fallthru
          _
      $region56: #{preact_bottleneck_forward.1} parent=5 // pred_fallthru
        _
      %p339 = scmp.le.s32.totalorder 1, %s20
      %p340 = scmp.lt.s32.totalorder %s20, 3
      %p341 = pnand %p339, %p340
      %p342 = pneg %p341
      // Predicated region
      $region61: #{preact_bottleneck_forward.1} parent=5 // pred_check
        _
      $region62: #{preact_bottleneck_forward.1} parent=5 // pred_check_branch
        %344 = sbr.rel (%p341) target = $region64
      $region63: #{preact_bottleneck_forward.1} parent=5 // pred_region
        %s345 = ssub.s32 %s20, 1
        %p346 = scmp.lt.s32.totalorder %s25, 1
        %s347 = scalar_select %p346, %s25, 1
        %s348 = smul.addr %s347, 32
        %s349 = smul.addr %s348, 8
        %s350 = scalar_lea.vmem %s0, %s349
        %p351 = pneg %p46
        %p352 = pneg %p43
        %p353 = pneg %p67
        %p354 = pneg %p64
        %p355 = pneg %p88
        %p356 = pneg %p85
        %p357 = pneg %p109
        %p358 = pneg %p106
        %p359 = pneg %p130
        %p360 = pneg %p127
        %p361 = pneg %p151
        %p362 = pneg %p148
        %p363 = pneg %p172
        %p364 = pneg %p169
        %p365 = pneg %p193
        %p366 = pneg %p190
        %p367 = pneg %p214
        %p368 = pneg %p211
        %p369 = pneg %p235
        %p370 = pneg %p232
        %p371 = pneg %p256
        %p372 = pneg %p253
        %p373 = pneg %p282
        %p374 = pneg %p279
        %s375 = sand.u32 %s269, 1
        %s376 = scalar_lea.sflag [#allocation5], %s375
        %s377 = sand.u32 %s269, 1
        %s378 = smul.addr %s377, 64
        %s379 = scalar_lea.vmem [#allocation4], %s378
        %p380 = scmp.lt.s32.totalorder %s25, 1
        %s381 = scalar_select %p380, %s25, 1
        %s382 = smul.addr %s381, 32
        %s383 = smul.addr %s382, 8
        %s384 = scalar_lea.vmem %s0, %s383
        %v385 = vld [vmem:[%s384] sm:$0xff]
        %v386 = vld [vmem:[%s384 + $0x8] sm:$0xff]
        %v387 = vld [vmem:[%s384 + $0x10] sm:$0xff]
        %v388 = vld [vmem:[%s384 + $0x18] sm:$0xff]
        %v389 = vld [vmem:[%s384 + $0x20] sm:$0xff]
        %v390 = vld [vmem:[%s384 + $0x28] sm:$0xff]
        %v391 = vld [vmem:[%s384 + $0x30] sm:$0xff]
        %v392 = vld [vmem:[%s384 + $0x38] sm:$0xff]
        %v393 = vld [vmem:[%s384 + $0x40] sm:$0xff]
        %v394 = vld [vmem:[%s384 + $0x48] sm:$0xff]
        %v395 = vld [vmem:[%s384 + $0x50] sm:$0xff]
        %v396 = vld [vmem:[%s384 + $0x58] sm:$0xff]
        %v397 = vld [vmem:[%s384 + $0x60] sm:$0xff]
        %v398 = vld [vmem:[%s384 + $0x68] sm:$0xff]
        %v399 = vld [vmem:[%s384 + $0x70] sm:$0xff]
        %v400 = vld [vmem:[%s384 + $0x78] sm:$0xff]
        %v401 = vld [vmem:[%s384 + $0x80] sm:$0xff]
        %v402 = vld [vmem:[%s384 + $0x88] sm:$0xff]
        %v403 = vld [vmem:[%s384 + $0x90] sm:$0xff]
        %v404 = vld [vmem:[%s384 + $0x98] sm:$0xff]
        %v405 = vld [vmem:[%s384 + $0xa0] sm:$0xff]
        %v406 = vld [vmem:[%s384 + $0xa8] sm:$0xff]
        %v407 = vld [vmem:[%s384 + $0xb0] sm:$0xff]
        %v408 = vld [vmem:[%s384 + $0xb8] sm:$0xff]
        %v409 = vld [vmem:[%s384 + $0xc0] sm:$0xff]
        %v410 = vld [vmem:[%s384 + $0xc8] sm:$0xff]
        %v411 = vld [vmem:[%s384 + $0xd0] sm:$0xff]
        %v412 = vld [vmem:[%s384 + $0xd8] sm:$0xff]
        %v413 = vld [vmem:[%s384 + $0xe0] sm:$0xff]
        %v414 = vld [vmem:[%s384 + $0xe8] sm:$0xff]
        %v415 = vld [vmem:[%s384 + $0xf0] sm:$0xff]
        %v416 = vld [vmem:[%s384 + $0xf8] sm:$0xff]
        %v417 = vld [vmem:[%s5] sm:$0x1]
        %v418 = vld [vmem:[%s6] sm:$0x1]
        %vm419 = vcmask 523264
        %v420 = vsel %vm419, %v385, 0.0
        %v421 = vsel %vm419, %v386, 0.0
        %v422 = vadd.f32 %v420, %v421
        %v423 = vsel %vm419, %v387, 0.0
        %v424 = vadd.f32 %v422, %v423
        %v425 = vsel %vm419, %v388, 0.0
        %v426 = vadd.f32 %v424, %v425
        %v427 = vsel %vm419, %v389, 0.0
        %v428 = vadd.f32 %v426, %v427
        %v429 = vsel %vm419, %v390, 0.0
        %v430 = vadd.f32 %v428, %v429
        %v431 = vsel %vm419, %v391, 0.0
        %v432 = vadd.f32 %v430, %v431
        %v433 = vsel %vm419, %v392, 0.0
        %v434 = vadd.f32 %v432, %v433
        %v435 = vsel %vm419, %v393, 0.0
        %v436 = vadd.f32 %v434, %v435
        %v437 = vsel %vm419, %v394, 0.0
        %v438 = vadd.f32 %v436, %v437
        %v439 = vsel %vm419, %v395, 0.0
        %v440 = vadd.f32 %v438, %v439
        %v441 = vsel %vm419, %v396, 0.0
        %v442 = vadd.f32 %v440, %v441
        %v443 = vsel %vm419, %v397, 0.0
        %v444 = vadd.f32 %v442, %v443
        %v445 = vsel %vm419, %v398, 0.0
        %v446 = vadd.f32 %v444, %v445
        %v447 = vsel %vm419, %v399, 0.0
        %v448 = vadd.f32 %v446, %v447
        %v449 = vsel %vm419, %v400, 0.0
        %v450 = vadd.f32 %v448, %v449
        %v451 = vsel %vm419, %v401, 0.0
        %v452 = vadd.f32 %v450, %v451
        %v453 = vsel %vm419, %v402, 0.0
        %v454 = vadd.f32 %v452, %v453
        %v455 = vsel %vm419, %v403, 0.0
        %v456 = vadd.f32 %v454, %v455
        %v457 = vsel %vm419, %v404, 0.0
        %v458 = vadd.f32 %v456, %v457
        %v459 = vsel %vm419, %v405, 0.0
        %v460 = vadd.f32 %v458, %v459
        %v461 = vsel %vm419, %v406, 0.0
        %v462 = vadd.f32 %v460, %v461
        %v463 = vsel %vm419, %v407, 0.0
        %v464 = vadd.f32 %v462, %v463
        %v465 = vsel %vm419, %v408, 0.0
        %v466 = vadd.f32 %v464, %v465
        %v467 = vsel %vm419, %v409, 0.0
        %v468 = vadd.f32 %v466, %v467
        %v469 = vsel %vm419, %v410, 0.0
        %v470 = vadd.f32 %v468, %v469
        %v471 = vsel %vm419, %v411, 0.0
        %v472 = vadd.f32 %v470, %v471
        %v473 = vsel %vm419, %v412, 0.0
        %v474 = vadd.f32 %v472, %v473
        %v475 = vsel %vm419, %v413, 0.0
        %v476 = vadd.f32 %v474, %v475
        %v477 = vsel %vm419, %v414, 0.0
        %v478 = vadd.f32 %v476, %v477
        %v479 = vsel %vm419, %v415, 0.0
        %v480 = vadd.f32 %v478, %v479
        %v481 = vsel %vm419, %v416, 0.0
        %v482 = vadd.f32 %v480, %v481
        %v483 = vrot.slane %v482, 4
        %v484 = vadd.f32 %v482, %v483
        %v485 = vrot.slane %v484, 2
        %v486 = vadd.f32 %v484, %v485
        %v487 = vrot.slane %v486, 1
        %v488 = vadd.f32 %v486, %v487
        %v489 = vlaneseq
        %v490 = vand.u32 %v489, 127
        %492 = vrot.lane.b32.xlu0 %v488, 127
        %v493 = vpop.permute.xlu0 %492
        %495 = vrot.lane.b32.xlu0 %v488, 63
        %v496 = vpop.permute.xlu0 %495
        %vm498 = vcmask 515072
        %v499 = vsel %vm498, %v493, %v496
        %500 = vrot.lane.b32.xlu0 %v488, 65
        %v501 = vpop.permute.xlu0 %500
        %503 = vrot.lane.b32.xlu0 %v488, 1
        %v504 = vpop.permute.xlu0 %503
        %vm506 = vcmask 7168
        %v507 = vsel %vm506, %v501, %v504
        %v508 = vand.u32 %v490, 1
        %vm509 = vcmp.eq.s32.totalorder %v508, 0
        %v510 = vsel %vm509, %v499, %v507
        %v511 = vadd.f32 %v488, %v510
        %v512 = vrcp.pop 512.0
        %v513 = vmul.f32 %v511, %v512
        %v514 = vlaneseq
        %v515 = vshrl.u32 %v514, 7
        %v516 = vsub.s32 0, %v515
        %v517 = vrot.slane %v513, %v516
        %v518 = vsub.f32 %v385, %v517
        %v519 = vsub.f32 %v386, %v517
        %v520 = vsub.f32 %v387, %v517
        %v521 = vsub.f32 %v388, %v517
        %v522 = vsub.f32 %v389, %v517
        %v523 = vsub.f32 %v390, %v517
        %v524 = vsub.f32 %v391, %v517
        %v525 = vsub.f32 %v392, %v517
        %v526 = vsub.f32 %v393, %v517
        %v527 = vsub.f32 %v394, %v517
        %v528 = vsub.f32 %v395, %v517
        %v529 = vsub.f32 %v396, %v517
        %v530 = vsub.f32 %v397, %v517
        %v531 = vsub.f32 %v398, %v517
        %v532 = vsub.f32 %v399, %v517
        %v533 = vsub.f32 %v400, %v517
        %v534 = vsub.f32 %v401, %v517
        %v535 = vsub.f32 %v402, %v517
        %v536 = vsub.f32 %v403, %v517
        %v537 = vsub.f32 %v404, %v517
        %v538 = vsub.f32 %v405, %v517
        %v539 = vsub.f32 %v406, %v517
        %v540 = vsub.f32 %v407, %v517
        %v541 = vsub.f32 %v408, %v517
        %v542 = vsub.f32 %v409, %v517
        %v543 = vsub.f32 %v410, %v517
        %v544 = vsub.f32 %v411, %v517
        %v545 = vsub.f32 %v412, %v517
        %v546 = vsub.f32 %v413, %v517
        %v547 = vsub.f32 %v414, %v517
        %v548 = vsub.f32 %v415, %v517
        %v549 = vsub.f32 %v416, %v517
        %v550 = vmul.f32 %v518, %v518
        %v551 = vmul.f32 %v519, %v519
        %v552 = vmul.f32 %v520, %v520
        %v553 = vmul.f32 %v521, %v521
        %v554 = vmul.f32 %v522, %v522
        %v555 = vmul.f32 %v523, %v523
        %v556 = vmul.f32 %v524, %v524
        %v557 = vmul.f32 %v525, %v525
        %v558 = vmul.f32 %v526, %v526
        %v559 = vmul.f32 %v527, %v527
        %v560 = vmul.f32 %v528, %v528
        %v561 = vmul.f32 %v529, %v529
        %v562 = vmul.f32 %v530, %v530
        %v563 = vmul.f32 %v531, %v531
        %v564 = vmul.f32 %v532, %v532
        %v565 = vmul.f32 %v533, %v533
        %v566 = vmul.f32 %v534, %v534
        %v567 = vmul.f32 %v535, %v535
        %v568 = vmul.f32 %v536, %v536
        %v569 = vmul.f32 %v537, %v537
        %v570 = vmul.f32 %v538, %v538
        %v571 = vmul.f32 %v539, %v539
        %v572 = vmul.f32 %v540, %v540
        %v573 = vmul.f32 %v541, %v541
        %v574 = vmul.f32 %v542, %v542
        %v575 = vmul.f32 %v543, %v543
        %v576 = vmul.f32 %v544, %v544
        %v577 = vmul.f32 %v545, %v545
        %v578 = vmul.f32 %v546, %v546
        %v579 = vmul.f32 %v547, %v547
        %v580 = vmul.f32 %v548, %v548
        %v581 = vmul.f32 %v549, %v549
        %v582 = vsel %vm419, %v550, 0.0
        %v583 = vsel %vm419, %v551, 0.0
        %v584 = vadd.f32 %v582, %v583
        %v585 = vsel %vm419, %v552, 0.0
        %v586 = vadd.f32 %v584, %v585
        %v587 = vsel %vm419, %v553, 0.0
        %v588 = vadd.f32 %v586, %v587
        %v589 = vsel %vm419, %v554, 0.0
        %v590 = vadd.f32 %v588, %v589
        %v591 = vsel %vm419, %v555, 0.0
        %v592 = vadd.f32 %v590, %v591
        %v593 = vsel %vm419, %v556, 0.0
        %v594 = vadd.f32 %v592, %v593
        %v595 = vsel %vm419, %v557, 0.0
        %v596 = vadd.f32 %v594, %v595
        %v597 = vsel %vm419, %v558, 0.0
        %v598 = vadd.f32 %v596, %v597
        %v599 = vsel %vm419, %v559, 0.0
        %v600 = vadd.f32 %v598, %v599
        %v601 = vsel %vm419, %v560, 0.0
        %v602 = vadd.f32 %v600, %v601
        %v603 = vsel %vm419, %v561, 0.0
        %v604 = vadd.f32 %v602, %v603
        %v605 = vsel %vm419, %v562, 0.0
        %v606 = vadd.f32 %v604, %v605
        %v607 = vsel %vm419, %v563, 0.0
        %v608 = vadd.f32 %v606, %v607
        %v609 = vsel %vm419, %v564, 0.0
        %v610 = vadd.f32 %v608, %v609
        %v611 = vsel %vm419, %v565, 0.0
        %v612 = vadd.f32 %v610, %v611
        %v613 = vsel %vm419, %v566, 0.0
        %v614 = vadd.f32 %v612, %v613
        %v615 = vsel %vm419, %v567, 0.0
        %v616 = vadd.f32 %v614, %v615
        %v617 = vsel %vm419, %v568, 0.0
        %v618 = vadd.f32 %v616, %v617
        %v619 = vsel %vm419, %v569, 0.0
        %v620 = vadd.f32 %v618, %v619
        %v621 = vsel %vm419, %v570, 0.0
        %v622 = vadd.f32 %v620, %v621
        %v623 = vsel %vm419, %v571, 0.0
        %v624 = vadd.f32 %v622, %v623
        %v625 = vsel %vm419, %v572, 0.0
        %v626 = vadd.f32 %v624, %v625
        %v627 = vsel %vm419, %v573, 0.0
        %v628 = vadd.f32 %v626, %v627
        %v629 = vsel %vm419, %v574, 0.0
        %v630 = vadd.f32 %v628, %v629
        %v631 = vsel %vm419, %v575, 0.0
        %v632 = vadd.f32 %v630, %v631
        %v633 = vsel %vm419, %v576, 0.0
        %v634 = vadd.f32 %v632, %v633
        %v635 = vsel %vm419, %v577, 0.0
        %v636 = vadd.f32 %v634, %v635
        %v637 = vsel %vm419, %v578, 0.0
        %v638 = vadd.f32 %v636, %v637
        %v639 = vsel %vm419, %v579, 0.0
        %v640 = vadd.f32 %v638, %v639
        %v641 = vsel %vm419, %v580, 0.0
        %v642 = vadd.f32 %v640, %v641
        %v643 = vsel %vm419, %v581, 0.0
        %v644 = vadd.f32 %v642, %v643
        %v645 = vrot.slane %v644, 4
        %v646 = vadd.f32 %v644, %v645
        %v647 = vrot.slane %v646, 2
        %v648 = vadd.f32 %v646, %v647
        %v649 = vrot.slane %v648, 1
        %v650 = vadd.f32 %v648, %v649
        %652 = vrot.lane.b32.xlu0 %v650, 127
        %v653 = vpop.permute.xlu0 %652
        %655 = vrot.lane.b32.xlu0 %v650, 63
        %v656 = vpop.permute.xlu0 %655
        %v658 = vsel %vm498, %v653, %v656
        %659 = vrot.lane.b32.xlu0 %v650, 65
        %v660 = vpop.permute.xlu0 %659
        %662 = vrot.lane.b32.xlu0 %v650, 1
        %v663 = vpop.permute.xlu0 %662
        %v665 = vsel %vm506, %v660, %v663
        %v666 = vsel %vm509, %v658, %v665
        %v667 = vadd.f32 %v650, %v666
        %v668 = vmul.f32 %v667, %v512
        %v669 = vadd.f32 %v668, 1e-05
        %v670 = vrsqrt.pop %v669
        %v671 = vlaneseq
        %v672 = vshrl.u32 %v671, 7
        %v673 = vsub.s32 0, %v672
        %v674 = vrot.slane %v670, %v673
        %v675 = vmul.f32 %v518, %v674
        %v676 = vmul.f32 %v519, %v674
        %v677 = vmul.f32 %v520, %v674
        %v678 = vmul.f32 %v521, %v674
        %v679 = vmul.f32 %v522, %v674
        %v680 = vmul.f32 %v523, %v674
        %v681 = vmul.f32 %v524, %v674
        %v682 = vmul.f32 %v525, %v674
        %v683 = vmul.f32 %v526, %v674
        %v684 = vmul.f32 %v527, %v674
        %v685 = vmul.f32 %v528, %v674
        %v686 = vmul.f32 %v529, %v674
        %v687 = vmul.f32 %v530, %v674
        %v688 = vmul.f32 %v531, %v674
        %v689 = vmul.f32 %v532, %v674
        %v690 = vmul.f32 %v533, %v674
        %v691 = vmul.f32 %v534, %v674
        %v692 = vmul.f32 %v535, %v674
        %v693 = vmul.f32 %v536, %v674
        %v694 = vmul.f32 %v537, %v674
        %v695 = vmul.f32 %v538, %v674
        %v696 = vmul.f32 %v539, %v674
        %v697 = vmul.f32 %v540, %v674
        %v698 = vmul.f32 %v541, %v674
        %v699 = vmul.f32 %v542, %v674
        %v700 = vmul.f32 %v543, %v674
        %v701 = vmul.f32 %v544, %v674
        %v702 = vmul.f32 %v545, %v674
        %v703 = vmul.f32 %v546, %v674
        %v704 = vmul.f32 %v547, %v674
        %v705 = vmul.f32 %v548, %v674
        %v706 = vmul.f32 %v549, %v674
        %v708 = vlaneseq
        %v709 = vshrl.u32 %v708, 7
        %v710 = vsub.s32 0, %v709
        %v711 = vrot.slane %v417, %v710
        %v713 = vmul.f32 %v675, %v711
        %v714 = vmul.f32 %v676, %v711
        %v715 = vmul.f32 %v677, %v711
        %v716 = vmul.f32 %v678, %v711
        %v717 = vmul.f32 %v679, %v711
        %v718 = vmul.f32 %v680, %v711
        %v719 = vmul.f32 %v681, %v711
        %v720 = vmul.f32 %v682, %v711
        %v721 = vmul.f32 %v683, %v711
        %v722 = vmul.f32 %v684, %v711
        %v723 = vmul.f32 %v685, %v711
        %v724 = vmul.f32 %v686, %v711
        %v725 = vmul.f32 %v687, %v711
        %v726 = vmul.f32 %v688, %v711
        %v727 = vmul.f32 %v689, %v711
        %v728 = vmul.f32 %v690, %v711
        %v729 = vmul.f32 %v691, %v711
        %v730 = vmul.f32 %v692, %v711
        %v731 = vmul.f32 %v693, %v711
        %v732 = vmul.f32 %v694, %v711
        %v733 = vmul.f32 %v695, %v711
        %v734 = vmul.f32 %v696, %v711
        %v735 = vmul.f32 %v697, %v711
        %v736 = vmul.f32 %v698, %v711
        %v737 = vmul.f32 %v699, %v711
        %v738 = vmul.f32 %v700, %v711
        %v739 = vmul.f32 %v701, %v711
        %v740 = vmul.f32 %v702, %v711
        %v741 = vmul.f32 %v703, %v711
        %v742 = vmul.f32 %v704, %v711
        %v743 = vmul.f32 %v705, %v711
        %v744 = vmul.f32 %v706, %v711
        %v746 = vlaneseq
        %v747 = vshrl.u32 %v746, 7
        %v748 = vsub.s32 0, %v747
        %v749 = vrot.slane %v418, %v748
        %v751 = vadd.f32 %v713, %v749
        %v752 = vadd.f32 %v714, %v749
        %v753 = vadd.f32 %v715, %v749
        %v754 = vadd.f32 %v716, %v749
        %v755 = vadd.f32 %v717, %v749
        %v756 = vadd.f32 %v718, %v749
        %v757 = vadd.f32 %v719, %v749
        %v758 = vadd.f32 %v720, %v749
        %v759 = vadd.f32 %v721, %v749
        %v760 = vadd.f32 %v722, %v749
        %v761 = vadd.f32 %v723, %v749
        %v762 = vadd.f32 %v724, %v749
        %v763 = vadd.f32 %v725, %v749
        %v764 = vadd.f32 %v726, %v749
        %v765 = vadd.f32 %v727, %v749
        %v766 = vadd.f32 %v728, %v749
        %v767 = vadd.f32 %v729, %v749
        %v768 = vadd.f32 %v730, %v749
        %v769 = vadd.f32 %v731, %v749
        %v770 = vadd.f32 %v732, %v749
        %v771 = vadd.f32 %v733, %v749
        %v772 = vadd.f32 %v734, %v749
        %v773 = vadd.f32 %v735, %v749
        %v774 = vadd.f32 %v736, %v749
        %v775 = vadd.f32 %v737, %v749
        %v776 = vadd.f32 %v738, %v749
        %v777 = vadd.f32 %v739, %v749
        %v778 = vadd.f32 %v740, %v749
        %v779 = vadd.f32 %v741, %v749
        %v780 = vadd.f32 %v742, %v749
        %v781 = vadd.f32 %v743, %v749
        %v782 = vadd.f32 %v744, %v749
        %v783 = vmax.f32 %v751, 0.0
        %v784 = vmax.f32 %v752, 0.0
        %v785 = vmax.f32 %v753, 0.0
        %v786 = vmax.f32 %v754, 0.0
        %v787 = vmax.f32 %v755, 0.0
        %v788 = vmax.f32 %v756, 0.0
        %v789 = vmax.f32 %v757, 0.0
        %v790 = vmax.f32 %v758, 0.0
        %v791 = vmax.f32 %v759, 0.0
        %v792 = vmax.f32 %v760, 0.0
        %v793 = vmax.f32 %v761, 0.0
        %v794 = vmax.f32 %v762, 0.0
        %v795 = vmax.f32 %v763, 0.0
        %v796 = vmax.f32 %v764, 0.0
        %v797 = vmax.f32 %v765, 0.0
        %v798 = vmax.f32 %v766, 0.0
        %v799 = vmax.f32 %v767, 0.0
        %v800 = vmax.f32 %v768, 0.0
        %v801 = vmax.f32 %v769, 0.0
        %v802 = vmax.f32 %v770, 0.0
        %v803 = vmax.f32 %v771, 0.0
        %v804 = vmax.f32 %v772, 0.0
        %v805 = vmax.f32 %v773, 0.0
        %v806 = vmax.f32 %v774, 0.0
        %v807 = vmax.f32 %v775, 0.0
        %v808 = vmax.f32 %v776, 0.0
        %v809 = vmax.f32 %v777, 0.0
        %v810 = vmax.f32 %v778, 0.0
        %v811 = vmax.f32 %v779, 0.0
        %v812 = vmax.f32 %v780, 0.0
        %v813 = vmax.f32 %v781, 0.0
        %v814 = vmax.f32 %v782, 0.0
        %815 = vst.msk [vmem:[#allocation3] sm:$0xff] %vm419, %v783
        %816 = vst.msk [vmem:[#allocation3 + $0x8] sm:$0xff] %vm419, %v784
        %817 = vst.msk [vmem:[#allocation3 + $0x10] sm:$0xff] %vm419, %v785
        %818 = vst.msk [vmem:[#allocation3 + $0x18] sm:$0xff] %vm419, %v786
        %819 = vst.msk [vmem:[#allocation3 + $0x20] sm:$0xff] %vm419, %v787
        %820 = vst.msk [vmem:[#allocation3 + $0x28] sm:$0xff] %vm419, %v788
        %821 = vst.msk [vmem:[#allocation3 + $0x30] sm:$0xff] %vm419, %v789
        %822 = vst.msk [vmem:[#allocation3 + $0x38] sm:$0xff] %vm419, %v790
        %823 = vst.msk [vmem:[#allocation3 + $0x40] sm:$0xff] %vm419, %v791
        %824 = vst.msk [vmem:[#allocation3 + $0x48] sm:$0xff] %vm419, %v792
        %825 = vst.msk [vmem:[#allocation3 + $0x50] sm:$0xff] %vm419, %v793
        %826 = vst.msk [vmem:[#allocation3 + $0x58] sm:$0xff] %vm419, %v794
        %827 = vst.msk [vmem:[#allocation3 + $0x60] sm:$0xff] %vm419, %v795
        %828 = vst.msk [vmem:[#allocation3 + $0x68] sm:$0xff] %vm419, %v796
        %829 = vst.msk [vmem:[#allocation3 + $0x70] sm:$0xff] %vm419, %v797
        %830 = vst.msk [vmem:[#allocation3 + $0x78] sm:$0xff] %vm419, %v798
        %831 = vst.msk [vmem:[#allocation3 + $0x80] sm:$0xff] %vm419, %v799
        %832 = vst.msk [vmem:[#allocation3 + $0x88] sm:$0xff] %vm419, %v800
        %833 = vst.msk [vmem:[#allocation3 + $0x90] sm:$0xff] %vm419, %v801
        %834 = vst.msk [vmem:[#allocation3 + $0x98] sm:$0xff] %vm419, %v802
        %835 = vst.msk [vmem:[#allocation3 + $0xa0] sm:$0xff] %vm419, %v803
        %836 = vst.msk [vmem:[#allocation3 + $0xa8] sm:$0xff] %vm419, %v804
        %837 = vst.msk [vmem:[#allocation3 + $0xb0] sm:$0xff] %vm419, %v805
        %838 = vst.msk [vmem:[#allocation3 + $0xb8] sm:$0xff] %vm419, %v806
        %839 = vst.msk [vmem:[#allocation3 + $0xc0] sm:$0xff] %vm419, %v807
        %840 = vst.msk [vmem:[#allocation3 + $0xc8] sm:$0xff] %vm419, %v808
        %841 = vst.msk [vmem:[#allocation3 + $0xd0] sm:$0xff] %vm419, %v809
        %842 = vst.msk [vmem:[#allocation3 + $0xd8] sm:$0xff] %vm419, %v810
        %843 = vst.msk [vmem:[#allocation3 + $0xe0] sm:$0xff] %vm419, %v811
        %844 = vst.msk [vmem:[#allocation3 + $0xe8] sm:$0xff] %vm419, %v812
        %845 = vst.msk [vmem:[#allocation3 + $0xf0] sm:$0xff] %vm419, %v813
        %846 = vst.msk [vmem:[#allocation3 + $0xf8] sm:$0xff] %vm419, %v814
        %v847 = vld [vmem:[#allocation3] ss:$2 sm:$0xff]
        %s848 = scalar_lea.vmem [#allocation3], 32
        %v849 = vld [vmem:[%s848] ss:$2 sm:$0xff]
        %s850 = scalar_lea.vmem [#allocation3], 64
        %v851 = vld [vmem:[%s850] ss:$2 sm:$0xff]
        %s852 = scalar_lea.vmem [#allocation3], 96
        %v853 = vld [vmem:[%s852] ss:$2 sm:$0xff]
        %s854 = scalar_lea.vmem [#allocation3], 128
        %v855 = vld [vmem:[%s854] ss:$2 sm:$0xff]
        %s856 = scalar_lea.vmem [#allocation3], 160
        %v857 = vld [vmem:[%s856] ss:$2 sm:$0xff]
        %s858 = scalar_lea.vmem [#allocation3], 192
        %v859 = vld [vmem:[%s858] ss:$2 sm:$0xff]
        %s860 = scalar_lea.vmem [#allocation3], 224
        %v861 = vld [vmem:[%s860] ss:$2 sm:$0xff]
        %v862 = vld [vmem:[%s4] sm:$0xff]
        %v863 = vld [vmem:[%s4 + $0x8] sm:$0xff]
        %v864 = vld [vmem:[%s4 + $0x10] sm:$0xff]
        %v865 = vld [vmem:[%s4 + $0x18] sm:$0xff]
        %v866 = vld [vmem:[%s4 + $0x20] sm:$0xff]
        %v867 = vld [vmem:[%s4 + $0x28] sm:$0xff]
        %v868 = vld [vmem:[%s4 + $0x30] sm:$0xff]
        %v869 = vld [vmem:[%s4 + $0x38] sm:$0xff]
        %v871 = vsel %vm419, %v847, 0
        %v874 = vsel %vm419, %v849, 0
        %v877 = vsel %vm419, %v851, 0
        %v880 = vsel %vm419, %v853, 0
        %v883 = vsel %vm419, %v855, 0
        %v886 = vsel %vm419, %v857, 0
        %v889 = vsel %vm419, %v859, 0
        %v892 = vsel %vm419, %v861, 0
        %894 = vmatprep.subr.mxu0 0.0
        %895 = vmatpush1.msra.mxu0 %v862
        %896 = vmatprep.subr.mxu0 0.0
        %897 = vmatpush1.msra.mxu0 %v863
        %898 = vmatprep.subr.mxu0 0.0
        %899 = vmatpush1.msra.mxu0 %v864
        %900 = vmatprep.subr.mxu0 0.0
        %901 = vmatpush1.msra.mxu0 %v865
        %902 = vmatprep.subr.mxu0 0.0
        %903 = vmatpush1.msra.mxu0 %v866
        %904 = vmatprep.subr.mxu0 0.0
        %905 = vmatpush1.msra.mxu0 %v867
        %906 = vmatprep.subr.mxu0 0.0
        %907 = vmatpush1.msra.mxu0 %v868
        %908 = vmatprep.subr.mxu0 0.0
        %909 = vmatpush1.msra.mxu0 %v869
        %910 = vmatprep.subr.mxu0 0.0
        %911 = vmatpush1.msra.mxu0 0.0
        %912 = vmatprep.subr.mxu0 0.0
        %913 = vmatpush1.msra.mxu0 0.0
        %914 = vmatprep.subr.mxu0 0.0
        %915 = vmatpush1.msra.mxu0 0.0
        %916 = vmatprep.subr.mxu0 0.0
        %917 = vmatpush1.msra.mxu0 0.0
        %918 = vmatprep.subr.mxu0 0.0
        %919 = vmatpush1.msra.mxu0 0.0
        %920 = vmatprep.subr.mxu0 0.0
        %921 = vmatpush1.msra.mxu0 0.0
        %922 = vmatprep.subr.mxu0 0.0
        %923 = vmatpush1.msra.mxu0 0.0
        %924 = vmatprep.subr.mxu0 0.0
        %925 = vmatpush1.msra.mxu0 0.0
        %926 = vmatprep.subr.mxu0 0.0
        %927 = vmatpush1.msra.mxu0 0.0
        %928 = vmatprep.subr.mxu0 0.0
        %929 = vmatpush1.msra.mxu0 0.0
        %930 = vmatprep.subr.mxu0 0.0
        %931 = vmatpush1.msra.mxu0 0.0
        %932 = vmatprep.subr.mxu0 0.0
        %933 = vmatpush1.msra.mxu0 0.0
        %934 = vmatprep.subr.mxu0 0.0
        %935 = vmatpush1.msra.mxu0 0.0
        %936 = vmatprep.subr.mxu0 0.0
        %937 = vmatpush1.msra.mxu0 0.0
        %938 = vmatprep.subr.mxu0 0.0
        %939 = vmatpush1.msra.mxu0 0.0
        %940 = vmatprep.subr.mxu0 0.0
        %941 = vmatpush1.msra.mxu0 0.0
        %942 = vmatprep.subr.mxu0 0.0
        %943 = vmatpush1.msra.mxu0 0.0
        %944 = vmatprep.subr.mxu0 0.0
        %945 = vmatpush1.msra.mxu0 0.0
        %946 = vmatprep.subr.mxu0 0.0
        %947 = vmatpush1.msra.mxu0 0.0
        %948 = vmatprep.subr.mxu0 0.0
        %949 = vmatpush1.msra.mxu0 0.0
        %950 = vmatprep.subr.mxu0 0.0
        %951 = vmatpush1.msra.mxu0 0.0
        %952 = vmatprep.subr.mxu0 0.0
        %953 = vmatpush1.msra.mxu0 0.0
        %954 = vmatprep.subr.mxu0 0.0
        %955 = vmatpush1.msra.mxu0 0.0
        %956 = vmatprep.subr.mxu0 0.0
        %957 = vmatpush1.msra.mxu0 0.0
        %958 = vmatprep.mubr.f32.mxu0 0.0
        %959 = vmatmul.mubr.f32.gmra.mrb[0].mxu0 %v871
        %v960 = vpop.f32.mrb[0].mxu0
        %v961 = vadd.f32 0.0, %v960
        %v962 = vpop.f32.mrb[0].mxu0
        %963 = vmatprep.mubr.f32.mxu0 0.0
        %964 = vmatmul.mubr.f32.gmra.mrb[0].mxu0 %v874
        %v965 = vpop.f32.mrb[0].mxu0
        %v966 = vadd.f32 0.0, %v965
        %v967 = vpop.f32.mrb[0].mxu0
        %968 = vmatprep.mubr.f32.mxu0 0.0
        %969 = vmatmul.mubr.f32.gmra.mrb[0].mxu0 %v877
        %v970 = vpop.f32.mrb[0].mxu0
        %v971 = vadd.f32 0.0, %v970
        %v972 = vpop.f32.mrb[0].mxu0
        %973 = vmatprep.mubr.f32.mxu0 0.0
        %974 = vmatmul.mubr.f32.gmra.mrb[0].mxu0 %v880
        %v975 = vpop.f32.mrb[0].mxu0
        %v976 = vadd.f32 0.0, %v975
        %v977 = vpop.f32.mrb[0].mxu0
        %978 = vmatprep.mubr.f32.mxu0 0.0
        %979 = vmatmul.mubr.f32.gmra.mrb[0].mxu0 %v883
        %v980 = vpop.f32.mrb[0].mxu0
        %v981 = vadd.f32 0.0, %v980
        %v982 = vpop.f32.mrb[0].mxu0
        %983 = vmatprep.mubr.f32.mxu0 0.0
        %984 = vmatmul.mubr.f32.gmra.mrb[0].mxu0 %v886
        %v985 = vpop.f32.mrb[0].mxu0
        %v986 = vadd.f32 0.0, %v985
        %v987 = vpop.f32.mrb[0].mxu0
        %988 = vmatprep.mubr.f32.mxu0 0.0
        %989 = vmatmul.mubr.f32.gmra.mrb[0].mxu0 %v889
        %v990 = vpop.f32.mrb[0].mxu0
        %v991 = vadd.f32 0.0, %v990
        %v992 = vpop.f32.mrb[0].mxu0
        %993 = vmatprep.mubr.f32.mxu0 0.0
        %994 = vmatmul.mubr.f32.gmra.mrb[0].mxu0 %v892
        %v995 = vpop.f32.mrb[0].mxu0
        %v996 = vadd.f32 0.0, %v995
        %v997 = vpop.f32.mrb[0].mxu0
        %998 = vdwg.mxu0
        %v999 = vld [vmem:[%s1] sm:$0xff]
        %v1000 = vld [vmem:[%s1 + $0x8] sm:$0xff]
        %v1001 = vld [vmem:[%s1 + $0x10] sm:$0xff]
        %v1002 = vld [vmem:[%s1 + $0x18] sm:$0xff]
        %v1003 = vld [vmem:[%s1 + $0x20] sm:$0xff]
        %v1004 = vld [vmem:[%s1 + $0x28] sm:$0xff]
        %v1005 = vld [vmem:[%s1 + $0x30] sm:$0xff]
        %v1006 = vld [vmem:[%s1 + $0x38] sm:$0xff]
        %v1008 = vsel %vm419, %v783, 0
        %v1011 = vsel %vm419, %v784, 0
        %v1014 = vsel %vm419, %v785, 0
        %v1017 = vsel %vm419, %v786, 0
        %v1020 = vsel %vm419, %v787, 0
        %v1023 = vsel %vm419, %v788, 0
        %v1026 = vsel %vm419, %v789, 0
        %v1029 = vsel %vm419, %v790, 0
        %v1032 = vsel %vm419, %v791, 0
        %v1035 = vsel %vm419, %v792, 0
        %v1038 = vsel %vm419, %v793, 0
        %v1041 = vsel %vm419, %v794, 0
        %v1044 = vsel %vm419, %v795, 0
        %v1047 = vsel %vm419, %v796, 0
        %v1050 = vsel %vm419, %v797, 0
        %v1053 = vsel %vm419, %v798, 0
        %v1056 = vsel %vm419, %v799, 0
        %v1059 = vsel %vm419, %v800, 0
        %v1062 = vsel %vm419, %v801, 0
        %v1065 = vsel %vm419, %v802, 0
        %v1068 = vsel %vm419, %v803, 0
        %v1071 = vsel %vm419, %v804, 0
        %v1074 = vsel %vm419, %v805, 0
        %v1077 = vsel %vm419, %v806, 0
        %v1080 = vsel %vm419, %v807, 0
        %v1083 = vsel %vm419, %v808, 0
        %v1086 = vsel %vm419, %v809, 0
        %v1089 = vsel %vm419, %v810, 0
        %v1092 = vsel %vm419, %v811, 0
        %v1095 = vsel %vm419, %v812, 0
        %v1098 = vsel %vm419, %v813, 0
        %v1101 = vsel %vm419, %v814, 0
        %1103 = vmatprep.subr.mxu0 0.0
        %1104 = vmatpush1.msra.mxu0 %v999
        %1105 = vmatprep.subr.mxu0 0.0
        %1106 = vmatpush1.msra.mxu0 %v1000
        %1107 = vmatprep.subr.mxu0 0.0
        %1108 = vmatpush1.msra.mxu0 %v1001
        %1109 = vmatprep.subr.mxu0 0.0
        %1110 = vmatpush1.msra.mxu0 %v1002
        %1111 = vmatprep.subr.mxu0 0.0
        %1112 = vmatpush1.msra.mxu0 %v1003
        %1113 = vmatprep.subr.mxu0 0.0
        %1114 = vmatpush1.msra.mxu0 %v1004
        %1115 = vmatprep.subr.mxu0 0.0
        %1116 = vmatpush1.msra.mxu0 %v1005
        %1117 = vmatprep.subr.mxu0 0.0
        %1118 = vmatpush1.msra.mxu0 %v1006
        %1119 = vmatprep.subr.mxu0 0.0
        %1120 = vmatpush1.msra.mxu0 0.0
        %1121 = vmatprep.subr.mxu0 0.0
        %1122 = vmatpush1.msra.mxu0 0.0
        %1123 = vmatprep.subr.mxu0 0.0
        %1124 = vmatpush1.msra.mxu0 0.0
        %1125 = vmatprep.subr.mxu0 0.0
        %1126 = vmatpush1.msra.mxu0 0.0
        %1127 = vmatprep.subr.mxu0 0.0
        %1128 = vmatpush1.msra.mxu0 0.0
        %1129 = vmatprep.subr.mxu0 0.0
        %1130 = vmatpush1.msra.mxu0 0.0
        %1131 = vmatprep.subr.mxu0 0.0
        %1132 = vmatpush1.msra.mxu0 0.0
        %1133 = vmatprep.subr.mxu0 0.0
        %1134 = vmatpush1.msra.mxu0 0.0
        %1135 = vmatprep.subr.mxu0 0.0
        %1136 = vmatpush1.msra.mxu0 0.0
        %1137 = vmatprep.subr.mxu0 0.0
        %1138 = vmatpush1.msra.mxu0 0.0
        %1139 = vmatprep.subr.mxu0 0.0
        %1140 = vmatpush1.msra.mxu0 0.0
        %1141 = vmatprep.subr.mxu0 0.0
        %1142 = vmatpush1.msra.mxu0 0.0
        %1143 = vmatprep.subr.mxu0 0.0
        %1144 = vmatpush1.msra.mxu0 0.0
        %1145 = vmatprep.subr.mxu0 0.0
        %1146 = vmatpush1.msra.mxu0 0.0
        %1147 = vmatprep.subr.mxu0 0.0
        %1148 = vmatpush1.msra.mxu0 0.0
        %1149 = vmatprep.subr.mxu0 0.0
        %1150 = vmatpush1.msra.mxu0 0.0
        %1151 = vmatprep.subr.mxu0 0.0
        %1152 = vmatpush1.msra.mxu0 0.0
        %1153 = vmatprep.subr.mxu0 0.0
        %1154 = vmatpush1.msra.mxu0 0.0
        %1155 = vmatprep.subr.mxu0 0.0
        %1156 = vmatpush1.msra.mxu0 0.0
        %1157 = vmatprep.subr.mxu0 0.0
        %1158 = vmatpush1.msra.mxu0 0.0
        %1159 = vmatprep.subr.mxu0 0.0
        %1160 = vmatpush1.msra.mxu0 0.0
        %1161 = vmatprep.subr.mxu0 0.0
        %1162 = vmatpush1.msra.mxu0 0.0
        %1163 = vmatprep.subr.mxu0 0.0
        %1164 = vmatpush1.msra.mxu0 0.0
        %1165 = vmatprep.subr.mxu0 0.0
        %1166 = vmatpush1.msra.mxu0 0.0
        %1167 = vmatprep.mubr.f32.mxu0 0.0
        %1168 = vmatmul.mubr.f32.gmra.mrb[0].mxu0 %v1008
        %v1169 = vpop.f32.mrb[0].mxu0
        %v1170 = vadd.f32 0.0, %v1169
        %v1171 = vpop.f32.mrb[0].mxu0
        %1172 = vmatprep.mubr.f32.mxu0 0.0
        %1173 = vmatmul.mubr.f32.gmra.mrb[0].mxu0 %v1011
        %v1174 = vpop.f32.mrb[0].mxu0
        %v1175 = vadd.f32 0.0, %v1174
        %v1176 = vpop.f32.mrb[0].mxu0
        %1177 = vmatprep.mubr.f32.mxu0 0.0
        %1178 = vmatmul.mubr.f32.gmra.mrb[0].mxu0 %v1014
        %v1179 = vpop.f32.mrb[0].mxu0
        %v1180 = vadd.f32 0.0, %v1179
        %v1181 = vpop.f32.mrb[0].mxu0
        %1182 = vmatprep.mubr.f32.mxu0 0.0
        %1183 = vmatmul.mubr.f32.gmra.mrb[0].mxu0 %v1017
        %v1184 = vpop.f32.mrb[0].mxu0
        %v1185 = vadd.f32 0.0, %v1184
        %v1186 = vpop.f32.mrb[0].mxu0
        %1187 = vmatprep.mubr.f32.mxu0 0.0
        %1188 = vmatmul.mubr.f32.gmra.mrb[0].mxu0 %v1020
        %v1189 = vpop.f32.mrb[0].mxu0
        %v1190 = vadd.f32 0.0, %v1189
        %v1191 = vpop.f32.mrb[0].mxu0
        %1192 = vmatprep.mubr.f32.mxu0 0.0
        %1193 = vmatmul.mubr.f32.gmra.mrb[0].mxu0 %v1023
        %v1194 = vpop.f32.mrb[0].mxu0
        %v1195 = vadd.f32 0.0, %v1194
        %v1196 = vpop.f32.mrb[0].mxu0
        %1197 = vmatprep.mubr.f32.mxu0 0.0
        %1198 = vmatmul.mubr.f32.gmra.mrb[0].mxu0 %v1026
        %v1199 = vpop.f32.mrb[0].mxu0
        %v1200 = vadd.f32 0.0, %v1199
        %v1201 = vpop.f32.mrb[0].mxu0
        %1202 = vmatprep.mubr.f32.mxu0 0.0
        %1203 = vmatmul.mubr.f32.gmra.mrb[0].mxu0 %v1029
        %v1204 = vpop.f32.mrb[0].mxu0
        %v1205 = vadd.f32 0.0, %v1204
        %v1206 = vpop.f32.mrb[0].mxu0
        %1207 = vmatprep.mubr.f32.mxu0 0.0
        %1208 = vmatmul.mubr.f32.gmra.mrb[0].mxu0 %v1032
        %v1209 = vpop.f32.mrb[0].mxu0
        %v1210 = vadd.f32 0.0, %v1209
        %v1211 = vpop.f32.mrb[0].mxu0
        %1212 = vmatprep.mubr.f32.mxu0 0.0
        %1213 = vmatmul.mubr.f32.gmra.mrb[0].mxu0 %v1035
        %v1214 = vpop.f32.mrb[0].mxu0
        %v1215 = vadd.f32 0.0, %v1214
        %v1216 = vpop.f32.mrb[0].mxu0
        %1217 = vmatprep.mubr.f32.mxu0 0.0
        %1218 = vmatmul.mubr.f32.gmra.mrb[0].mxu0 %v1038
        %v1219 = vpop.f32.mrb[0].mxu0
        %v1220 = vadd.f32 0.0, %v1219
        %v1221 = vpop.f32.mrb[0].mxu0
        %1222 = vmatprep.mubr.f32.mxu0 0.0
        %1223 = vmatmul.mubr.f32.gmra.mrb[0].mxu0 %v1041
        %v1224 = vpop.f32.mrb[0].mxu0
        %v1225 = vadd.f32 0.0, %v1224
        %v1226 = vpop.f32.mrb[0].mxu0
        %1227 = vmatprep.mubr.f32.mxu0 0.0
        %1228 = vmatmul.mubr.f32.gmra.mrb[0].mxu0 %v1044
        %v1229 = vpop.f32.mrb[0].mxu0
        %v1230 = vadd.f32 0.0, %v1229
        %v1231 = vpop.f32.mrb[0].mxu0
        %1232 = vmatprep.mubr.f32.mxu0 0.0
        %1233 = vmatmul.mubr.f32.gmra.mrb[0].mxu0 %v1047
        %v1234 = vpop.f32.mrb[0].mxu0
        %v1235 = vadd.f32 0.0, %v1234
        %v1236 = vpop.f32.mrb[0].mxu0
        %1237 = vmatprep.mubr.f32.mxu0 0.0
        %1238 = vmatmul.mubr.f32.gmra.mrb[0].mxu0 %v1050
        %v1239 = vpop.f32.mrb[0].mxu0
        %v1240 = vadd.f32 0.0, %v1239
        %v1241 = vpop.f32.mrb[0].mxu0
        %1242 = vmatprep.mubr.f32.mxu0 0.0
        %1243 = vmatmul.mubr.f32.gmra.mrb[0].mxu0 %v1053
        %v1244 = vpop.f32.mrb[0].mxu0
        %v1245 = vadd.f32 0.0, %v1244
        %v1246 = vpop.f32.mrb[0].mxu0
        %1247 = vmatprep.mubr.f32.mxu0 0.0
        %1248 = vmatmul.mubr.f32.gmra.mrb[0].mxu0 %v1056
        %v1249 = vpop.f32.mrb[0].mxu0
        %v1250 = vadd.f32 0.0, %v1249
        %v1251 = vpop.f32.mrb[0].mxu0
        %1252 = vmatprep.mubr.f32.mxu0 0.0
        %1253 = vmatmul.mubr.f32.gmra.mrb[0].mxu0 %v1059
        %v1254 = vpop.f32.mrb[0].mxu0
        %v1255 = vadd.f32 0.0, %v1254
        %v1256 = vpop.f32.mrb[0].mxu0
        %1257 = vmatprep.mubr.f32.mxu0 0.0
        %1258 = vmatmul.mubr.f32.gmra.mrb[0].mxu0 %v1062
        %v1259 = vpop.f32.mrb[0].mxu0
        %v1260 = vadd.f32 0.0, %v1259
        %v1261 = vpop.f32.mrb[0].mxu0
        %1262 = vmatprep.mubr.f32.mxu0 0.0
        %1263 = vmatmul.mubr.f32.gmra.mrb[0].mxu0 %v1065
        %v1264 = vpop.f32.mrb[0].mxu0
        %v1265 = vadd.f32 0.0, %v1264
        %v1266 = vpop.f32.mrb[0].mxu0
        %1267 = vmatprep.mubr.f32.mxu0 0.0
        %1268 = vmatmul.mubr.f32.gmra.mrb[0].mxu0 %v1068
        %v1269 = vpop.f32.mrb[0].mxu0
        %v1270 = vadd.f32 0.0, %v1269
        %v1271 = vpop.f32.mrb[0].mxu0
        %1272 = vmatprep.mubr.f32.mxu0 0.0
        %1273 = vmatmul.mubr.f32.gmra.mrb[0].mxu0 %v1071
        %v1274 = vpop.f32.mrb[0].mxu0
        %v1275 = vadd.f32 0.0, %v1274
        %v1276 = vpop.f32.mrb[0].mxu0
        %1277 = vmatprep.mubr.f32.mxu0 0.0
        %1278 = vmatmul.mubr.f32.gmra.mrb[0].mxu0 %v1074
        %v1279 = vpop.f32.mrb[0].mxu0
        %v1280 = vadd.f32 0.0, %v1279
        %v1281 = vpop.f32.mrb[0].mxu0
        %1282 = vmatprep.mubr.f32.mxu0 0.0
        %1283 = vmatmul.mubr.f32.gmra.mrb[0].mxu0 %v1077
        %v1284 = vpop.f32.mrb[0].mxu0
        %v1285 = vadd.f32 0.0, %v1284
        %v1286 = vpop.f32.mrb[0].mxu0
        %1287 = vmatprep.mubr.f32.mxu0 0.0
        %1288 = vmatmul.mubr.f32.gmra.mrb[0].mxu0 %v1080
        %v1289 = vpop.f32.mrb[0].mxu0
        %v1290 = vadd.f32 0.0, %v1289
        %v1291 = vpop.f32.mrb[0].mxu0
        %1292 = vmatprep.mubr.f32.mxu0 0.0
        %1293 = vmatmul.mubr.f32.gmra.mrb[0].mxu0 %v1083
        %v1294 = vpop.f32.mrb[0].mxu0
        %v1295 = vadd.f32 0.0, %v1294
        %v1296 = vpop.f32.mrb[0].mxu0
        %1297 = vmatprep.mubr.f32.mxu0 0.0
        %1298 = vmatmul.mubr.f32.gmra.mrb[0].mxu0 %v1086
        %v1299 = vpop.f32.mrb[0].mxu0
        %v1300 = vadd.f32 0.0, %v1299
        %v1301 = vpop.f32.mrb[0].mxu0
        %1302 = vmatprep.mubr.f32.mxu0 0.0
        %1303 = vmatmul.mubr.f32.gmra.mrb[0].mxu0 %v1089
        %v1304 = vpop.f32.mrb[0].mxu0
        %v1305 = vadd.f32 0.0, %v1304
        %v1306 = vpop.f32.mrb[0].mxu0
        %1307 = vmatprep.mubr.f32.mxu0 0.0
        %1308 = vmatmul.mubr.f32.gmra.mrb[0].mxu0 %v1092
        %v1309 = vpop.f32.mrb[0].mxu0
        %v1310 = vadd.f32 0.0, %v1309
        %v1311 = vpop.f32.mrb[0].mxu0
        %1312 = vmatprep.mubr.f32.mxu0 0.0
        %1313 = vmatmul.mubr.f32.gmra.mrb[0].mxu0 %v1095
        %v1314 = vpop.f32.mrb[0].mxu0
        %v1315 = vadd.f32 0.0, %v1314
        %v1316 = vpop.f32.mrb[0].mxu0
        %1317 = vmatprep.mubr.f32.mxu0 0.0
        %1318 = vmatmul.mubr.f32.gmra.mrb[0].mxu0 %v1098
        %v1319 = vpop.f32.mrb[0].mxu0
        %v1320 = vadd.f32 0.0, %v1319
        %v1321 = vpop.f32.mrb[0].mxu0
        %1322 = vmatprep.mubr.f32.mxu0 0.0
        %1323 = vmatmul.mubr.f32.gmra.mrb[0].mxu0 %v1101
        %v1324 = vpop.f32.mrb[0].mxu0
        %v1325 = vadd.f32 0.0, %v1324
        %v1326 = vpop.f32.mrb[0].mxu0
        %1327 = vdwg.mxu0
        %v1328 = vld [vmem:[%s7] sm:$0x1]
        %v1329 = vld [vmem:[%s8] sm:$0x1]
        %vm1330 = vcmask 261120
        %v1331 = vsel %vm1330, %v1170, 0.0
        %v1332 = vsel %vm1330, %v1175, 0.0
        %v1333 = vadd.f32 %v1331, %v1332
        %v1334 = vsel %vm1330, %v1180, 0.0
        %v1335 = vadd.f32 %v1333, %v1334
        %v1336 = vsel %vm1330, %v1185, 0.0
        %v1337 = vadd.f32 %v1335, %v1336
        %v1338 = vsel %vm1330, %v1190, 0.0
        %v1339 = vadd.f32 %v1337, %v1338
        %v1340 = vsel %vm1330, %v1195, 0.0
        %v1341 = vadd.f32 %v1339, %v1340
        %v1342 = vsel %vm1330, %v1200, 0.0
        %v1343 = vadd.f32 %v1341, %v1342
        %v1344 = vsel %vm1330, %v1205, 0.0
        %v1345 = vadd.f32 %v1343, %v1344
        %v1346 = vsel %vm1330, %v1210, 0.0
        %v1347 = vadd.f32 %v1345, %v1346
        %v1348 = vsel %vm1330, %v1215, 0.0
        %v1349 = vadd.f32 %v1347, %v1348
        %v1350 = vsel %vm1330, %v1220, 0.0
        %v1351 = vadd.f32 %v1349, %v1350
        %v1352 = vsel %vm1330, %v1225, 0.0
        %v1353 = vadd.f32 %v1351, %v1352
        %v1354 = vsel %vm1330, %v1230, 0.0
        %v1355 = vadd.f32 %v1353, %v1354
        %v1356 = vsel %vm1330, %v1235, 0.0
        %v1357 = vadd.f32 %v1355, %v1356
        %v1358 = vsel %vm1330, %v1240, 0.0
        %v1359 = vadd.f32 %v1357, %v1358
        %v1360 = vsel %vm1330, %v1245, 0.0
        %v1361 = vadd.f32 %v1359, %v1360
        %v1362 = vsel %vm1330, %v1250, 0.0
        %v1363 = vadd.f32 %v1361, %v1362
        %v1364 = vsel %vm1330, %v1255, 0.0
        %v1365 = vadd.f32 %v1363, %v1364
        %v1366 = vsel %vm1330, %v1260, 0.0
        %v1367 = vadd.f32 %v1365, %v1366
        %v1368 = vsel %vm1330, %v1265, 0.0
        %v1369 = vadd.f32 %v1367, %v1368
        %v1370 = vsel %vm1330, %v1270, 0.0
        %v1371 = vadd.f32 %v1369, %v1370
        %v1372 = vsel %vm1330, %v1275, 0.0
        %v1373 = vadd.f32 %v1371, %v1372
        %v1374 = vsel %vm1330, %v1280, 0.0
        %v1375 = vadd.f32 %v1373, %v1374
        %v1376 = vsel %vm1330, %v1285, 0.0
        %v1377 = vadd.f32 %v1375, %v1376
        %v1378 = vsel %vm1330, %v1290, 0.0
        %v1379 = vadd.f32 %v1377, %v1378
        %v1380 = vsel %vm1330, %v1295, 0.0
        %v1381 = vadd.f32 %v1379, %v1380
        %v1382 = vsel %vm1330, %v1300, 0.0
        %v1383 = vadd.f32 %v1381, %v1382
        %v1384 = vsel %vm1330, %v1305, 0.0
        %v1385 = vadd.f32 %v1383, %v1384
        %v1386 = vsel %vm1330, %v1310, 0.0
        %v1387 = vadd.f32 %v1385, %v1386
        %v1388 = vsel %vm1330, %v1315, 0.0
        %v1389 = vadd.f32 %v1387, %v1388
        %v1390 = vsel %vm1330, %v1320, 0.0
        %v1391 = vadd.f32 %v1389, %v1390
        %v1392 = vsel %vm1330, %v1325, 0.0
        %v1393 = vadd.f32 %v1391, %v1392
        %v1394 = vrot.slane %v1393, 4
        %v1395 = vadd.f32 %v1393, %v1394
        %v1396 = vrot.slane %v1395, 2
        %v1397 = vadd.f32 %v1395, %v1396
        %v1398 = vrot.slane %v1397, 1
        %v1399 = vadd.f32 %v1397, %v1398
        %v1400 = vrcp.pop 256.0
        %v1401 = vmul.f32 %v1399, %v1400
        %v1402 = vsub.f32 %v1170, %v1401
        %v1403 = vsub.f32 %v1175, %v1401
        %v1404 = vsub.f32 %v1180, %v1401
        %v1405 = vsub.f32 %v1185, %v1401
        %v1406 = vsub.f32 %v1190, %v1401
        %v1407 = vsub.f32 %v1195, %v1401
        %v1408 = vsub.f32 %v1200, %v1401
        %v1409 = vsub.f32 %v1205, %v1401
        %v1410 = vsub.f32 %v1210, %v1401
        %v1411 = vsub.f32 %v1215, %v1401
        %v1412 = vsub.f32 %v1220, %v1401
        %v1413 = vsub.f32 %v1225, %v1401
        %v1414 = vsub.f32 %v1230, %v1401
        %v1415 = vsub.f32 %v1235, %v1401
        %v1416 = vsub.f32 %v1240, %v1401
        %v1417 = vsub.f32 %v1245, %v1401
        %v1418 = vsub.f32 %v1250, %v1401
        %v1419 = vsub.f32 %v1255, %v1401
        %v1420 = vsub.f32 %v1260, %v1401
        %v1421 = vsub.f32 %v1265, %v1401
        %v1422 = vsub.f32 %v1270, %v1401
        %v1423 = vsub.f32 %v1275, %v1401
        %v1424 = vsub.f32 %v1280, %v1401
        %v1425 = vsub.f32 %v1285, %v1401
        %v1426 = vsub.f32 %v1290, %v1401
        %v1427 = vsub.f32 %v1295, %v1401
        %v1428 = vsub.f32 %v1300, %v1401
        %v1429 = vsub.f32 %v1305, %v1401
        %v1430 = vsub.f32 %v1310, %v1401
        %v1431 = vsub.f32 %v1315, %v1401
        %v1432 = vsub.f32 %v1320, %v1401
        %v1433 = vsub.f32 %v1325, %v1401
        %v1434 = vmul.f32 %v1402, %v1402
        %v1435 = vmul.f32 %v1403, %v1403
        %v1436 = vmul.f32 %v1404, %v1404
        %v1437 = vmul.f32 %v1405, %v1405
        %v1438 = vmul.f32 %v1406, %v1406
        %v1439 = vmul.f32 %v1407, %v1407
        %v1440 = vmul.f32 %v1408, %v1408
        %v1441 = vmul.f32 %v1409, %v1409
        %v1442 = vmul.f32 %v1410, %v1410
        %v1443 = vmul.f32 %v1411, %v1411
        %v1444 = vmul.f32 %v1412, %v1412
        %v1445 = vmul.f32 %v1413, %v1413
        %v1446 = vmul.f32 %v1414, %v1414
        %v1447 = vmul.f32 %v1415, %v1415
        %v1448 = vmul.f32 %v1416, %v1416
        %v1449 = vmul.f32 %v1417, %v1417
        %v1450 = vmul.f32 %v1418, %v1418
        %v1451 = vmul.f32 %v1419, %v1419
        %v1452 = vmul.f32 %v1420, %v1420
        %v1453 = vmul.f32 %v1421, %v1421
        %v1454 = vmul.f32 %v1422, %v1422
        %v1455 = vmul.f32 %v1423, %v1423
        %v1456 = vmul.f32 %v1424, %v1424
        %v1457 = vmul.f32 %v1425, %v1425
        %v1458 = vmul.f32 %v1426, %v1426
        %v1459 = vmul.f32 %v1427, %v1427
        %v1460 = vmul.f32 %v1428, %v1428
        %v1461 = vmul.f32 %v1429, %v1429
        %v1462 = vmul.f32 %v1430, %v1430
        %v1463 = vmul.f32 %v1431, %v1431
        %v1464 = vmul.f32 %v1432, %v1432
        %v1465 = vmul.f32 %v1433, %v1433
        %v1466 = vsel %vm1330, %v1434, 0.0
        %v1467 = vsel %vm1330, %v1435, 0.0
        %v1468 = vadd.f32 %v1466, %v1467
        %v1469 = vsel %vm1330, %v1436, 0.0
        %v1470 = vadd.f32 %v1468, %v1469
        %v1471 = vsel %vm1330, %v1437, 0.0
        %v1472 = vadd.f32 %v1470, %v1471
        %v1473 = vsel %vm1330, %v1438, 0.0
        %v1474 = vadd.f32 %v1472, %v1473
        %v1475 = vsel %vm1330, %v1439, 0.0
        %v1476 = vadd.f32 %v1474, %v1475
        %v1477 = vsel %vm1330, %v1440, 0.0
        %v1478 = vadd.f32 %v1476, %v1477
        %v1479 = vsel %vm1330, %v1441, 0.0
        %v1480 = vadd.f32 %v1478, %v1479
        %v1481 = vsel %vm1330, %v1442, 0.0
        %v1482 = vadd.f32 %v1480, %v1481
        %v1483 = vsel %vm1330, %v1443, 0.0
        %v1484 = vadd.f32 %v1482, %v1483
        %v1485 = vsel %vm1330, %v1444, 0.0
        %v1486 = vadd.f32 %v1484, %v1485
        %v1487 = vsel %vm1330, %v1445, 0.0
        %v1488 = vadd.f32 %v1486, %v1487
        %v1489 = vsel %vm1330, %v1446, 0.0
        %v1490 = vadd.f32 %v1488, %v1489
        %v1491 = vsel %vm1330, %v1447, 0.0
        %v1492 = vadd.f32 %v1490, %v1491
        %v1493 = vsel %vm1330, %v1448, 0.0
        %v1494 = vadd.f32 %v1492, %v1493
        %v1495 = vsel %vm1330, %v1449, 0.0
        %v1496 = vadd.f32 %v1494, %v1495
        %v1497 = vsel %vm1330, %v1450, 0.0
        %v1498 = vadd.f32 %v1496, %v1497
        %v1499 = vsel %vm1330, %v1451, 0.0
        %v1500 = vadd.f32 %v1498, %v1499
        %v1501 = vsel %vm1330, %v1452, 0.0
        %v1502 = vadd.f32 %v1500, %v1501
        %v1503 = vsel %vm1330, %v1453, 0.0
        %v1504 = vadd.f32 %v1502, %v1503
        %v1505 = vsel %vm1330, %v1454, 0.0
        %v1506 = vadd.f32 %v1504, %v1505
        %v1507 = vsel %vm1330, %v1455, 0.0
        %v1508 = vadd.f32 %v1506, %v1507
        %v1509 = vsel %vm1330, %v1456, 0.0
        %v1510 = vadd.f32 %v1508, %v1509
        %v1511 = vsel %vm1330, %v1457, 0.0
        %v1512 = vadd.f32 %v1510, %v1511
        %v1513 = vsel %vm1330, %v1458, 0.0
        %v1514 = vadd.f32 %v1512, %v1513
        %v1515 = vsel %vm1330, %v1459, 0.0
        %v1516 = vadd.f32 %v1514, %v1515
        %v1517 = vsel %vm1330, %v1460, 0.0
        %v1518 = vadd.f32 %v1516, %v1517
        %v1519 = vsel %vm1330, %v1461, 0.0
        %v1520 = vadd.f32 %v1518, %v1519
        %v1521 = vsel %vm1330, %v1462, 0.0
        %v1522 = vadd.f32 %v1520, %v1521
        %v1523 = vsel %vm1330, %v1463, 0.0
        %v1524 = vadd.f32 %v1522, %v1523
        %v1525 = vsel %vm1330, %v1464, 0.0
        %v1526 = vadd.f32 %v1524, %v1525
        %v1527 = vsel %vm1330, %v1465, 0.0
        %v1528 = vadd.f32 %v1526, %v1527
        %v1529 = vrot.slane %v1528, 4
        %v1530 = vadd.f32 %v1528, %v1529
        %v1531 = vrot.slane %v1530, 2
        %v1532 = vadd.f32 %v1530, %v1531
        %v1533 = vrot.slane %v1532, 1
        %v1534 = vadd.f32 %v1532, %v1533
        %v1535 = vmul.f32 %v1534, %v1400
        %v1536 = vadd.f32 %v1535, 1e-05
        %v1537 = vrsqrt.pop %v1536
        %v1538 = vmul.f32 %v1402, %v1537
        %v1539 = vmul.f32 %v1403, %v1537
        %v1540 = vmul.f32 %v1404, %v1537
        %v1541 = vmul.f32 %v1405, %v1537
        %v1542 = vmul.f32 %v1406, %v1537
        %v1543 = vmul.f32 %v1407, %v1537
        %v1544 = vmul.f32 %v1408, %v1537
        %v1545 = vmul.f32 %v1409, %v1537
        %v1546 = vmul.f32 %v1410, %v1537
        %v1547 = vmul.f32 %v1411, %v1537
        %v1548 = vmul.f32 %v1412, %v1537
        %v1549 = vmul.f32 %v1413, %v1537
        %v1550 = vmul.f32 %v1414, %v1537
        %v1551 = vmul.f32 %v1415, %v1537
        %v1552 = vmul.f32 %v1416, %v1537
        %v1553 = vmul.f32 %v1417, %v1537
        %v1554 = vmul.f32 %v1418, %v1537
        %v1555 = vmul.f32 %v1419, %v1537
        %v1556 = vmul.f32 %v1420, %v1537
        %v1557 = vmul.f32 %v1421, %v1537
        %v1558 = vmul.f32 %v1422, %v1537
        %v1559 = vmul.f32 %v1423, %v1537
        %v1560 = vmul.f32 %v1424, %v1537
        %v1561 = vmul.f32 %v1425, %v1537
        %v1562 = vmul.f32 %v1426, %v1537
        %v1563 = vmul.f32 %v1427, %v1537
        %v1564 = vmul.f32 %v1428, %v1537
        %v1565 = vmul.f32 %v1429, %v1537
        %v1566 = vmul.f32 %v1430, %v1537
        %v1567 = vmul.f32 %v1431, %v1537
        %v1568 = vmul.f32 %v1432, %v1537
        %v1569 = vmul.f32 %v1433, %v1537
        %v1571 = vlaneseq
        %v1572 = vshrl.u32 %v1571, 7
        %v1573 = vsub.s32 0, %v1572
        %v1574 = vrot.slane %v1328, %v1573
        %v1576 = vmul.f32 %v1538, %v1574
        %v1577 = vmul.f32 %v1539, %v1574
        %v1578 = vmul.f32 %v1540, %v1574
        %v1579 = vmul.f32 %v1541, %v1574
        %v1580 = vmul.f32 %v1542, %v1574
        %v1581 = vmul.f32 %v1543, %v1574
        %v1582 = vmul.f32 %v1544, %v1574
        %v1583 = vmul.f32 %v1545, %v1574
        %v1584 = vmul.f32 %v1546, %v1574
        %v1585 = vmul.f32 %v1547, %v1574
        %v1586 = vmul.f32 %v1548, %v1574
        %v1587 = vmul.f32 %v1549, %v1574
        %v1588 = vmul.f32 %v1550, %v1574
        %v1589 = vmul.f32 %v1551, %v1574
        %v1590 = vmul.f32 %v1552, %v1574
        %v1591 = vmul.f32 %v1553, %v1574
        %v1592 = vmul.f32 %v1554, %v1574
        %v1593 = vmul.f32 %v1555, %v1574
        %v1594 = vmul.f32 %v1556, %v1574
        %v1595 = vmul.f32 %v1557, %v1574
        %v1596 = vmul.f32 %v1558, %v1574
        %v1597 = vmul.f32 %v1559, %v1574
        %v1598 = vmul.f32 %v1560, %v1574
        %v1599 = vmul.f32 %v1561, %v1574
        %v1600 = vmul.f32 %v1562, %v1574
        %v1601 = vmul.f32 %v1563, %v1574
        %v1602 = vmul.f32 %v1564, %v1574
        %v1603 = vmul.f32 %v1565, %v1574
        %v1604 = vmul.f32 %v1566, %v1574
        %v1605 = vmul.f32 %v1567, %v1574
        %v1606 = vmul.f32 %v1568, %v1574
        %v1607 = vmul.f32 %v1569, %v1574
        %v1609 = vlaneseq
        %v1610 = vshrl.u32 %v1609, 7
        %v1611 = vsub.s32 0, %v1610
        %v1612 = vrot.slane %v1329, %v1611
        %v1614 = vadd.f32 %v1576, %v1612
        %v1615 = vadd.f32 %v1577, %v1612
        %v1616 = vadd.f32 %v1578, %v1612
        %v1617 = vadd.f32 %v1579, %v1612
        %v1618 = vadd.f32 %v1580, %v1612
        %v1619 = vadd.f32 %v1581, %v1612
        %v1620 = vadd.f32 %v1582, %v1612
        %v1621 = vadd.f32 %v1583, %v1612
        %v1622 = vadd.f32 %v1584, %v1612
        %v1623 = vadd.f32 %v1585, %v1612
        %v1624 = vadd.f32 %v1586, %v1612
        %v1625 = vadd.f32 %v1587, %v1612
        %v1626 = vadd.f32 %v1588, %v1612
        %v1627 = vadd.f32 %v1589, %v1612
        %v1628 = vadd.f32 %v1590, %v1612
        %v1629 = vadd.f32 %v1591, %v1612
        %v1630 = vadd.f32 %v1592, %v1612
        %v1631 = vadd.f32 %v1593, %v1612
        %v1632 = vadd.f32 %v1594, %v1612
        %v1633 = vadd.f32 %v1595, %v1612
        %v1634 = vadd.f32 %v1596, %v1612
        %v1635 = vadd.f32 %v1597, %v1612
        %v1636 = vadd.f32 %v1598, %v1612
        %v1637 = vadd.f32 %v1599, %v1612
        %v1638 = vadd.f32 %v1600, %v1612
        %v1639 = vadd.f32 %v1601, %v1612
        %v1640 = vadd.f32 %v1602, %v1612
        %v1641 = vadd.f32 %v1603, %v1612
        %v1642 = vadd.f32 %v1604, %v1612
        %v1643 = vadd.f32 %v1605, %v1612
        %v1644 = vadd.f32 %v1606, %v1612
        %v1645 = vadd.f32 %v1607, %v1612
        %v1646 = vmax.f32 %v1614, 0.0
        %v1647 = vmax.f32 %v1615, 0.0
        %v1648 = vmax.f32 %v1616, 0.0
        %v1649 = vmax.f32 %v1617, 0.0
        %v1650 = vmax.f32 %v1618, 0.0
        %v1651 = vmax.f32 %v1619, 0.0
        %v1652 = vmax.f32 %v1620, 0.0
        %v1653 = vmax.f32 %v1621, 0.0
        %v1654 = vmax.f32 %v1622, 0.0
        %v1655 = vmax.f32 %v1623, 0.0
        %v1656 = vmax.f32 %v1624, 0.0
        %v1657 = vmax.f32 %v1625, 0.0
        %v1658 = vmax.f32 %v1626, 0.0
        %v1659 = vmax.f32 %v1627, 0.0
        %v1660 = vmax.f32 %v1628, 0.0
        %v1661 = vmax.f32 %v1629, 0.0
        %v1662 = vmax.f32 %v1630, 0.0
        %v1663 = vmax.f32 %v1631, 0.0
        %v1664 = vmax.f32 %v1632, 0.0
        %v1665 = vmax.f32 %v1633, 0.0
        %v1666 = vmax.f32 %v1634, 0.0
        %v1667 = vmax.f32 %v1635, 0.0
        %v1668 = vmax.f32 %v1636, 0.0
        %v1669 = vmax.f32 %v1637, 0.0
        %v1670 = vmax.f32 %v1638, 0.0
        %v1671 = vmax.f32 %v1639, 0.0
        %v1672 = vmax.f32 %v1640, 0.0
        %v1673 = vmax.f32 %v1641, 0.0
        %v1674 = vmax.f32 %v1642, 0.0
        %v1675 = vmax.f32 %v1643, 0.0
        %v1676 = vmax.f32 %v1644, 0.0
        %v1677 = vmax.f32 %v1645, 0.0
        %1678 = vst.msk [vmem:[#allocation2] sm:$0xff] %vm1330, 0.0
        %1679 = vst.msk [vmem:[#allocation2 + $0x8] sm:$0xff] %vm1330, 0.0
        %vm1680 = vcmask 254976
        %1681 = vst.msk [vmem:[#allocation2 + $0x10] sm:$0x3] %vm1680, 0.0
        %s1682 = scalar_lea.vmem [#allocation2], 408
        %1683 = vst.msk [vmem:[%s1682] sm:$0xff] %vm1330, 0.0
        %1684 = vst.msk [vmem:[%s1682 + $0x8] sm:$0xff] %vm1330, 0.0
        %1685 = vst.msk [vmem:[%s1682 + $0x10] sm:$0x3] %vm1680, 0.0
        %vm1686 = vcmask 253952
        %1687 = vst.msk [vmem:[#allocation2] sm:$0x1] %vm1686, 0.0
        %1688 = vst.msk [vmem:[#allocation2 + $0x18] sm:$0x1] %vm1686, 0.0
        %1689 = vst.msk [vmem:[#allocation2 + $0x30] sm:$0x1] %vm1686, 0.0
        %1690 = vst.msk [vmem:[#allocation2 + $0x48] sm:$0x1] %vm1686, 0.0
        %1691 = vst.msk [vmem:[#allocation2 + $0x60] sm:$0x1] %vm1686, 0.0
        %1692 = vst.msk [vmem:[#allocation2 + $0x78] sm:$0x1] %vm1686, 0.0
        %1693 = vst.msk [vmem:[#allocation2 + $0x90] sm:$0x1] %vm1686, 0.0
        %1694 = vst.msk [vmem:[#allocation2 + $0xa8] sm:$0x1] %vm1686, 0.0
        %1695 = vst.msk [vmem:[#allocation2 + $0xc0] sm:$0x1] %vm1686, 0.0
        %1696 = vst.msk [vmem:[#allocation2 + $0xd8] sm:$0x1] %vm1686, 0.0
        %1697 = vst.msk [vmem:[#allocation2 + $0xf0] sm:$0x1] %vm1686, 0.0
        %1698 = vst.msk [vmem:[#allocation2 + $0x108] sm:$0x1] %vm1686, 0.0
        %1699 = vst.msk [vmem:[#allocation2 + $0x120] sm:$0x1] %vm1686, 0.0
        %1700 = vst.msk [vmem:[#allocation2 + $0x138] sm:$0x1] %vm1686, 0.0
        %1701 = vst.msk [vmem:[#allocation2 + $0x150] sm:$0x1] %vm1686, 0.0
        %1702 = vst.msk [vmem:[#allocation2 + $0x168] sm:$0x1] %vm1686, 0.0
        %1703 = vst.msk [vmem:[#allocation2 + $0x180] sm:$0x1] %vm1686, 0.0
        %1704 = vst.msk [vmem:[#allocation2 + $0x198] sm:$0x1] %vm1686, 0.0
        %1705 = vst.msk [vmem:[#allocation2 + $0x11] sm:$0x1] %vm1686, 0.0
        %1706 = vst.msk [vmem:[#allocation2 + $0x29] sm:$0x1] %vm1686, 0.0
        %1707 = vst.msk [vmem:[#allocation2 + $0x41] sm:$0x1] %vm1686, 0.0
        %1708 = vst.msk [vmem:[#allocation2 + $0x59] sm:$0x1] %vm1686, 0.0
        %1709 = vst.msk [vmem:[#allocation2 + $0x71] sm:$0x1] %vm1686, 0.0
        %1710 = vst.msk [vmem:[#allocation2 + $0x89] sm:$0x1] %vm1686, 0.0
        %1711 = vst.msk [vmem:[#allocation2 + $0xa1] sm:$0x1] %vm1686, 0.0
        %1712 = vst.msk [vmem:[#allocation2 + $0xb9] sm:$0x1] %vm1686, 0.0
        %1713 = vst.msk [vmem:[#allocation2 + $0xd1] sm:$0x1] %vm1686, 0.0
        %1714 = vst.msk [vmem:[#allocation2 + $0xe9] sm:$0x1] %vm1686, 0.0
        %1715 = vst.msk [vmem:[#allocation2 + $0x101] sm:$0x1] %vm1686, 0.0
        %1716 = vst.msk [vmem:[#allocation2 + $0x119] sm:$0x1] %vm1686, 0.0
        %1717 = vst.msk [vmem:[#allocation2 + $0x131] sm:$0x1] %vm1686, 0.0
        %1718 = vst.msk [vmem:[#allocation2 + $0x149] sm:$0x1] %vm1686, 0.0
        %1719 = vst.msk [vmem:[#allocation2 + $0x161] sm:$0x1] %vm1686, 0.0
        %1720 = vst.msk [vmem:[#allocation2 + $0x179] sm:$0x1] %vm1686, 0.0
        %1721 = vst.msk [vmem:[#allocation2 + $0x191] sm:$0x1] %vm1686, 0.0
        %1722 = vst.msk [vmem:[#allocation2 + $0x1a9] sm:$0x1] %vm1686, 0.0
        %s1723 = scalar_lea.vmem [#allocation2], 24
        %1724 = vst.msk [vmem:[%s1723 + $0x1] sm:$0xff] %vm1330, %v1646
        %1725 = vst.msk [vmem:[%s1723 + $0x9] sm:$0xff] %vm1330, %v1647
        %1726 = vst.msk [vmem:[%s1723 + $0x19] sm:$0xff] %vm1330, %v1648
        %1727 = vst.msk [vmem:[%s1723 + $0x21] sm:$0xff] %vm1330, %v1649
        %1728 = vst.msk [vmem:[%s1723 + $0x31] sm:$0xff] %vm1330, %v1650
        %1729 = vst.msk [vmem:[%s1723 + $0x39] sm:$0xff] %vm1330, %v1651
        %1730 = vst.msk [vmem:[%s1723 + $0x49] sm:$0xff] %vm1330, %v1652
        %1731 = vst.msk [vmem:[%s1723 + $0x51] sm:$0xff] %vm1330, %v1653
        %1732 = vst.msk [vmem:[%s1723 + $0x61] sm:$0xff] %vm1330, %v1654
        %1733 = vst.msk [vmem:[%s1723 + $0x69] sm:$0xff] %vm1330, %v1655
        %1734 = vst.msk [vmem:[%s1723 + $0x79] sm:$0xff] %vm1330, %v1656
        %1735 = vst.msk [vmem:[%s1723 + $0x81] sm:$0xff] %vm1330, %v1657
        %1736 = vst.msk [vmem:[%s1723 + $0x91] sm:$0xff] %vm1330, %v1658
        %1737 = vst.msk [vmem:[%s1723 + $0x99] sm:$0xff] %vm1330, %v1659
        %1738 = vst.msk [vmem:[%s1723 + $0xa9] sm:$0xff] %vm1330, %v1660
        %1739 = vst.msk [vmem:[%s1723 + $0xb1] sm:$0xff] %vm1330, %v1661
        %1740 = vst.msk [vmem:[%s1723 + $0xc1] sm:$0xff] %vm1330, %v1662
        %1741 = vst.msk [vmem:[%s1723 + $0xc9] sm:$0xff] %vm1330, %v1663
        %1742 = vst.msk [vmem:[%s1723 + $0xd9] sm:$0xff] %vm1330, %v1664
        %1743 = vst.msk [vmem:[%s1723 + $0xe1] sm:$0xff] %vm1330, %v1665
        %1744 = vst.msk [vmem:[%s1723 + $0xf1] sm:$0xff] %vm1330, %v1666
        %1745 = vst.msk [vmem:[%s1723 + $0xf9] sm:$0xff] %vm1330, %v1667
        %1746 = vst.msk [vmem:[%s1723 + $0x109] sm:$0xff] %vm1330, %v1668
        %1747 = vst.msk [vmem:[%s1723 + $0x111] sm:$0xff] %vm1330, %v1669
        %1748 = vst.msk [vmem:[%s1723 + $0x121] sm:$0xff] %vm1330, %v1670
        %1749 = vst.msk [vmem:[%s1723 + $0x129] sm:$0xff] %vm1330, %v1671
        %1750 = vst.msk [vmem:[%s1723 + $0x139] sm:$0xff] %vm1330, %v1672
        %1751 = vst.msk [vmem:[%s1723 + $0x141] sm:$0xff] %vm1330, %v1673
        %1752 = vst.msk [vmem:[%s1723 + $0x151] sm:$0xff] %vm1330, %v1674
        %1753 = vst.msk [vmem:[%s1723 + $0x159] sm:$0xff] %vm1330, %v1675
        %1754 = vst.msk [vmem:[%s1723 + $0x169] sm:$0xff] %vm1330, %v1676
        %1755 = vst.msk [vmem:[%s1723 + $0x171] sm:$0xff] %vm1330, %v1677
        %v1756 = vld [vmem:[#allocation2] ss:$2 sm:$0xff]
        %s1757 = scalar_lea.vmem [#allocation2], 48
        %v1758 = vld [vmem:[%s1757] ss:$2 sm:$0xff]
        %s1759 = scalar_lea.vmem [#allocation2], 96
        %v1760 = vld [vmem:[%s1759] ss:$2 sm:$0xff]
        %s1761 = scalar_lea.vmem [#allocation2], 144
        %v1762 = vld [vmem:[%s1761] ss:$2 sm:$0xff]
        %s1763 = scalar_lea.vmem [#allocation2], 192
        %v1764 = vld [vmem:[%s1763] ss:$2 sm:$0xff]
        %s1765 = scalar_lea.vmem [#allocation2], 240
        %v1766 = vld [vmem:[%s1765] ss:$2 sm:$0xff]
        %s1767 = scalar_lea.vmem [#allocation2], 288
        %v1768 = vld [vmem:[%s1767] ss:$2 sm:$0xff]
        %s1769 = scalar_lea.vmem [#allocation2], 336
        %v1770 = vld [vmem:[%s1769] ss:$2 sm:$0xff]
        %s1771 = scalar_lea.vmem [#allocation2], 1
        %v1772 = vld [vmem:[%s1771] ss:$2 sm:$0xff]
        %s1773 = scalar_lea.vmem [#allocation2], 49
        %v1774 = vld [vmem:[%s1773] ss:$2 sm:$0xff]
        %s1775 = scalar_lea.vmem [#allocation2], 97
        %v1776 = vld [vmem:[%s1775] ss:$2 sm:$0xff]
        %s1777 = scalar_lea.vmem [#allocation2], 145
        %v1778 = vld [vmem:[%s1777] ss:$2 sm:$0xff]
        %s1779 = scalar_lea.vmem [#allocation2], 193
        %v1780 = vld [vmem:[%s1779] ss:$2 sm:$0xff]
        %s1781 = scalar_lea.vmem [#allocation2], 241
        %v1782 = vld [vmem:[%s1781] ss:$2 sm:$0xff]
        %s1783 = scalar_lea.vmem [#allocation2], 289
        %v1784 = vld [vmem:[%s1783] ss:$2 sm:$0xff]
        %s1785 = scalar_lea.vmem [#allocation2], 337
        %v1786 = vld [vmem:[%s1785] ss:$2 sm:$0xff]
        %s1787 = scalar_lea.vmem [#allocation2], 2
        %v1788 = vld [vmem:[%s1787] ss:$2 sm:$0xff]
        %s1789 = scalar_lea.vmem [#allocation2], 50
        %v1790 = vld [vmem:[%s1789] ss:$2 sm:$0xff]
        %s1791 = scalar_lea.vmem [#allocation2], 98
        %v1792 = vld [vmem:[%s1791] ss:$2 sm:$0xff]
        %s1793 = scalar_lea.vmem [#allocation2], 146
        %v1794 = vld [vmem:[%s1793] ss:$2 sm:$0xff]
        %s1795 = scalar_lea.vmem [#allocation2], 194
        %v1796 = vld [vmem:[%s1795] ss:$2 sm:$0xff]
        %s1797 = scalar_lea.vmem [#allocation2], 242
        %v1798 = vld [vmem:[%s1797] ss:$2 sm:$0xff]
        %s1799 = scalar_lea.vmem [#allocation2], 290
        %v1800 = vld [vmem:[%s1799] ss:$2 sm:$0xff]
        %s1801 = scalar_lea.vmem [#allocation2], 338
        %v1802 = vld [vmem:[%s1801] ss:$2 sm:$0xff]
        %v1803 = vld [vmem:[%s1723] ss:$2 sm:$0xff]
        %s1804 = scalar_lea.vmem %s1723, 48 [#allocation2]
        %v1805 = vld [vmem:[%s1804] ss:$2 sm:$0xff]
        %s1806 = scalar_lea.vmem %s1723, 96 [#allocation2]
        %v1807 = vld [vmem:[%s1806] ss:$2 sm:$0xff]
        %s1808 = scalar_lea.vmem %s1723, 144 [#allocation2]
        %v1809 = vld [vmem:[%s1808] ss:$2 sm:$0xff]
        %s1810 = scalar_lea.vmem %s1723, 192 [#allocation2]
        %v1811 = vld [vmem:[%s1810] ss:$2 sm:$0xff]
        %s1812 = scalar_lea.vmem %s1723, 240 [#allocation2]
        %v1813 = vld [vmem:[%s1812] ss:$2 sm:$0xff]
        %s1814 = scalar_lea.vmem %s1723, 288 [#allocation2]
        %v1815 = vld [vmem:[%s1814] ss:$2 sm:$0xff]
        %s1816 = scalar_lea.vmem %s1723, 336 [#allocation2]
        %v1817 = vld [vmem:[%s1816] ss:$2 sm:$0xff]
        %s1818 = scalar_lea.vmem %s1723, 1 [#allocation2]
        %v1819 = vld [vmem:[%s1818] ss:$2 sm:$0xff]
        %s1820 = scalar_lea.vmem %s1723, 49 [#allocation2]
        %v1821 = vld [vmem:[%s1820] ss:$2 sm:$0xff]
        %s1822 = scalar_lea.vmem %s1723, 97 [#allocation2]
        %v1823 = vld [vmem:[%s1822] ss:$2 sm:$0xff]
        %s1824 = scalar_lea.vmem %s1723, 145 [#allocation2]
        %v1825 = vld [vmem:[%s1824] ss:$2 sm:$0xff]
        %s1826 = scalar_lea.vmem %s1723, 193 [#allocation2]
        %v1827 = vld [vmem:[%s1826] ss:$2 sm:$0xff]
        %s1828 = scalar_lea.vmem %s1723, 241 [#allocation2]
        %v1829 = vld [vmem:[%s1828] ss:$2 sm:$0xff]
        %s1830 = scalar_lea.vmem %s1723, 289 [#allocation2]
        %v1831 = vld [vmem:[%s1830] ss:$2 sm:$0xff]
        %s1832 = scalar_lea.vmem %s1723, 337 [#allocation2]
        %v1833 = vld [vmem:[%s1832] ss:$2 sm:$0xff]
        %s1834 = scalar_lea.vmem %s1723, 2 [#allocation2]
        %v1835 = vld [vmem:[%s1834] ss:$2 sm:$0xff]
        %s1836 = scalar_lea.vmem %s1723, 50 [#allocation2]
        %v1837 = vld [vmem:[%s1836] ss:$2 sm:$0xff]
        %s1838 = scalar_lea.vmem %s1723, 98 [#allocation2]
        %v1839 = vld [vmem:[%s1838] ss:$2 sm:$0xff]
        %s1840 = scalar_lea.vmem %s1723, 146 [#allocation2]
        %v1841 = vld [vmem:[%s1840] ss:$2 sm:$0xff]
        %s1842 = scalar_lea.vmem %s1723, 194 [#allocation2]
        %v1843 = vld [vmem:[%s1842] ss:$2 sm:$0xff]
        %s1844 = scalar_lea.vmem %s1723, 242 [#allocation2]
        %v1845 = vld [vmem:[%s1844] ss:$2 sm:$0xff]
        %s1846 = scalar_lea.vmem %s1723, 290 [#allocation2]
        %v1847 = vld [vmem:[%s1846] ss:$2 sm:$0xff]
        %s1848 = scalar_lea.vmem %s1723, 338 [#allocation2]
        %v1849 = vld [vmem:[%s1848] ss:$2 sm:$0xff]
        %s1850 = scalar_lea.vmem [#allocation2], 48
        %v1851 = vld [vmem:[%s1850] ss:$2 sm:$0xff]
        %s1852 = scalar_lea.vmem %s1850, 48 [#allocation2]
        %v1853 = vld [vmem:[%s1852] ss:$2 sm:$0xff]
        %s1854 = scalar_lea.vmem %s1850, 96 [#allocation2]
        %v1855 = vld [vmem:[%s1854] ss:$2 sm:$0xff]
        %s1856 = scalar_lea.vmem %s1850, 144 [#allocation2]
        %v1857 = vld [vmem:[%s1856] ss:$2 sm:$0xff]
        %s1858 = scalar_lea.vmem %s1850, 192 [#allocation2]
        %v1859 = vld [vmem:[%s1858] ss:$2 sm:$0xff]
        %s1860 = scalar_lea.vmem %s1850, 240 [#allocation2]
        %v1861 = vld [vmem:[%s1860] ss:$2 sm:$0xff]
        %s1862 = scalar_lea.vmem %s1850, 288 [#allocation2]
        %v1863 = vld [vmem:[%s1862] ss:$2 sm:$0xff]
        %s1864 = scalar_lea.vmem %s1850, 336 [#allocation2]
        %v1865 = vld [vmem:[%s1864] ss:$2 sm:$0xff]
        %s1866 = scalar_lea.vmem %s1850, 1 [#allocation2]
        %v1867 = vld [vmem:[%s1866] ss:$2 sm:$0xff]
        %s1868 = scalar_lea.vmem %s1850, 49 [#allocation2]
        %v1869 = vld [vmem:[%s1868] ss:$2 sm:$0xff]
        %s1870 = scalar_lea.vmem %s1850, 97 [#allocation2]
        %v1871 = vld [vmem:[%s1870] ss:$2 sm:$0xff]
        %s1872 = scalar_lea.vmem %s1850, 145 [#allocation2]
        %v1873 = vld [vmem:[%s1872] ss:$2 sm:$0xff]
        %s1874 = scalar_lea.vmem %s1850, 193 [#allocation2]
        %v1875 = vld [vmem:[%s1874] ss:$2 sm:$0xff]
        %s1876 = scalar_lea.vmem %s1850, 241 [#allocation2]
        %v1877 = vld [vmem:[%s1876] ss:$2 sm:$0xff]
        %s1878 = scalar_lea.vmem %s1850, 289 [#allocation2]
        %v1879 = vld [vmem:[%s1878] ss:$2 sm:$0xff]
        %s1880 = scalar_lea.vmem %s1850, 337 [#allocation2]
        %v1881 = vld [vmem:[%s1880] ss:$2 sm:$0xff]
        %s1882 = scalar_lea.vmem %s1850, 2 [#allocation2]
        %v1883 = vld [vmem:[%s1882] ss:$2 sm:$0xff]
        %s1884 = scalar_lea.vmem %s1850, 50 [#allocation2]
        %v1885 = vld [vmem:[%s1884] ss:$2 sm:$0xff]
        %s1886 = scalar_lea.vmem %s1850, 98 [#allocation2]
        %v1887 = vld [vmem:[%s1886] ss:$2 sm:$0xff]
        %s1888 = scalar_lea.vmem %s1850, 146 [#allocation2]
        %v1889 = vld [vmem:[%s1888] ss:$2 sm:$0xff]
        %s1890 = scalar_lea.vmem %s1850, 194 [#allocation2]
        %v1891 = vld [vmem:[%s1890] ss:$2 sm:$0xff]
        %s1892 = scalar_lea.vmem %s1850, 242 [#allocation2]
        %v1893 = vld [vmem:[%s1892] ss:$2 sm:$0xff]
        %s1894 = scalar_lea.vmem %s1850, 290 [#allocation2]
        %v1895 = vld [vmem:[%s1894] ss:$2 sm:$0xff]
        %s1896 = scalar_lea.vmem %s1850, 338 [#allocation2]
        %v1897 = vld [vmem:[%s1896] ss:$2 sm:$0xff]
        %1906 = vrot.lane.b32.xlu0 %v1772, 32
        %v1907 = vpop.permute.xlu0 %1906
        %1908 = vrot.lane.b32.xlu0 %v1774, 32
        %v1909 = vpop.permute.xlu0 %1908
        %1910 = vrot.lane.b32.xlu0 %v1776, 32
        %v1911 = vpop.permute.xlu0 %1910
        %1912 = vrot.lane.b32.xlu0 %v1778, 32
        %v1913 = vpop.permute.xlu0 %1912
        %1914 = vrot.lane.b32.xlu0 %v1780, 32
        %v1915 = vpop.permute.xlu0 %1914
        %1916 = vrot.lane.b32.xlu0 %v1782, 32
        %v1917 = vpop.permute.xlu0 %1916
        %1918 = vrot.lane.b32.xlu0 %v1784, 32
        %v1919 = vpop.permute.xlu0 %1918
        %1920 = vrot.lane.b32.xlu0 %v1786, 32
        %v1921 = vpop.permute.xlu0 %1920
        %1938 = vrot.lane.b32.xlu0 %v1788, 64
        %v1939 = vpop.permute.xlu0 %1938
        %1940 = vrot.lane.b32.xlu0 %v1790, 64
        %v1941 = vpop.permute.xlu0 %1940
        %1942 = vrot.lane.b32.xlu0 %v1792, 64
        %v1943 = vpop.permute.xlu0 %1942
        %1944 = vrot.lane.b32.xlu0 %v1794, 64
        %v1945 = vpop.permute.xlu0 %1944
        %1946 = vrot.lane.b32.xlu0 %v1796, 64
        %v1947 = vpop.permute.xlu0 %1946
        %1948 = vrot.lane.b32.xlu0 %v1798, 64
        %v1949 = vpop.permute.xlu0 %1948
        %1950 = vrot.lane.b32.xlu0 %v1800, 64
        %v1951 = vpop.permute.xlu0 %1950
        %1952 = vrot.lane.b32.xlu0 %v1802, 64
        %v1953 = vpop.permute.xlu0 %1952
        %1970 = vrot.lane.b32.xlu0 %v1803, 96
        %v1971 = vpop.permute.xlu0 %1970
        %1972 = vrot.lane.b32.xlu0 %v1805, 96
        %v1973 = vpop.permute.xlu0 %1972
        %1974 = vrot.lane.b32.xlu0 %v1807, 96
        %v1975 = vpop.permute.xlu0 %1974
        %1976 = vrot.lane.b32.xlu0 %v1809, 96
        %v1977 = vpop.permute.xlu0 %1976
        %1978 = vrot.lane.b32.xlu0 %v1811, 96
        %v1979 = vpop.permute.xlu0 %1978
        %1980 = vrot.lane.b32.xlu0 %v1813, 96
        %v1981 = vpop.permute.xlu0 %1980
        %1982 = vrot.lane.b32.xlu0 %v1815, 96
        %v1983 = vpop.permute.xlu0 %1982
        %1984 = vrot.lane.b32.xlu0 %v1817, 96
        %v1985 = vpop.permute.xlu0 %1984
        %2002 = vrot.lane.b32.xlu0 %v1835, 32
        %v2003 = vpop.permute.xlu0 %2002
        %2004 = vrot.lane.b32.xlu0 %v1837, 32
        %v2005 = vpop.permute.xlu0 %2004
        %2006 = vrot.lane.b32.xlu0 %v1839, 32
        %v2007 = vpop.permute.xlu0 %2006
        %2008 = vrot.lane.b32.xlu0 %v1841, 32
        %v2009 = vpop.permute.xlu0 %2008
        %2010 = vrot.lane.b32.xlu0 %v1843, 32
        %v2011 = vpop.permute.xlu0 %2010
        %2012 = vrot.lane.b32.xlu0 %v1845, 32
        %v2013 = vpop.permute.xlu0 %2012
        %2014 = vrot.lane.b32.xlu0 %v1847, 32
        %v2015 = vpop.permute.xlu0 %2014
        %2016 = vrot.lane.b32.xlu0 %v1849, 32
        %v2017 = vpop.permute.xlu0 %2016
        %2034 = vrot.lane.b32.xlu0 %v1851, 64
        %v2035 = vpop.permute.xlu0 %2034
        %2036 = vrot.lane.b32.xlu0 %v1853, 64
        %v2037 = vpop.permute.xlu0 %2036
        %2038 = vrot.lane.b32.xlu0 %v1855, 64
        %v2039 = vpop.permute.xlu0 %2038
        %2040 = vrot.lane.b32.xlu0 %v1857, 64
        %v2041 = vpop.permute.xlu0 %2040
        %2042 = vrot.lane.b32.xlu0 %v1859, 64
        %v2043 = vpop.permute.xlu0 %2042
        %2044 = vrot.lane.b32.xlu0 %v1861, 64
        %v2045 = vpop.permute.xlu0 %2044
        %2046 = vrot.lane.b32.xlu0 %v1863, 64
        %v2047 = vpop.permute.xlu0 %2046
        %2048 = vrot.lane.b32.xlu0 %v1865, 64
        %v2049 = vpop.permute.xlu0 %2048
        %2066 = vrot.lane.b32.xlu0 %v1867, 96
        %v2067 = vpop.permute.xlu0 %2066
        %2068 = vrot.lane.b32.xlu0 %v1869, 96
        %v2069 = vpop.permute.xlu0 %2068
        %2070 = vrot.lane.b32.xlu0 %v1871, 96
        %v2071 = vpop.permute.xlu0 %2070
        %2072 = vrot.lane.b32.xlu0 %v1873, 96
        %v2073 = vpop.permute.xlu0 %2072
        %2074 = vrot.lane.b32.xlu0 %v1875, 96
        %v2075 = vpop.permute.xlu0 %2074
        %2076 = vrot.lane.b32.xlu0 %v1877, 96
        %v2077 = vpop.permute.xlu0 %2076
        %2078 = vrot.lane.b32.xlu0 %v1879, 96
        %v2079 = vpop.permute.xlu0 %2078
        %2080 = vrot.lane.b32.xlu0 %v1881, 96
        %v2081 = vpop.permute.xlu0 %2080
        %v2090 = vsel %vm1330, %v1756, %v1907
        %v2091 = vsel %vm1330, %v1758, %v1909
        %v2092 = vsel %vm1330, %v1760, %v1911
        %v2093 = vsel %vm1330, %v1762, %v1913
        %v2094 = vsel %vm1330, %v1764, %v1915
        %v2095 = vsel %vm1330, %v1766, %v1917
        %v2096 = vsel %vm1330, %v1768, %v1919
        %v2097 = vsel %vm1330, %v1770, %v1921
        %v2098 = vsel %vm419, %v2090, %v1939
        %v2099 = vsel %vm419, %v2091, %v1941
        %v2100 = vsel %vm419, %v2092, %v1943
        %v2101 = vsel %vm419, %v2093, %v1945
        %v2102 = vsel %vm419, %v2094, %v1947
        %v2103 = vsel %vm419, %v2095, %v1949
        %v2104 = vsel %vm419, %v2096, %v1951
        %v2105 = vsel %vm419, %v2097, %v1953
        %vm2106 = vcmask 785408
        %v2107 = vsel %vm2106, %v2098, %v1971
        %v2108 = vsel %vm2106, %v2099, %v1973
        %v2109 = vsel %vm2106, %v2100, %v1975
        %v2110 = vsel %vm2106, %v2101, %v1977
        %v2111 = vsel %vm2106, %v2102, %v1979
        %v2112 = vsel %vm2106, %v2103, %v1981
        %v2113 = vsel %vm2106, %v2104, %v1983
        %v2114 = vsel %vm2106, %v2105, %v1985
        %v2115 = vsel %vm1330, %v1819, %v2003
        %v2116 = vsel %vm1330, %v1821, %v2005
        %v2117 = vsel %vm1330, %v1823, %v2007
        %v2118 = vsel %vm1330, %v1825, %v2009
        %v2119 = vsel %vm1330, %v1827, %v2011
        %v2120 = vsel %vm1330, %v1829, %v2013
        %v2121 = vsel %vm1330, %v1831, %v2015
        %v2122 = vsel %vm1330, %v1833, %v2017
        %v2123 = vsel %vm419, %v2115, %v2035
        %v2124 = vsel %vm419, %v2116, %v2037
        %v2125 = vsel %vm419, %v2117, %v2039
        %v2126 = vsel %vm419, %v2118, %v2041
        %v2127 = vsel %vm419, %v2119, %v2043
        %v2128 = vsel %vm419, %v2120, %v2045
        %v2129 = vsel %vm419, %v2121, %v2047
        %v2130 = vsel %vm419, %v2122, %v2049
        %v2131 = vsel %vm2106, %v2123, %v2067
        %v2132 = vsel %vm2106, %v2124, %v2069
        %v2133 = vsel %vm2106, %v2125, %v2071
        %v2134 = vsel %vm2106, %v2126, %v2073
        %v2135 = vsel %vm2106, %v2127, %v2075
        %v2136 = vsel %vm2106, %v2128, %v2077
        %v2137 = vsel %vm2106, %v2129, %v2079
        %v2138 = vsel %vm2106, %v2130, %v2081
        %v2139 = vld [vmem:[%s2] sm:$0xff]
        %v2140 = vld [vmem:[%s2 + $0x8] sm:$0xff]
        %v2141 = vld [vmem:[%s2 + $0x10] sm:$0xff]
        %v2142 = vld [vmem:[%s2 + $0x18] sm:$0xff]
        %v2143 = vld [vmem:[%s2 + $0x20] sm:$0xff]
        %v2144 = vld [vmem:[%s2 + $0x28] sm:$0xff]
        %v2145 = vld [vmem:[%s2 + $0x30] sm:$0xff]
        %v2146 = vld [vmem:[%s2 + $0x38] sm:$0xff]
        %v2147 = vld [vmem:[%s2 + $0x40] sm:$0xff]
        %v2148 = vld [vmem:[%s2 + $0x48] sm:$0xff]
        %v2149 = vld [vmem:[%s2 + $0x50] sm:$0xff]
        %v2150 = vld [vmem:[%s2 + $0x58] sm:$0xff]
        %v2151 = vld [vmem:[%s2 + $0x60] sm:$0xff]
        %v2152 = vld [vmem:[%s2 + $0x68] sm:$0xff]
        %v2153 = vld [vmem:[%s2 + $0x70] sm:$0xff]
        %v2154 = vld [vmem:[%s2 + $0x78] sm:$0xff]
        %v2155 = vld [vmem:[%s2 + $0x80] sm:$0xff]
        %v2156 = vld [vmem:[%s2 + $0x88] sm:$0xff]
        %v2157 = vld [vmem:[%s2 + $0x90] sm:$0xff]
        %v2158 = vld [vmem:[%s2 + $0x98] sm:$0xff]
        %v2159 = vld [vmem:[%s2 + $0xa0] sm:$0xff]
        %v2160 = vld [vmem:[%s2 + $0xa8] sm:$0xff]
        %v2161 = vld [vmem:[%s2 + $0xb0] sm:$0xff]
        %v2162 = vld [vmem:[%s2 + $0xb8] sm:$0xff]
        %v2163 = vld [vmem:[%s2 + $0xc0] sm:$0xff]
        %v2164 = vld [vmem:[%s2 + $0xc8] sm:$0xff]
        %v2165 = vld [vmem:[%s2 + $0xd0] sm:$0xff]
        %v2166 = vld [vmem:[%s2 + $0xd8] sm:$0xff]
        %v2167 = vld [vmem:[%s2 + $0xe0] sm:$0xff]
        %v2168 = vld [vmem:[%s2 + $0xe8] sm:$0xff]
        %v2169 = vld [vmem:[%s2 + $0xf0] sm:$0xff]
        %v2170 = vld [vmem:[%s2 + $0xf8] sm:$0xff]
        %v2171 = vld [vmem:[%s2 + $0x100] sm:$0xff]
        %v2172 = vld [vmem:[%s2 + $0x108] sm:$0xff]
        %v2173 = vld [vmem:[%s2 + $0x110] sm:$0xff]
        %v2174 = vld [vmem:[%s2 + $0x118] sm:$0xff]
        %v2176 = vsel %vm1330, %v1883, 0
        %v2179 = vsel %vm1330, %v1885, 0
        %v2182 = vsel %vm1330, %v1887, 0
        %v2185 = vsel %vm1330, %v1889, 0
        %v2188 = vsel %vm1330, %v1891, 0
        %v2191 = vsel %vm1330, %v1893, 0
        %v2194 = vsel %vm1330, %v1895, 0
        %v2197 = vsel %vm1330, %v1897, 0
        %2199 = vmatprep.subr.mxu0 0.0
        %2200 = vmatpush1.msra.mxu0 %v2139
        %2201 = vmatprep.subr.mxu0 0.0
        %2202 = vmatpush1.msra.mxu0 %v2140
        %2203 = vmatprep.subr.mxu0 0.0
        %2204 = vmatpush1.msra.mxu0 %v2141
        %2205 = vmatprep.subr.mxu0 0.0
        %2206 = vmatpush1.msra.mxu0 %v2142
        %2207 = vmatprep.subr.mxu0 0.0
        %2208 = vmatpush1.msra.mxu0 %v2143
        %2209 = vmatprep.subr.mxu0 0.0
        %2210 = vmatpush1.msra.mxu0 %v2144
        %2211 = vmatprep.subr.mxu0 0.0
        %2212 = vmatpush1.msra.mxu0 %v2145
        %2213 = vmatprep.subr.mxu0 0.0
        %2214 = vmatpush1.msra.mxu0 %v2146
        %2215 = vmatprep.subr.mxu0 0.0
        %2216 = vmatpush1.msra.mxu0 %v2147
        %2217 = vmatprep.subr.mxu0 0.0
        %2218 = vmatpush1.msra.mxu0 %v2148
        %2219 = vmatprep.subr.mxu0 0.0
        %2220 = vmatpush1.msra.mxu0 %v2149
        %2221 = vmatprep.subr.mxu0 0.0
        %2222 = vmatpush1.msra.mxu0 %v2150
        %2223 = vmatprep.subr.mxu0 0.0
        %2224 = vmatpush1.msra.mxu0 %v2151
        %2225 = vmatprep.subr.mxu0 0.0
        %2226 = vmatpush1.msra.mxu0 %v2152
        %2227 = vmatprep.subr.mxu0 0.0
        %2228 = vmatpush1.msra.mxu0 %v2153
        %2229 = vmatprep.subr.mxu0 0.0
        %2230 = vmatpush1.msra.mxu0 %v2154
        %2231 = vmatprep.subr.mxu0 0.0
        %2232 = vmatpush1.msra.mxu0 %v2155
        %2233 = vmatprep.subr.mxu0 0.0
        %2234 = vmatpush1.msra.mxu0 %v2156
        %2235 = vmatprep.subr.mxu0 0.0
        %2236 = vmatpush1.msra.mxu0 %v2157
        %2237 = vmatprep.subr.mxu0 0.0
        %2238 = vmatpush1.msra.mxu0 %v2158
        %2239 = vmatprep.subr.mxu0 0.0
        %2240 = vmatpush1.msra.mxu0 %v2159
        %2241 = vmatprep.subr.mxu0 0.0
        %2242 = vmatpush1.msra.mxu0 %v2160
        %2243 = vmatprep.subr.mxu0 0.0
        %2244 = vmatpush1.msra.mxu0 %v2161
        %2245 = vmatprep.subr.mxu0 0.0
        %2246 = vmatpush1.msra.mxu0 %v2162
        %2247 = vmatprep.subr.mxu0 0.0
        %2248 = vmatpush1.msra.mxu0 %v2163
        %2249 = vmatprep.subr.mxu0 0.0
        %2250 = vmatpush1.msra.mxu0 %v2164
        %2251 = vmatprep.subr.mxu0 0.0
        %2252 = vmatpush1.msra.mxu0 %v2165
        %2253 = vmatprep.subr.mxu0 0.0
        %2254 = vmatpush1.msra.mxu0 %v2166
        %2255 = vmatprep.subr.mxu0 0.0
        %2256 = vmatpush1.msra.mxu0 %v2167
        %2257 = vmatprep.subr.mxu0 0.0
        %2258 = vmatpush1.msra.mxu0 %v2168
        %2259 = vmatprep.subr.mxu0 0.0
        %2260 = vmatpush1.msra.mxu0 %v2169
        %2261 = vmatprep.subr.mxu0 0.0
        %2262 = vmatpush1.msra.mxu0 %v2170
        %2263 = vmatprep.mubr.f32.mxu0 %v2131
        %2264 = vmatmul.mubr.f32.gmra.mrb[0].mxu0 %v2107
        %v2265 = vpop.f32.mrb[0].mxu0
        %v2266 = vadd.f32 0.0, %v2265
        %v2267 = vpop.f32.mrb[0].mxu0
        %2268 = vmatprep.mubr.f32.mxu0 %v2132
        %2269 = vmatmul.mubr.f32.gmra.mrb[0].mxu0 %v2108
        %v2270 = vpop.f32.mrb[0].mxu0
        %v2271 = vadd.f32 0.0, %v2270
        %v2272 = vpop.f32.mrb[0].mxu0
        %2273 = vmatprep.mubr.f32.mxu0 %v2133
        %2274 = vmatmul.mubr.f32.gmra.mrb[0].mxu0 %v2109
        %v2275 = vpop.f32.mrb[0].mxu0
        %v2276 = vadd.f32 0.0, %v2275
        %v2277 = vpop.f32.mrb[0].mxu0
        %2278 = vmatprep.mubr.f32.mxu0 %v2134
        %2279 = vmatmul.mubr.f32.gmra.mrb[0].mxu0 %v2110
        %v2280 = vpop.f32.mrb[0].mxu0
        %v2281 = vadd.f32 0.0, %v2280
        %v2282 = vpop.f32.mrb[0].mxu0
        %2283 = vmatprep.mubr.f32.mxu0 %v2135
        %2284 = vmatmul.mubr.f32.gmra.mrb[0].mxu0 %v2111
        %v2285 = vpop.f32.mrb[0].mxu0
        %v2286 = vadd.f32 0.0, %v2285
        %v2287 = vpop.f32.mrb[0].mxu0
        %2288 = vmatprep.mubr.f32.mxu0 %v2136
        %2289 = vmatmul.mubr.f32.gmra.mrb[0].mxu0 %v2112
        %v2290 = vpop.f32.mrb[0].mxu0
        %v2291 = vadd.f32 0.0, %v2290
        %v2292 = vpop.f32.mrb[0].mxu0
        %2293 = vmatprep.mubr.f32.mxu0 %v2137
        %2294 = vmatmul.mubr.f32.gmra.mrb[0].mxu0 %v2113
        %v2295 = vpop.f32.mrb[0].mxu0
        %v2296 = vadd.f32 0.0, %v2295
        %v2297 = vpop.f32.mrb[0].mxu0
        %2298 = vmatprep.mubr.f32.mxu0 %v2138
        %2299 = vmatmul.mubr.f32.gmra.mrb[0].mxu0 %v2114
        %v2300 = vpop.f32.mrb[0].mxu0
        %v2301 = vadd.f32 0.0, %v2300
        %v2302 = vpop.f32.mrb[0].mxu0
        %2303 = vdwg.mxu0
        %2304 = vmatprep.subr.mxu0 0.0
        %2305 = vmatpush1.msra.mxu0 %v2171
        %2306 = vmatprep.subr.mxu0 0.0
        %2307 = vmatpush1.msra.mxu0 %v2172
        %2308 = vmatprep.subr.mxu0 0.0
        %2309 = vmatpush1.msra.mxu0 %v2173
        %2310 = vmatprep.subr.mxu0 0.0
        %2311 = vmatpush1.msra.mxu0 %v2174
        %2312 = vmatprep.subr.mxu0 0.0
        %2313 = vmatpush1.msra.mxu0 0.0
        %2314 = vmatprep.subr.mxu0 0.0
        %2315 = vmatpush1.msra.mxu0 0.0
        %2316 = vmatprep.subr.mxu0 0.0
        %2317 = vmatpush1.msra.mxu0 0.0
        %2318 = vmatprep.subr.mxu0 0.0
        %2319 = vmatpush1.msra.mxu0 0.0
        %2320 = vmatprep.subr.mxu0 0.0
        %2321 = vmatpush1.msra.mxu0 0.0
        %2322 = vmatprep.subr.mxu0 0.0
        %2323 = vmatpush1.msra.mxu0 0.0
        %2324 = vmatprep.subr.mxu0 0.0
        %2325 = vmatpush1.msra.mxu0 0.0
        %2326 = vmatprep.subr.mxu0 0.0
        %2327 = vmatpush1.msra.mxu0 0.0
        %2328 = vmatprep.subr.mxu0 0.0
        %2329 = vmatpush1.msra.mxu0 0.0
        %2330 = vmatprep.subr.mxu0 0.0
        %2331 = vmatpush1.msra.mxu0 0.0
        %2332 = vmatprep.subr.mxu0 0.0
        %2333 = vmatpush1.msra.mxu0 0.0
        %2334 = vmatprep.subr.mxu0 0.0
        %2335 = vmatpush1.msra.mxu0 0.0
        %2336 = vmatprep.subr.mxu0 0.0
        %2337 = vmatpush1.msra.mxu0 0.0
        %2338 = vmatprep.subr.mxu0 0.0
        %2339 = vmatpush1.msra.mxu0 0.0
        %2340 = vmatprep.subr.mxu0 0.0
        %2341 = vmatpush1.msra.mxu0 0.0
        %2342 = vmatprep.subr.mxu0 0.0
        %2343 = vmatpush1.msra.mxu0 0.0
        %2344 = vmatprep.subr.mxu0 0.0
        %2345 = vmatpush1.msra.mxu0 0.0
        %2346 = vmatprep.subr.mxu0 0.0
        %2347 = vmatpush1.msra.mxu0 0.0
        %2348 = vmatprep.subr.mxu0 0.0
        %2349 = vmatpush1.msra.mxu0 0.0
        %2350 = vmatprep.subr.mxu0 0.0
        %2351 = vmatpush1.msra.mxu0 0.0
        %2352 = vmatprep.subr.mxu0 0.0
        %2353 = vmatpush1.msra.mxu0 0.0
        %2354 = vmatprep.subr.mxu0 0.0
        %2355 = vmatpush1.msra.mxu0 0.0
        %2356 = vmatprep.subr.mxu0 0.0
        %2357 = vmatpush1.msra.mxu0 0.0
        %2358 = vmatprep.subr.mxu0 0.0
        %2359 = vmatpush1.msra.mxu0 0.0
        %2360 = vmatprep.subr.mxu0 0.0
        %2361 = vmatpush1.msra.mxu0 0.0
        %2362 = vmatprep.subr.mxu0 0.0
        %2363 = vmatpush1.msra.mxu0 0.0
        %2364 = vmatprep.subr.mxu0 0.0
        %2365 = vmatpush1.msra.mxu0 0.0
        %2366 = vmatprep.subr.mxu0 0.0
        %2367 = vmatpush1.msra.mxu0 0.0
        %2368 = vmatprep.mubr.f32.mxu0 0.0
        %2369 = vmatmul.mubr.f32.gmra.mrb[0].mxu0 %v2176
        %v2370 = vpop.f32.mrb[0].mxu0
        %v2371 = vadd.f32 %v2266, %v2370
        %v2372 = vpop.f32.mrb[0].mxu0
        %2373 = vmatprep.mubr.f32.mxu0 0.0
        %2374 = vmatmul.mubr.f32.gmra.mrb[0].mxu0 %v2179
        %v2375 = vpop.f32.mrb[0].mxu0
        %v2376 = vadd.f32 %v2271, %v2375
        %v2377 = vpop.f32.mrb[0].mxu0
        %2378 = vmatprep.mubr.f32.mxu0 0.0
        %2379 = vmatmul.mubr.f32.gmra.mrb[0].mxu0 %v2182
        %v2380 = vpop.f32.mrb[0].mxu0
        %v2381 = vadd.f32 %v2276, %v2380
        %v2382 = vpop.f32.mrb[0].mxu0
        %2383 = vmatprep.mubr.f32.mxu0 0.0
        %2384 = vmatmul.mubr.f32.gmra.mrb[0].mxu0 %v2185
        %v2385 = vpop.f32.mrb[0].mxu0
        %v2386 = vadd.f32 %v2281, %v2385
        %v2387 = vpop.f32.mrb[0].mxu0
        %2388 = vmatprep.mubr.f32.mxu0 0.0
        %2389 = vmatmul.mubr.f32.gmra.mrb[0].mxu0 %v2188
        %v2390 = vpop.f32.mrb[0].mxu0
        %v2391 = vadd.f32 %v2286, %v2390
        %v2392 = vpop.f32.mrb[0].mxu0
        %2393 = vmatprep.mubr.f32.mxu0 0.0
        %2394 = vmatmul.mubr.f32.gmra.mrb[0].mxu0 %v2191
        %v2395 = vpop.f32.mrb[0].mxu0
        %v2396 = vadd.f32 %v2291, %v2395
        %v2397 = vpop.f32.mrb[0].mxu0
        %2398 = vmatprep.mubr.f32.mxu0 0.0
        %2399 = vmatmul.mubr.f32.gmra.mrb[0].mxu0 %v2194
        %v2400 = vpop.f32.mrb[0].mxu0
        %v2401 = vadd.f32 %v2296, %v2400
        %v2402 = vpop.f32.mrb[0].mxu0
        %2403 = vmatprep.mubr.f32.mxu0 0.0
        %2404 = vmatmul.mubr.f32.gmra.mrb[0].mxu0 %v2197
        %v2405 = vpop.f32.mrb[0].mxu0
        %v2406 = vadd.f32 %v2301, %v2405
        %v2407 = vpop.f32.mrb[0].mxu0
        %2408 = vdwg.mxu0
        %v2409 = vld [vmem:[%s9] sm:$0x1]
        %v2410 = vld [vmem:[%s10] sm:$0x1]
        %v2411 = vsel %vm1330, %v2371, 0.0
        %v2412 = vsel %vm1330, %v2376, 0.0
        %v2413 = vadd.f32 %v2411, %v2412
        %v2414 = vsel %vm1330, %v2381, 0.0
        %v2415 = vadd.f32 %v2413, %v2414
        %v2416 = vsel %vm1330, %v2386, 0.0
        %v2417 = vadd.f32 %v2415, %v2416
        %v2418 = vsel %vm1330, %v2391, 0.0
        %v2419 = vadd.f32 %v2417, %v2418
        %v2420 = vsel %vm1330, %v2396, 0.0
        %v2421 = vadd.f32 %v2419, %v2420
        %v2422 = vsel %vm1330, %v2401, 0.0
        %v2423 = vadd.f32 %v2421, %v2422
        %v2424 = vsel %vm1330, %v2406, 0.0
        %v2425 = vadd.f32 %v2423, %v2424
        %v2426 = vrot.slane %v2425, 4
        %v2427 = vadd.f32 %v2425, %v2426
        %v2428 = vrot.slane %v2427, 2
        %v2429 = vadd.f32 %v2427, %v2428
        %v2430 = vrot.slane %v2429, 1
        %v2431 = vadd.f32 %v2429, %v2430
        %v2432 = vrcp.pop 64.0
        %v2433 = vmul.f32 %v2431, %v2432
        %v2434 = vsub.f32 %v2371, %v2433
        %v2435 = vsub.f32 %v2376, %v2433
        %v2436 = vsub.f32 %v2381, %v2433
        %v2437 = vsub.f32 %v2386, %v2433
        %v2438 = vsub.f32 %v2391, %v2433
        %v2439 = vsub.f32 %v2396, %v2433
        %v2440 = vsub.f32 %v2401, %v2433
        %v2441 = vsub.f32 %v2406, %v2433
        %v2442 = vmul.f32 %v2434, %v2434
        %v2443 = vmul.f32 %v2435, %v2435
        %v2444 = vmul.f32 %v2436, %v2436
        %v2445 = vmul.f32 %v2437, %v2437
        %v2446 = vmul.f32 %v2438, %v2438
        %v2447 = vmul.f32 %v2439, %v2439
        %v2448 = vmul.f32 %v2440, %v2440
        %v2449 = vmul.f32 %v2441, %v2441
        %v2450 = vsel %vm1330, %v2442, 0.0
        %v2451 = vsel %vm1330, %v2443, 0.0
        %v2452 = vadd.f32 %v2450, %v2451
        %v2453 = vsel %vm1330, %v2444, 0.0
        %v2454 = vadd.f32 %v2452, %v2453
        %v2455 = vsel %vm1330, %v2445, 0.0
        %v2456 = vadd.f32 %v2454, %v2455
        %v2457 = vsel %vm1330, %v2446, 0.0
        %v2458 = vadd.f32 %v2456, %v2457
        %v2459 = vsel %vm1330, %v2447, 0.0
        %v2460 = vadd.f32 %v2458, %v2459
        %v2461 = vsel %vm1330, %v2448, 0.0
        %v2462 = vadd.f32 %v2460, %v2461
        %v2463 = vsel %vm1330, %v2449, 0.0
        %v2464 = vadd.f32 %v2462, %v2463
        %v2465 = vrot.slane %v2464, 4
        %v2466 = vadd.f32 %v2464, %v2465
        %v2467 = vrot.slane %v2466, 2
        %v2468 = vadd.f32 %v2466, %v2467
        %v2469 = vrot.slane %v2468, 1
        %v2470 = vadd.f32 %v2468, %v2469
        %v2471 = vmul.f32 %v2470, %v2432
        %v2472 = vadd.f32 %v2471, 1e-05
        %v2473 = vrsqrt.pop %v2472
        %v2474 = vmul.f32 %v2434, %v2473
        %v2475 = vmul.f32 %v2435, %v2473
        %v2476 = vmul.f32 %v2436, %v2473
        %v2477 = vmul.f32 %v2437, %v2473
        %v2478 = vmul.f32 %v2438, %v2473
        %v2479 = vmul.f32 %v2439, %v2473
        %v2480 = vmul.f32 %v2440, %v2473
        %v2481 = vmul.f32 %v2441, %v2473
        %v2483 = vlaneseq
        %v2484 = vshrl.u32 %v2483, 7
        %v2485 = vsub.s32 0, %v2484
        %v2486 = vrot.slane %v2409, %v2485
        %v2488 = vmul.f32 %v2474, %v2486
        %v2489 = vmul.f32 %v2475, %v2486
        %v2490 = vmul.f32 %v2476, %v2486
        %v2491 = vmul.f32 %v2477, %v2486
        %v2492 = vmul.f32 %v2478, %v2486
        %v2493 = vmul.f32 %v2479, %v2486
        %v2494 = vmul.f32 %v2480, %v2486
        %v2495 = vmul.f32 %v2481, %v2486
        %v2497 = vlaneseq
        %v2498 = vshrl.u32 %v2497, 7
        %v2499 = vsub.s32 0, %v2498
        %v2500 = vrot.slane %v2410, %v2499
        %v2502 = vadd.f32 %v2488, %v2500
        %v2503 = vadd.f32 %v2489, %v2500
        %v2504 = vadd.f32 %v2490, %v2500
        %v2505 = vadd.f32 %v2491, %v2500
        %v2506 = vadd.f32 %v2492, %v2500
        %v2507 = vadd.f32 %v2493, %v2500
        %v2508 = vadd.f32 %v2494, %v2500
        %v2509 = vadd.f32 %v2495, %v2500
        %v2510 = vmax.f32 %v2502, 0.0
        %v2511 = vmax.f32 %v2503, 0.0
        %v2512 = vmax.f32 %v2504, 0.0
        %v2513 = vmax.f32 %v2505, 0.0
        %v2514 = vmax.f32 %v2506, 0.0
        %v2515 = vmax.f32 %v2507, 0.0
        %v2516 = vmax.f32 %v2508, 0.0
        %v2517 = vmax.f32 %v2509, 0.0
        %v2518 = vld [vmem:[%s3] sm:$0xff]
        %v2519 = vld [vmem:[%s3 + $0x8] sm:$0xff]
        %v2520 = vld [vmem:[%s3 + $0x10] sm:$0xff]
        %v2521 = vld [vmem:[%s3 + $0x18] sm:$0xff]
        %v2523 = vsel %vm1330, %v2510, 0
        %v2526 = vsel %vm1330, %v2511, 0
        %v2529 = vsel %vm1330, %v2512, 0
        %v2532 = vsel %vm1330, %v2513, 0
        %v2535 = vsel %vm1330, %v2514, 0
        %v2538 = vsel %vm1330, %v2515, 0
        %v2541 = vsel %vm1330, %v2516, 0
        %v2544 = vsel %vm1330, %v2517, 0
        %2546 = vmatprep.subr.mxu0 0.0
        %2547 = vmatpush1.msra.mxu0 %v2518
        %2548 = vmatprep.subr.mxu0 0.0
        %2549 = vmatpush1.msra.mxu0 %v2519
        %2550 = vmatprep.subr.mxu0 0.0
        %2551 = vmatpush1.msra.mxu0 %v2520
        %2552 = vmatprep.subr.mxu0 0.0
        %2553 = vmatpush1.msra.mxu0 %v2521
        %2554 = vmatprep.subr.mxu0 0.0
        %2555 = vmatpush1.msra.mxu0 0.0
        %2556 = vmatprep.subr.mxu0 0.0
        %2557 = vmatpush1.msra.mxu0 0.0
        %2558 = vmatprep.subr.mxu0 0.0
        %2559 = vmatpush1.msra.mxu0 0.0
        %2560 = vmatprep.subr.mxu0 0.0
        %2561 = vmatpush1.msra.mxu0 0.0
        %2562 = vmatprep.subr.mxu0 0.0
        %2563 = vmatpush1.msra.mxu0 0.0
        %2564 = vmatprep.subr.mxu0 0.0
        %2565 = vmatpush1.msra.mxu0 0.0
        %2566 = vmatprep.subr.mxu0 0.0
        %2567 = vmatpush1.msra.mxu0 0.0
        %2568 = vmatprep.subr.mxu0 0.0
        %2569 = vmatpush1.msra.mxu0 0.0
        %2570 = vmatprep.subr.mxu0 0.0
        %2571 = vmatpush1.msra.mxu0 0.0
        %2572 = vmatprep.subr.mxu0 0.0
        %2573 = vmatpush1.msra.mxu0 0.0
        %2574 = vmatprep.subr.mxu0 0.0
        %2575 = vmatpush1.msra.mxu0 0.0
        %2576 = vmatprep.subr.mxu0 0.0
        %2577 = vmatpush1.msra.mxu0 0.0
        %2578 = vmatprep.subr.mxu0 0.0
        %2579 = vmatpush1.msra.mxu0 0.0
        %2580 = vmatprep.subr.mxu0 0.0
        %2581 = vmatpush1.msra.mxu0 0.0
        %2582 = vmatprep.subr.mxu0 0.0
        %2583 = vmatpush1.msra.mxu0 0.0
        %2584 = vmatprep.subr.mxu0 0.0
        %2585 = vmatpush1.msra.mxu0 0.0
        %2586 = vmatprep.subr.mxu0 0.0
        %2587 = vmatpush1.msra.mxu0 0.0
        %2588 = vmatprep.subr.mxu0 0.0
        %2589 = vmatpush1.msra.mxu0 0.0
        %2590 = vmatprep.subr.mxu0 0.0
        %2591 = vmatpush1.msra.mxu0 0.0
        %2592 = vmatprep.subr.mxu0 0.0
        %2593 = vmatpush1.msra.mxu0 0.0
        %2594 = vmatprep.subr.mxu0 0.0
        %2595 = vmatpush1.msra.mxu0 0.0
        %2596 = vmatprep.subr.mxu0 0.0
        %2597 = vmatpush1.msra.mxu0 0.0
        %2598 = vmatprep.subr.mxu0 0.0
        %2599 = vmatpush1.msra.mxu0 0.0
        %2600 = vmatprep.subr.mxu0 0.0
        %2601 = vmatpush1.msra.mxu0 0.0
        %2602 = vmatprep.subr.mxu0 0.0
        %2603 = vmatpush1.msra.mxu0 0.0
        %2604 = vmatprep.subr.mxu0 0.0
        %2605 = vmatpush1.msra.mxu0 0.0
        %2606 = vmatprep.subr.mxu0 0.0
        %2607 = vmatpush1.msra.mxu0 0.0
        %2608 = vmatprep.subr.mxu0 0.0
        %2609 = vmatpush1.msra.mxu0 0.0
        %2610 = vmatprep.mubr.f32.mxu0 0.0
        %2611 = vmatmul.mubr.f32.gmra.mrb[0].mxu0 %v2523
        %v2612 = vpop.f32.mrb[0].mxu0
        %v2613 = vadd.f32 0.0, %v2612
        %v2614 = vpop.f32.mrb[0].mxu0
        %2615 = vmatprep.mubr.f32.mxu0 0.0
        %2616 = vmatmul.mubr.f32.gmra.mrb[0].mxu0 %v2526
        %v2617 = vpop.f32.mrb[0].mxu0
        %v2618 = vadd.f32 0.0, %v2617
        %v2619 = vpop.f32.mrb[0].mxu0
        %2620 = vmatprep.mubr.f32.mxu0 0.0
        %2621 = vmatmul.mubr.f32.gmra.mrb[0].mxu0 %v2529
        %v2622 = vpop.f32.mrb[0].mxu0
        %v2623 = vadd.f32 0.0, %v2622
        %v2624 = vpop.f32.mrb[0].mxu0
        %2625 = vmatprep.mubr.f32.mxu0 0.0
        %2626 = vmatmul.mubr.f32.gmra.mrb[0].mxu0 %v2532
        %v2627 = vpop.f32.mrb[0].mxu0
        %v2628 = vadd.f32 0.0, %v2627
        %v2629 = vpop.f32.mrb[0].mxu0
        %2630 = vmatprep.mubr.f32.mxu0 0.0
        %2631 = vmatmul.mubr.f32.gmra.mrb[0].mxu0 %v2535
        %v2632 = vpop.f32.mrb[0].mxu0
        %v2633 = vadd.f32 0.0, %v2632
        %v2634 = vpop.f32.mrb[0].mxu0
        %2635 = vmatprep.mubr.f32.mxu0 0.0
        %2636 = vmatmul.mubr.f32.gmra.mrb[0].mxu0 %v2538
        %v2637 = vpop.f32.mrb[0].mxu0
        %v2638 = vadd.f32 0.0, %v2637
        %v2639 = vpop.f32.mrb[0].mxu0
        %2640 = vmatprep.mubr.f32.mxu0 0.0
        %2641 = vmatmul.mubr.f32.gmra.mrb[0].mxu0 %v2541
        %v2642 = vpop.f32.mrb[0].mxu0
        %v2643 = vadd.f32 0.0, %v2642
        %v2644 = vpop.f32.mrb[0].mxu0
        %2645 = vmatprep.mubr.f32.mxu0 0.0
        %2646 = vmatmul.mubr.f32.gmra.mrb[0].mxu0 %v2544
        %v2647 = vpop.f32.mrb[0].mxu0
        %v2648 = vadd.f32 0.0, %v2647
        %v2649 = vpop.f32.mrb[0].mxu0
        %2650 = vdwg.mxu0
        %v2651 = vadd.f32 %v2613, %v961
        %v2652 = vadd.f32 %v2618, %v966
        %v2653 = vadd.f32 %v2623, %v971
        %v2654 = vadd.f32 %v2628, %v976
        %v2655 = vadd.f32 %v2633, %v981
        %v2656 = vadd.f32 %v2638, %v986
        %v2657 = vadd.f32 %v2643, %v991
        %v2658 = vadd.f32 %v2648, %v996
        %2659 = vst [vmem:[%s379] sm:$0xff] %v2651
        %2660 = vst [vmem:[%s379 + $0x8] sm:$0xff] %v2652
        %2661 = vst [vmem:[%s379 + $0x10] sm:$0xff] %v2653
        %2662 = vst [vmem:[%s379 + $0x18] sm:$0xff] %v2654
        %2663 = vst [vmem:[%s379 + $0x20] sm:$0xff] %v2655
        %2664 = vst [vmem:[%s379 + $0x28] sm:$0xff] %v2656
        %2665 = vst [vmem:[%s379 + $0x30] sm:$0xff] %v2657
        %2666 = vst [vmem:[%s379 + $0x38] sm:$0xff] %v2658
        %s2667 = sand.u32 %s269, 1
        %s2668 = scalar_lea.sflag [#allocation5], %s2667
        %s2669 = sand.u32 %s269, 1
        %s2670 = smul.addr %s2669, 64
        %s2671 = scalar_lea.vmem [#allocation4], %s2670
        // Predicated region
        $region65: #{preact_bottleneck_forward.1} parent=63 // pred_check
          %p2672 = pneg %p279
        $region66: #{preact_bottleneck_forward.1} parent=63 // pred_check_branch
          %2674 = sbr.rel (%p2672) target = $region68
        $region67: #{preact_bottleneck_forward.1} parent=63 // pred_region
          %s2676 = ssub.s32 1024, 1024
          %2677 = vsyncadd %s2668, %s2676
          %s2678 = smul.addr %s25, 8
          %s2679 = smul.addr %s2678, 128
          %s2680 = scalar_lea.hbm %s11, %s2679
          %s2681 = sshll.u32 %s2671, 4
          %s2682 = int_to_ptr.vmem [resolvable:$true] %s2681
          %2687 = dma.vmem_to_hbm [thread:$0]  %s2682, 1024, %s2680, %s2668, 128, 128, 8
        $region68: #{preact_bottleneck_forward.1} parent=63 // pred_fallthru
          _
      $region64: #{preact_bottleneck_forward.1} parent=5 // pred_fallthru
        _
      %p2688 = scmp.le.s32.totalorder 2, %s20
      // Predicated region
      $region69: #{preact_bottleneck_forward.1} parent=5 // pred_check
        %p2689 = pneg %p2688
      $region70: #{preact_bottleneck_forward.1} parent=5 // pred_check_branch
        %2691 = sbr.rel (%p2689) target = $region72
      $region71: #{preact_bottleneck_forward.1} parent=5 // pred_region
        %s2692 = ssub.s32 %s20, 2
        // Predicated region
        $region73: #{preact_bottleneck_forward.1} parent=71 // pred_check
          %p2693 = pneg %p285
        $region74: #{preact_bottleneck_forward.1} parent=71 // pred_check_branch
          %2695 = sbr.rel (%p2693) target = $region76
        $region75: #{preact_bottleneck_forward.1} parent=71 // pred_region
          %s2696 = sand.u32 %s270, 1
          %s2697 = scalar_lea.sflag [#allocation5], %s2696
          %s2698 = sand.u32 %s270, 1
          %s2699 = smul.addr %s2698, 64
          %s2700 = scalar_lea.vmem [#allocation4], %s2699
          %2701 = dma.done %s2697, 1024
        $region76: #{preact_bottleneck_forward.1} parent=71 // pred_fallthru
          _
      $region72: #{preact_bottleneck_forward.1} parent=5 // pred_fallthru
        _
    $region6: #{preact_bottleneck_forward.1} parent=1 // loop_footer
      %s24 = sadd.s32 1, %s20
    $region7: #{preact_bottleneck_forward.1} parent=1 // loop_footer_branch
      %19 = sbr.rel target = $region3
    $region8: #{preact_bottleneck_forward.1} parent=1 // loop_exit
      _
    %2702 = vsyncpa [#allocation5], 1
    %s2703 = scalar_lea.sflag [#allocation5], 1
    %2704 = vsyncpa %s2703, 1

</llo_original>
